<compile_context>
chip_gen: v5e
topology: v5e:2x2
jax: 0.10.0
libtpu: 0.0.40
codegen_flags: <defaults>
</compile_context>

<pallas_src>
import math

import jax
import jax.numpy as jnp
from jax.experimental import pallas as pl
from jax.experimental.pallas import tpu as pltpu

BN_EPS = 1e-5
K_ALIGN = 8           # pad the small xyz/feature contraction dim to 8 (zero rows; exact)
TARGET_TILE = 1024    # upper bound on the point tile


def _round_up(x, m):
    return ((x + m - 1) // m) * m


def _pick_point_tiling(n, target=TARGET_TILE):
    """Split n points into equal 8-aligned tiles of size <= ~target (min padding)."""
    num_tiles = max(1, -(-n // target))          # cdiv
    tn = _round_up(-(-n // num_tiles), 8)
    return tn, tn * num_tiles


# ----------------------------------------------------------------------------
# Kernel A: STN3d conv stack (3->64->128->1024, bias+ReLU, no BN) fused with the
# max-pool over points.  One (1, TN, KP) point tile per grid step; the output
# block is a resident running max across the point axis.
# ----------------------------------------------------------------------------
def _stn_conv_max_kernel(x_ref, w1_ref, b1_ref, w2_ref, b2_ref, w3_ref, b3_ref,
                         o_ref):
    n = pl.program_id(1)
    x = x_ref[0]                                                        # (TN, KP) f32
    h = jnp.dot(x.astype(jnp.bfloat16), w1_ref[...],
                preferred_element_type=jnp.float32) + b1_ref[...]
    h = jnp.maximum(h, 0.0)
    h = jnp.dot(h.astype(jnp.bfloat16), w2_ref[...],
                preferred_element_type=jnp.float32) + b2_ref[...]
    h = jnp.maximum(h, 0.0)
    h = jnp.dot(h.astype(jnp.bfloat16), w3_ref[...],
                preferred_element_type=jnp.float32) + b3_ref[...]
    h = jnp.maximum(h, 0.0)                                             # (TN, 1024)
    tile_max = jnp.max(h, axis=0, keepdims=True)[None]                  # (1, 1, 1024)

    @pl.when(n == 0)
    def _():
        o_ref[...] = tile_max

    @pl.when(n > 0)
    def _():
        o_ref[...] = jnp.maximum(o_ref[...], tile_max)


# ----------------------------------------------------------------------------
# Kernel B: PointNetfeat conv1..conv5 (+ eval-BN folded into weights/bias, ReLU
# on conv1..4, no ReLU after bn5) fused with the max-pool over points.  The
# per-batch conv1 weight already has the 3x3 input transform folded in, so this
# kernel consumes the raw (padded) point cloud directly.
# ----------------------------------------------------------------------------
def _feat_conv_max_kernel(x_ref, w1_ref, b1_ref, w2_ref, b2_ref, w3_ref, b3_ref,
                          w4_ref, b4_ref, w5_ref, b5_ref, o_ref):
    n = pl.program_id(1)
    x = x_ref[0]                                                        # (TN, KP) f32
    w1 = w1_ref[0]                                                      # (KP, 64) bf16
    h = jnp.maximum(jnp.dot(x.astype(jnp.bfloat16), w1,
                            preferred_element_type=jnp.float32) + b1_ref[...], 0.0)
    h = jnp.maximum(jnp.dot(h.astype(jnp.bfloat16), w2_ref[...],
                            preferred_element_type=jnp.float32) + b2_ref[...], 0.0)
    h = jnp.maximum(jnp.dot(h.astype(jnp.bfloat16), w3_ref[...],
                            preferred_element_type=jnp.float32) + b3_ref[...], 0.0)
    h = jnp.maximum(jnp.dot(h.astype(jnp.bfloat16), w4_ref[...],
                            preferred_element_type=jnp.float32) + b4_ref[...], 0.0)
    h = jnp.dot(h.astype(jnp.bfloat16), w5_ref[...],
                preferred_element_type=jnp.float32) + b5_ref[...]       # bn5, no ReLU
    tile_max = jnp.max(h, axis=0, keepdims=True)[None]                  # (1, 1, 1024)

    @pl.when(n == 0)
    def _():
        o_ref[...] = tile_max

    @pl.when(n > 0)
    def _():
        o_ref[...] = jnp.maximum(o_ref[...], tile_max)


_COMPILER_PARAMS = pltpu.CompilerParams(
    dimension_semantics=("parallel", "arbitrary"),
    vmem_limit_bytes=32 * 1024 * 1024)


def _run_stn_stack(pts, layers, tn):
    """pts: (B, n_pad, KP) f32; layers: [w1,b1,w2,b2,w3,b3] grid-invariant."""
    B, n_pad, KP = pts.shape
    in_specs = [pl.BlockSpec((1, tn, KP), lambda b, n: (b, n, 0))]
    in_specs += [pl.BlockSpec(a.shape, lambda b, n: (0, 0)) for a in layers]
    out = pl.pallas_call(
        _stn_conv_max_kernel,
        out_shape=jax.ShapeDtypeStruct((B, 1, 1024), jnp.float32),
        grid=(B, n_pad // tn),
        in_specs=in_specs,
        out_specs=pl.BlockSpec((1, 1, 1024), lambda b, n: (b, 0, 0)),
        compiler_params=_COMPILER_PARAMS,
    )(pts, *layers)
    return out[:, 0, :]


def _run_feat_stack(pts, w1_eff, rest_layers, tn):
    """pts: (B, n_pad, KP) f32; w1_eff: (B, KP, 64) bf16 per-batch (trans folded);
    rest_layers: [b1, w2, b2, w3, b3, w4, b4, w5, b5] grid-invariant."""
    B, n_pad, KP = pts.shape
    in_specs = [pl.BlockSpec((1, tn, KP), lambda b, n: (b, n, 0)),
                pl.BlockSpec((1, KP, 64), lambda b, n: (b, 0, 0))]
    in_specs += [pl.BlockSpec(a.shape, lambda b, n: (0, 0)) for a in rest_layers]
    out = pl.pallas_call(
        _feat_conv_max_kernel,
        out_shape=jax.ShapeDtypeStruct((B, 1, 1024), jnp.float32),
        grid=(B, n_pad // tn),
        in_specs=in_specs,
        out_specs=pl.BlockSpec((1, 1, 1024), lambda b, n: (b, 0, 0)),
        compiler_params=_COMPILER_PARAMS,
    )(pts, w1_eff, *rest_layers)
    return out[:, 0, :]


# ----------------------------------------------------------------------------
# STN fully-connected head (1024->512->256->9, fc3 zero-initialized): tiny
# B-sized GEMMs, kept as plain JAX glue.
# ----------------------------------------------------------------------------
def _stn_head(g, p):
    g = jax.nn.relu(g @ p['fc1w'] + p['fc1b'])
    g = jax.nn.relu(g @ p['fc2w'] + p['fc2b'])
    g = g @ p['fc3w'] + p['fc3b']                     # zero-initialized -> zeros
    return g.reshape(-1, 3, 3) + jnp.eye(3, dtype=g.dtype)


# ----------------------------------------------------------------------------
# Parameter construction (deterministic, synthetic).  `raw` keeps the literal
# PyTorch-layout f32 parameters for the pure-JAX reference check.
# ----------------------------------------------------------------------------
def _normal(key, shape, scale):
    return jax.random.normal(key, shape, dtype=jnp.float32) * scale


def _bn_eval_affine(c):
    # PyTorch BatchNorm defaults: gamma=1, beta=0, running mean 0, running var 1.
    gamma = jnp.ones((c,), jnp.float32)
    beta = jnp.zeros((c,), jnp.float32)
    mean = jnp.zeros((c,), jnp.float32)
    var = jnp.ones((c,), jnp.float32)
    s = gamma / jnp.sqrt(var + BN_EPS)
    t = beta - mean * s
    return s, t


def init_params(key, inputdim=3):
    keys = jax.random.split(key, 32)
    it = iter(keys)
    nk = lambda: next(it)
    kp = _round_up(max(inputdim, 3), K_ALIGN)

    # ---- STN3d(k=3, use_bn=False): conv weights, biases, FC head ----
    stn_raw = []
    for cin, cout in [(3, 64), (64, 128), (128, 1024)]:
        w = _normal(nk(), (cin, cout), 1.0 / math.sqrt(cin))
        b = _normal(nk(), (cout,), 0.02)
        stn_raw.append((w, b))
    head = dict(
        fc1w=_normal(nk(), (1024, 512), 1.0 / math.sqrt(1024)),
        fc1b=_normal(nk(), (512,), 0.02),
        fc2w=_normal(nk(), (512, 256), 1.0 / math.sqrt(512)),
        fc2b=_normal(nk(), (256,), 0.02),
        fc3w=jnp.zeros((256, 9), jnp.float32),        # fc3.weight.data.zero_()
        fc3b=jnp.zeros((9,), jnp.float32),            # fc3.bias.data.zero_()
    )

    # ---- PointNetfeat conv1..conv5 + eval-mode BN ----
    feat_raw = []
    for cin, cout in [(inputdim, 64), (64, 64), (64, 64), (64, 128), (128, 1024)]:
        w = _normal(nk(), (cin, cout), 1.0 / math.sqrt(cin))
        b = _normal(nk(), (cout,), 0.02)
        s, t = _bn_eval_affine(cout)
        feat_raw.append((w, b, s, t))

    # ---- derived Pallas-kernel parameters ----
    # STN convs: bf16 weights, f32 (1,C) biases; conv1 zero-padded to kp rows so
    # the kernel can consume the shared padded points array (extra cols * 0 = 0).
    stn_conv = []
    for li, (w, b) in enumerate(stn_raw):
        wk = jnp.pad(w, ((0, kp - w.shape[0]), (0, 0))) if li == 0 else w
        stn_conv += [wk.astype(jnp.bfloat16), b[None, :]]

    # Feat convs: fold eval-BN into weight/bias.  conv1 is kept in f32 so the
    # per-batch 3x3 input transform can be folded into it at forward time.
    feat_w1 = None
    feat_b1 = None
    feat_rest = []
    for li, (w, b, s, t) in enumerate(feat_raw):
        wf = w * s[None, :]                           # fold BN scale into the weight
        bf = (b * s + t)[None, :]                     # bn(conv(x)) bias term
        if li == 0:
            feat_w1 = jnp.pad(wf, ((0, kp - wf.shape[0]), (0, 0)))   # (kp, 64) f32
            feat_b1 = bf
        else:
            feat_rest += [wf.astype(jnp.bfloat16), bf]

    params = dict(stn_conv=stn_conv, stn_head=head,
                  feat_w1=feat_w1, feat_b1=feat_b1, feat_rest=feat_rest,
                  inputdim=inputdim, kp=kp)
    raw = dict(stn=stn_raw, head=head, feat=feat_raw)
    return params, raw


# ----------------------------------------------------------------------------
# PointNetfeat forward (global_feat=True, feature_transform=False, max_pool=True):
# returns (global feature (B, 1024), trans (B, 3, 3)).
# ----------------------------------------------------------------------------
def pointnetfeat_forward(x, params):
    """x: (B, 1, N, D) in the PyTorch NCHW convention (C=1, H=num_points, W=D)."""
    B, _, N, D = x.shape
    kp = params['kp']
    tn, n_pad = _pick_point_tiling(N)

    # One padded points array shared by both kernels:
    #   points padded by repeating point 0 (exact under max), channels zero-padded.
    pts = x[:, 0, :, :]                                               # (B, N, D)
    if n_pad != N:
        pad = jnp.broadcast_to(pts[:, :1, :], (B, n_pad - N, D))
        pts = jnp.concatenate([pts, pad], axis=1)
    if kp != D:
        pts = jnp.pad(pts, ((0, 0), (0, 0), (0, kp - D)))             # (B, n_pad, kp)

    # STN3d on raw xyz (columns >= 3 are killed by zero rows in its conv1 weight).
    g = _run_stn_stack(pts, params['stn_conv'], tn)
    trans = _stn_head(g, params['stn_head'])                          # (B, 3, 3)

    # Fold the learned input transform into the first feat conv weight per batch:
    #   feats = [xyz @ trans, extra]  =>  feats @ w1 = pts @ w1_eff[b]
    #   with w1_eff[b] = [trans[b] @ w1[:3]; w1[3:]].
    w1 = params['feat_w1']                                            # (kp, 64) f32
    top = jnp.einsum('bij,jc->bic', trans, w1[:3])                    # (B, 3, 64)
    rest = jnp.broadcast_to(w1[3:][None], (B, kp - 3, 64))
    w1_eff = jnp.concatenate([top, rest], axis=1).astype(jnp.bfloat16)

    gfeat = _run_feat_stack(pts, w1_eff, [params['feat_b1']] + params['feat_rest'], tn)
    return gfeat, trans                                               # (B,1024),(B,3,3)


# ----------------------------------------------------------------------------
# Pure-JAX f32 reference (literal PyTorch math, unfolded BN) for validation.
# ----------------------------------------------------------------------------
def _reference_forward(x, raw):
    B, _, N, D = x.shape
    xyz = x[:, 0, :, :3]
    h = xyz
    for (w, b) in raw['stn']:
        h = jax.nn.relu(jnp.einsum('bnc,cd->bnd', h, w) + b)
    g = jnp.max(h, axis=1)
    trans = _stn_head(g, raw['head'])
    xyz_t = jnp.matmul(xyz, trans)
    h = xyz_t if D == 3 else jnp.concatenate([xyz_t, x[:, 0, :, 3:]], axis=-1)
    for li, (w, b, s, t) in enumerate(raw['feat']):
        h = (jnp.einsum('bnc,cd->bnd', h, w) + b) * s + t
        if li < 4:
            h = jax.nn.relu(h)
    return jnp.max(h, axis=1), trans


if __name__ == "__main__":
    B, N, D = 2, 128, 3                  # small test shapes (real model: N=2500/4096)
    key = jax.random.PRNGKey(0)
    kx, kparam = jax.random.split(key)
    params, raw = init_params(kparam, inputdim=D)
    x = jax.random.normal(kx, (B, 1, N, D), dtype=jnp.float32)

    fwd = jax.jit(lambda inp: pointnetfeat_forward(inp, params))
    gfeat, trans = fwd(x)
    gfeat = jax.block_until_ready(gfeat)
    trans = jax.block_until_ready(trans)

    assert gfeat.shape == (B, 1024)
    assert trans.shape == (B, 3, 3)
    assert bool(jnp.all(jnp.isfinite(gfeat)))
    assert bool(jnp.all(jnp.isfinite(trans)))

    # validate against the f32 reference (bf16 matmul inputs -> loose tolerance)
    ref_feat, ref_trans = _reference_forward(x, raw)
    assert bool(jnp.allclose(trans, ref_trans, rtol=1e-4, atol=1e-4))
    assert bool(jnp.allclose(gfeat, ref_feat, rtol=0.1, atol=0.1))

    print("KERNEL_OK")
</pallas_src>

<mosaic_0001>
module attributes {stable_mosaic.version = 11 : i64} {
  func.func @_stn_conv_max_kernel(%arg0: i32, %arg1: i32, %arg2: memref<1x128x8xf32, #tpu.memory_space<vmem>>, %arg3: memref<8x64xbf16, #tpu.memory_space<vmem>>, %arg4: memref<1x64xf32, #tpu.memory_space<vmem>>, %arg5: memref<64x128xbf16, #tpu.memory_space<vmem>>, %arg6: memref<1x128xf32, #tpu.memory_space<vmem>>, %arg7: memref<128x1024xbf16, #tpu.memory_space<vmem>>, %arg8: memref<1x1024xf32, #tpu.memory_space<vmem>>, %arg9: memref<1x1x1024xf32, #tpu.memory_space<vmem>>) attributes {dimension_semantics = [#tpu.dimension_semantics<parallel>, #tpu.dimension_semantics<arbitrary>], iteration_bounds = array<i64: 2, 1>, scalar_prefetch = 0 : i64, scratch_operands = 0 : i64, tpu.core_type = #tpu.core_type<tc>, window_params = [{transform_indices = @transform_0, window_bounds = array<i64: 1, 128, 8>}, {pipeline_mode = #tpu.pipeline_mode<synchronous>, transform_indices = @transform_1, window_bounds = array<i64: 8, 64>}, {pipeline_mode = #tpu.pipeline_mode<synchronous>, transform_indices = @transform_2, window_bounds = array<i64: 1, 64>}, {pipeline_mode = #tpu.pipeline_mode<synchronous>, transform_indices = @transform_3, window_bounds = array<i64: 64, 128>}, {pipeline_mode = #tpu.pipeline_mode<synchronous>, transform_indices = @transform_4, window_bounds = array<i64: 1, 128>}, {pipeline_mode = #tpu.pipeline_mode<synchronous>, transform_indices = @transform_5, window_bounds = array<i64: 128, 1024>}, {pipeline_mode = #tpu.pipeline_mode<synchronous>, transform_indices = @transform_6, window_bounds = array<i64: 1, 1024>}, {transform_indices = @transform_7, window_bounds = array<i64: 1, 1, 1024>}]} {
    %c0 = arith.constant 0 : index
    %c0_0 = arith.constant 0 : index
    %c0_1 = arith.constant 0 : index
    %0 = vector.load %arg2[%c0, %c0_0, %c0_1] : memref<1x128x8xf32, #tpu.memory_space<vmem>>, vector<1x128x8xf32>
    %1 = vector.shape_cast %0 : vector<1x128x8xf32> to vector<128x8xf32>
    %2 = arith.truncf %1 : vector<128x8xf32> to vector<128x8xbf16>
    %c0_2 = arith.constant 0 : index
    %c0_3 = arith.constant 0 : index
    %3 = vector.load %arg3[%c0_2, %c0_3] : memref<8x64xbf16, #tpu.memory_space<vmem>>, vector<8x64xbf16>
    %cst = arith.constant dense<0.000000e+00> : vector<128x64xf32>
    %4 = tpu.matmul %2, %3, %cst {dimension_numbers = #tpu.dot_dimension_numbers<[1], [0], [0], [1], [0, 0, 1, 1], [], []>} : vector<128x8xbf16>, vector<8x64xbf16>, vector<128x64xf32> -> vector<128x64xf32>
    %c0_4 = arith.constant 0 : index
    %c0_5 = arith.constant 0 : index
    %5 = vector.load %arg4[%c0_4, %c0_5] : memref<1x64xf32, #tpu.memory_space<vmem>>, vector<1x64xf32>
    %6 = vector.broadcast %5 : vector<1x64xf32> to vector<128x64xf32>
    %7 = arith.addf %4, %6 : vector<128x64xf32>
    %cst_6 = arith.constant 0.000000e+00 : f32
    %8 = vector.broadcast %cst_6 : f32 to vector<128x64xf32>
    %9 = arith.maximumf %7, %8 : vector<128x64xf32>
    %10 = arith.truncf %9 : vector<128x64xf32> to vector<128x64xbf16>
    %c0_7 = arith.constant 0 : index
    %c0_8 = arith.constant 0 : index
    %11 = vector.load %arg5[%c0_7, %c0_8] : memref<64x128xbf16, #tpu.memory_space<vmem>>, vector<64x128xbf16>
    %cst_9 = arith.constant dense<0.000000e+00> : vector<128x128xf32>
    %12 = tpu.matmul %10, %11, %cst_9 {dimension_numbers = #tpu.dot_dimension_numbers<[1], [0], [0], [1], [0, 0, 1, 1], [], []>} : vector<128x64xbf16>, vector<64x128xbf16>, vector<128x128xf32> -> vector<128x128xf32>
    %c0_10 = arith.constant 0 : index
    %c0_11 = arith.constant 0 : index
    %13 = vector.load %arg6[%c0_10, %c0_11] : memref<1x128xf32, #tpu.memory_space<vmem>>, vector<1x128xf32>
    %14 = vector.broadcast %13 : vector<1x128xf32> to vector<128x128xf32>
    %15 = arith.addf %12, %14 : vector<128x128xf32>
    %cst_12 = arith.constant 0.000000e+00 : f32
    %16 = vector.broadcast %cst_12 : f32 to vector<128x128xf32>
    %17 = arith.maximumf %15, %16 : vector<128x128xf32>
    %18 = arith.truncf %17 : vector<128x128xf32> to vector<128x128xbf16>
    %c0_13 = arith.constant 0 : index
    %c0_14 = arith.constant 0 : index
    %19 = vector.load %arg7[%c0_13, %c0_14] : memref<128x1024xbf16, #tpu.memory_space<vmem>>, vector<128x1024xbf16>
    %cst_15 = arith.constant dense<0.000000e+00> : vector<128x1024xf32>
    %20 = tpu.matmul %18, %19, %cst_15 {dimension_numbers = #tpu.dot_dimension_numbers<[1], [0], [0], [1], [0, 0, 1, 1], [], []>} : vector<128x128xbf16>, vector<128x1024xbf16>, vector<128x1024xf32> -> vector<128x1024xf32>
    %c0_16 = arith.constant 0 : index
    %c0_17 = arith.constant 0 : index
    %21 = vector.load %arg8[%c0_16, %c0_17] : memref<1x1024xf32, #tpu.memory_space<vmem>>, vector<1x1024xf32>
    %22 = vector.broadcast %21 : vector<1x1024xf32> to vector<128x1024xf32>
    %23 = arith.addf %20, %22 : vector<128x1024xf32>
    %cst_18 = arith.constant 0.000000e+00 : f32
    %24 = vector.broadcast %cst_18 : f32 to vector<128x1024xf32>
    %25 = arith.maximumf %23, %24 : vector<128x1024xf32>
    %cst_19 = arith.constant dense<0xFF800000> : vector<1024xf32>
    %26 = vector.multi_reduction <maximumf>, %25, %cst_19 [0] : vector<128x1024xf32> to vector<1024xf32>
    %27 = vector.shape_cast %26 : vector<1024xf32> to vector<1x1024xf32>
    %28 = vector.shape_cast %27 : vector<1x1024xf32> to vector<1x1x1024xf32>
    %c0_i32 = arith.constant 0 : i32
    %29 = arith.cmpi eq, %arg1, %c0_i32 : i32
    %30 = arith.extui %29 : i1 to i32
    %c0_i32_20 = arith.constant 0 : i32
    %31 = arith.cmpi ne, %30, %c0_i32_20 : i32
    scf.if %31 {
      %c0_23 = arith.constant 0 : index
      %c0_24 = arith.constant 0 : index
      %c0_25 = arith.constant 0 : index
      %35 = vector.load %arg9[%c0_23, %c0_24, %c0_25] : memref<1x1x1024xf32, #tpu.memory_space<vmem>>, vector<1x1x1024xf32>
      tpu.vector_store %arg9[%c0_23, %c0_24, %c0_25], %28 {strides = array<i32>} : memref<1x1x1024xf32, #tpu.memory_space<vmem>>, vector<1x1x1024xf32>,
    } else {
    }
    %c0_i32_21 = arith.constant 0 : i32
    %32 = arith.cmpi sgt, %arg1, %c0_i32_21 : i32
    %33 = arith.extui %32 : i1 to i32
    %c0_i32_22 = arith.constant 0 : i32
    %34 = arith.cmpi ne, %33, %c0_i32_22 : i32
    scf.if %34 {
      %c0_23 = arith.constant 0 : index
      %c0_24 = arith.constant 0 : index
      %c0_25 = arith.constant 0 : index
      %35 = vector.load %arg9[%c0_23, %c0_24, %c0_25] : memref<1x1x1024xf32, #tpu.memory_space<vmem>>, vector<1x1x1024xf32>
      %36 = arith.maximumf %35, %28 : vector<1x1x1024xf32>
      %c0_26 = arith.constant 0 : index
      %c0_27 = arith.constant 0 : index
      %c0_28 = arith.constant 0 : index
      %37 = vector.load %arg9[%c0_26, %c0_27, %c0_28] : memref<1x1x1024xf32, #tpu.memory_space<vmem>>, vector<1x1x1024xf32>
      tpu.vector_store %arg9[%c0_26, %c0_27, %c0_28], %36 {strides = array<i32>} : memref<1x1x1024xf32, #tpu.memory_space<vmem>>, vector<1x1x1024xf32>,
    } else {
    }
    return
  }
  func.func @transform_0(%arg0: i32, %arg1: i32) -> (i32, i32, i32) {
    %c0_i32 = arith.constant 0 : i32
    %c0_i32_0 = arith.constant 0 : i32
    return %arg0, %arg1, %c0_i32 : i32, i32, i32
  }
  func.func @transform_1(%arg0: i32, %arg1: i32) -> (i32, i32) {
    %c0_i32 = arith.constant 0 : i32
    %c0_i32_0 = arith.constant 0 : i32
    %c0_i32_1 = arith.constant 0 : i32
    return %c0_i32, %c0_i32_0 : i32, i32
  }
  func.func @transform_2(%arg0: i32, %arg1: i32) -> (i32, i32) {
    %c0_i32 = arith.constant 0 : i32
    %c0_i32_0 = arith.constant 0 : i32
    %c0_i32_1 = arith.constant 0 : i32
    return %c0_i32, %c0_i32_0 : i32, i32
  }
  func.func @transform_3(%arg0: i32, %arg1: i32) -> (i32, i32) {
    %c0_i32 = arith.constant 0 : i32
    %c0_i32_0 = arith.constant 0 : i32
    %c0_i32_1 = arith.constant 0 : i32
    return %c0_i32, %c0_i32_0 : i32, i32
  }
  func.func @transform_4(%arg0: i32, %arg1: i32) -> (i32, i32) {
    %c0_i32 = arith.constant 0 : i32
    %c0_i32_0 = arith.constant 0 : i32
    %c0_i32_1 = arith.constant 0 : i32
    return %c0_i32, %c0_i32_0 : i32, i32
  }
  func.func @transform_5(%arg0: i32, %arg1: i32) -> (i32, i32) {
    %c0_i32 = arith.constant 0 : i32
    %c0_i32_0 = arith.constant 0 : i32
    %c0_i32_1 = arith.constant 0 : i32
    return %c0_i32, %c0_i32_0 : i32, i32
  }
  func.func @transform_6(%arg0: i32, %arg1: i32) -> (i32, i32) {
    %c0_i32 = arith.constant 0 : i32
    %c0_i32_0 = arith.constant 0 : i32
    %c0_i32_1 = arith.constant 0 : i32
    return %c0_i32, %c0_i32_0 : i32, i32
  }
  func.func @transform_7(%arg0: i32, %arg1: i32) -> (i32, i32, i32) {
    %c0_i32 = arith.constant 0 : i32
    %c0_i32_0 = arith.constant 0 : i32
    %c0_i32_1 = arith.constant 0 : i32
    return %arg0, %c0_i32, %c0_i32_0 : i32, i32, i32
  }
}

module attributes {stable_mosaic.version = 11 : i64} {
  func.func @_feat_conv_max_kernel(%arg0: i32, %arg1: i32, %arg2: memref<1x128x8xf32, #tpu.memory_space<vmem>>, %arg3: memref<1x8x64xbf16, #tpu.memory_space<vmem>>, %arg4: memref<1x64xf32, #tpu.memory_space<vmem>>, %arg5: memref<64x64xbf16, #tpu.memory_space<vmem>>, %arg6: memref<1x64xf32, #tpu.memory_space<vmem>>, %arg7: memref<64x64xbf16, #tpu.memory_space<vmem>>, %arg8: memref<1x64xf32, #tpu.memory_space<vmem>>, %arg9: memref<64x128xbf16, #tpu.memory_space<vmem>>, %arg10: memref<1x128xf32, #tpu.memory_space<vmem>>, %arg11: memref<128x1024xbf16, #tpu.memory_space<vmem>>, %arg12: memref<1x1024xf32, #tpu.memory_space<vmem>>, %arg13: memref<1x1x1024xf32, #tpu.memory_space<vmem>>) attributes {dimension_semantics = [#tpu.dimension_semantics<parallel>, #tpu.dimension_semantics<arbitrary>], iteration_bounds = array<i64: 2, 1>, scalar_prefetch = 0 : i64, scratch_operands = 0 : i64, tpu.core_type = #tpu.core_type<tc>, window_params = [{transform_indices = @transform_0, window_bounds = array<i64: 1, 128, 8>}, {transform_indices = @transform_1, window_bounds = array<i64: 1, 8, 64>}, {pipeline_mode = #tpu.pipeline_mode<synchronous>, transform_indices = @transform_2, window_bounds = array<i64: 1, 64>}, {pipeline_mode = #tpu.pipeline_mode<synchronous>, transform_indices = @transform_3, window_bounds = array<i64: 64, 64>}, {pipeline_mode = #tpu.pipeline_mode<synchronous>, transform_indices = @transform_4, window_bounds = array<i64: 1, 64>}, {pipeline_mode = #tpu.pipeline_mode<synchronous>, transform_indices = @transform_5, window_bounds = array<i64: 64, 64>}, {pipeline_mode = #tpu.pipeline_mode<synchronous>, transform_indices = @transform_6, window_bounds = array<i64: 1, 64>}, {pipeline_mode = #tpu.pipeline_mode<synchronous>, transform_indices = @transform_7, window_bounds = array<i64: 64, 128>}, {pipeline_mode = #tpu.pipeline_mode<synchronous>, transform_indices = @transform_8, window_bounds = array<i64: 1, 128>}, {pipeline_mode = #tpu.pipeline_mode<synchronous>, transform_indices = @transform_9, window_bounds = array<i64: 128, 1024>}, {pipeline_mode = #tpu.pipeline_mode<synchronous>, transform_indices = @transform_10, window_bounds = array<i64: 1, 1024>}, {transform_indices = @transform_11, window_bounds = array<i64: 1, 1, 1024>}]} {
    %c0 = arith.constant 0 : index
    %c0_0 = arith.constant 0 : index
    %c0_1 = arith.constant 0 : index
    %0 = vector.load %arg2[%c0, %c0_0, %c0_1] : memref<1x128x8xf32, #tpu.memory_space<vmem>>, vector<1x128x8xf32>
    %1 = vector.shape_cast %0 : vector<1x128x8xf32> to vector<128x8xf32>
    %c0_2 = arith.constant 0 : index
    %c0_3 = arith.constant 0 : index
    %c0_4 = arith.constant 0 : index
    %2 = vector.load %arg3[%c0_2, %c0_3, %c0_4] : memref<1x8x64xbf16, #tpu.memory_space<vmem>>, vector<1x8x64xbf16>
    %3 = vector.shape_cast %2 : vector<1x8x64xbf16> to vector<8x64xbf16>
    %4 = arith.truncf %1 : vector<128x8xf32> to vector<128x8xbf16>
    %cst = arith.constant dense<0.000000e+00> : vector<128x64xf32>
    %5 = tpu.matmul %4, %3, %cst {dimension_numbers = #tpu.dot_dimension_numbers<[1], [0], [0], [1], [0, 0, 1, 1], [], []>} : vector<128x8xbf16>, vector<8x64xbf16>, vector<128x64xf32> -> vector<128x64xf32>
    %c0_5 = arith.constant 0 : index
    %c0_6 = arith.constant 0 : index
    %6 = vector.load %arg4[%c0_5, %c0_6] : memref<1x64xf32, #tpu.memory_space<vmem>>, vector<1x64xf32>
    %7 = vector.broadcast %6 : vector<1x64xf32> to vector<128x64xf32>
    %8 = arith.addf %5, %7 : vector<128x64xf32>
    %cst_7 = arith.constant 0.000000e+00 : f32
    %9 = vector.broadcast %cst_7 : f32 to vector<128x64xf32>
    %10 = arith.maximumf %8, %9 : vector<128x64xf32>
    %11 = arith.truncf %10 : vector<128x64xf32> to vector<128x64xbf16>
    %c0_8 = arith.constant 0 : index
    %c0_9 = arith.constant 0 : index
    %12 = vector.load %arg5[%c0_8, %c0_9] : memref<64x64xbf16, #tpu.memory_space<vmem>>, vector<64x64xbf16>
    %cst_10 = arith.constant dense<0.000000e+00> : vector<128x64xf32>
    %13 = tpu.matmul %11, %12, %cst_10 {dimension_numbers = #tpu.dot_dimension_numbers<[1], [0], [0], [1], [0, 0, 1, 1], [], []>} : vector<128x64xbf16>, vector<64x64xbf16>, vector<128x64xf32> -> vector<128x64xf32>
    %c0_11 = arith.constant 0 : index
    %c0_12 = arith.constant 0 : index
    %14 = vector.load %arg6[%c0_11, %c0_12] : memref<1x64xf32, #tpu.memory_space<vmem>>, vector<1x64xf32>
    %15 = vector.broadcast %14 : vector<1x64xf32> to vector<128x64xf32>
    %16 = arith.addf %13, %15 : vector<128x64xf32>
    %cst_13 = arith.constant 0.000000e+00 : f32
    %17 = vector.broadcast %cst_13 : f32 to vector<128x64xf32>
    %18 = arith.maximumf %16, %17 : vector<128x64xf32>
    %19 = arith.truncf %18 : vector<128x64xf32> to vector<128x64xbf16>
    %c0_14 = arith.constant 0 : index
    %c0_15 = arith.constant 0 : index
    %20 = vector.load %arg7[%c0_14, %c0_15] : memref<64x64xbf16, #tpu.memory_space<vmem>>, vector<64x64xbf16>
    %cst_16 = arith.constant dense<0.000000e+00> : vector<128x64xf32>
    %21 = tpu.matmul %19, %20, %cst_16 {dimension_numbers = #tpu.dot_dimension_numbers<[1], [0], [0], [1], [0, 0, 1, 1], [], []>} : vector<128x64xbf16>, vector<64x64xbf16>, vector<128x64xf32> -> vector<128x64xf32>
    %c0_17 = arith.constant 0 : index
    %c0_18 = arith.constant 0 : index
    %22 = vector.load %arg8[%c0_17, %c0_18] : memref<1x64xf32, #tpu.memory_space<vmem>>, vector<1x64xf32>
    %23 = vector.broadcast %22 : vector<1x64xf32> to vector<128x64xf32>
    %24 = arith.addf %21, %23 : vector<128x64xf32>
    %cst_19 = arith.constant 0.000000e+00 : f32
    %25 = vector.broadcast %cst_19 : f32 to vector<128x64xf32>
    %26 = arith.maximumf %24, %25 : vector<128x64xf32>
    %27 = arith.truncf %26 : vector<128x64xf32> to vector<128x64xbf16>
    %c0_20 = arith.constant 0 : index
    %c0_21 = arith.constant 0 : index
    %28 = vector.load %arg9[%c0_20, %c0_21] : memref<64x128xbf16, #tpu.memory_space<vmem>>, vector<64x128xbf16>
    %cst_22 = arith.constant dense<0.000000e+00> : vector<128x128xf32>
    %29 = tpu.matmul %27, %28, %cst_22 {dimension_numbers = #tpu.dot_dimension_numbers<[1], [0], [0], [1], [0, 0, 1, 1], [], []>} : vector<128x64xbf16>, vector<64x128xbf16>, vector<128x128xf32> -> vector<128x128xf32>
    %c0_23 = arith.constant 0 : index
    %c0_24 = arith.constant 0 : index
    %30 = vector.load %arg10[%c0_23, %c0_24] : memref<1x128xf32, #tpu.memory_space<vmem>>, vector<1x128xf32>
    %31 = vector.broadcast %30 : vector<1x128xf32> to vector<128x128xf32>
    %32 = arith.addf %29, %31 : vector<128x128xf32>
    %cst_25 = arith.constant 0.000000e+00 : f32
    %33 = vector.broadcast %cst_25 : f32 to vector<128x128xf32>
    %34 = arith.maximumf %32, %33 : vector<128x128xf32>
    %35 = arith.truncf %34 : vector<128x128xf32> to vector<128x128xbf16>
    %c0_26 = arith.constant 0 : index
    %c0_27 = arith.constant 0 : index
    %36 = vector.load %arg11[%c0_26, %c0_27] : memref<128x1024xbf16, #tpu.memory_space<vmem>>, vector<128x1024xbf16>
    %cst_28 = arith.constant dense<0.000000e+00> : vector<128x1024xf32>
    %37 = tpu.matmul %35, %36, %cst_28 {dimension_numbers = #tpu.dot_dimension_numbers<[1], [0], [0], [1], [0, 0, 1, 1], [], []>} : vector<128x128xbf16>, vector<128x1024xbf16>, vector<128x1024xf32> -> vector<128x1024xf32>
    %c0_29 = arith.constant 0 : index
    %c0_30 = arith.constant 0 : index
    %38 = vector.load %arg12[%c0_29, %c0_30] : memref<1x1024xf32, #tpu.memory_space<vmem>>, vector<1x1024xf32>
    %39 = vector.broadcast %38 : vector<1x1024xf32> to vector<128x1024xf32>
    %40 = arith.addf %37, %39 : vector<128x1024xf32>
    %cst_31 = arith.constant dense<0xFF800000> : vector<1024xf32>
    %41 = vector.multi_reduction <maximumf>, %40, %cst_31 [0] : vector<128x1024xf32> to vector<1024xf32>
    %42 = vector.shape_cast %41 : vector<1024xf32> to vector<1x1024xf32>
    %43 = vector.shape_cast %42 : vector<1x1024xf32> to vector<1x1x1024xf32>
    %c0_i32 = arith.constant 0 : i32
    %44 = arith.cmpi eq, %arg1, %c0_i32 : i32
    %45 = arith.extui %44 : i1 to i32
    %c0_i32_32 = arith.constant 0 : i32
    %46 = arith.cmpi ne, %45, %c0_i32_32 : i32
    scf.if %46 {
      %c0_35 = arith.constant 0 : index
      %c0_36 = arith.constant 0 : index
      %c0_37 = arith.constant 0 : index
      %50 = vector.load %arg13[%c0_35, %c0_36, %c0_37] : memref<1x1x1024xf32, #tpu.memory_space<vmem>>, vector<1x1x1024xf32>
      tpu.vector_store %arg13[%c0_35, %c0_36, %c0_37], %43 {strides = array<i32>} : memref<1x1x1024xf32, #tpu.memory_space<vmem>>, vector<1x1x1024xf32>,
    } else {
    }
    %c0_i32_33 = arith.constant 0 : i32
    %47 = arith.cmpi sgt, %arg1, %c0_i32_33 : i32
    %48 = arith.extui %47 : i1 to i32
    %c0_i32_34 = arith.constant 0 : i32
    %49 = arith.cmpi ne, %48, %c0_i32_34 : i32
    scf.if %49 {
      %c0_35 = arith.constant 0 : index
      %c0_36 = arith.constant 0 : index
      %c0_37 = arith.constant 0 : index
      %50 = vector.load %arg13[%c0_35, %c0_36, %c0_37] : memref<1x1x1024xf32, #tpu.memory_space<vmem>>, vector<1x1x1024xf32>
      %51 = arith.maximumf %50, %43 : vector<1x1x1024xf32>
      %c0_38 = arith.constant 0 : index
      %c0_39 = arith.constant 0 : index
      %c0_40 = arith.constant 0 : index
      %52 = vector.load %arg13[%c0_38, %c0_39, %c0_40] : memref<1x1x1024xf32, #tpu.memory_space<vmem>>, vector<1x1x1024xf32>
      tpu.vector_store %arg13[%c0_38, %c0_39, %c0_40], %51 {strides = array<i32>} : memref<1x1x1024xf32, #tpu.memory_space<vmem>>, vector<1x1x1024xf32>,
    } else {
    }
    return
  }
  func.func @transform_0(%arg0: i32, %arg1: i32) -> (i32, i32, i32) {
    %c0_i32 = arith.constant 0 : i32
    %c0_i32_0 = arith.constant 0 : i32
    return %arg0, %arg1, %c0_i32 : i32, i32, i32
  }
  func.func @transform_1(%arg0: i32, %arg1: i32) -> (i32, i32, i32) {
    %c0_i32 = arith.constant 0 : i32
    %c0_i32_0 = arith.constant 0 : i32
    %c0_i32_1 = arith.constant 0 : i32
    return %arg0, %c0_i32, %c0_i32_0 : i32, i32, i32
  }
  func.func @transform_2(%arg0: i32, %arg1: i32) -> (i32, i32) {
    %c0_i32 = arith.constant 0 : i32
    %c0_i32_0 = arith.constant 0 : i32
    %c0_i32_1 = arith.constant 0 : i32
    return %c0_i32, %c0_i32_0 : i32, i32
  }
  func.func @transform_3(%arg0: i32, %arg1: i32) -> (i32, i32) {
    %c0_i32 = arith.constant 0 : i32
    %c0_i32_0 = arith.constant 0 : i32
    %c0_i32_1 = arith.constant 0 : i32
    return %c0_i32, %c0_i32_0 : i32, i32
  }
  func.func @transform_4(%arg0: i32, %arg1: i32) -> (i32, i32) {
    %c0_i32 = arith.constant 0 : i32
    %c0_i32_0 = arith.constant 0 : i32
    %c0_i32_1 = arith.constant 0 : i32
    return %c0_i32, %c0_i32_0 : i32, i32
  }
  func.func @transform_5(%arg0: i32, %arg1: i32) -> (i32, i32) {
    %c0_i32 = arith.constant 0 : i32
    %c0_i32_0 = arith.constant 0 : i32
    %c0_i32_1 = arith.constant 0 : i32
    return %c0_i32, %c0_i32_0 : i32, i32
  }
  func.func @transform_6(%arg0: i32, %arg1: i32) -> (i32, i32) {
    %c0_i32 = arith.constant 0 : i32
    %c0_i32_0 = arith.constant 0 : i32
    %c0_i32_1 = arith.constant 0 : i32
    return %c0_i32, %c0_i32_0 : i32, i32
  }
  func.func @transform_7(%arg0: i32, %arg1: i32) -> (i32, i32) {
    %c0_i32 = arith.constant 0 : i32
    %c0_i32_0 = arith.constant 0 : i32
    %c0_i32_1 = arith.constant 0 : i32
    return %c0_i32, %c0_i32_0 : i32, i32
  }
  func.func @transform_8(%arg0: i32, %arg1: i32) -> (i32, i32) {
    %c0_i32 = arith.constant 0 : i32
    %c0_i32_0 = arith.constant 0 : i32
    %c0_i32_1 = arith.constant 0 : i32
    return %c0_i32, %c0_i32_0 : i32, i32
  }
  func.func @transform_9(%arg0: i32, %arg1: i32) -> (i32, i32) {
    %c0_i32 = arith.constant 0 : i32
    %c0_i32_0 = arith.constant 0 : i32
    %c0_i32_1 = arith.constant 0 : i32
    return %c0_i32, %c0_i32_0 : i32, i32
  }
  func.func @transform_10(%arg0: i32, %arg1: i32) -> (i32, i32) {
    %c0_i32 = arith.constant 0 : i32
    %c0_i32_0 = arith.constant 0 : i32
    %c0_i32_1 = arith.constant 0 : i32
    return %c0_i32, %c0_i32_0 : i32, i32
  }
  func.func @transform_11(%arg0: i32, %arg1: i32) -> (i32, i32, i32) {
    %c0_i32 = arith.constant 0 : i32
    %c0_i32_0 = arith.constant 0 : i32
    %c0_i32_1 = arith.constant 0 : i32
    return %arg0, %c0_i32, %c0_i32_0 : i32, i32, i32
  }
}

</mosaic_0001>

<llo_original>
// kernel: _lambda_.2
$region0: #{_lambda_.2}
  #allocation0 [shape = 'u32[]', space=smem, size = 0x4, offset = 0x4, fixed_abs, tag = 'smem constant byte address 0x4 - core index']
  #allocation1 [shape = 'u32[72,128]{1,0:T(1,128)}', space=vmem, size = 0x9000, scoped, tag = 'internal scratch']
  %s0 = inlined_call_operand.vmem [shape: f32[2,128,8], index: 0, kind: input, shape index: {}]
  %s1 = inlined_call_operand.vmem [shape: bf16[8,64], index: 1, kind: input, shape index: {}]
  %s2 = inlined_call_operand.vmem [shape: f32[1,64], index: 2, kind: input, shape index: {}]
  %s3 = inlined_call_operand.vmem [shape: bf16[64,128], index: 3, kind: input, shape index: {}]
  %s4 = inlined_call_operand.vmem [shape: f32[1,128], index: 4, kind: input, shape index: {}]
  %s5 = inlined_call_operand.vmem [shape: bf16[128,1024], index: 5, kind: input, shape index: {}]
  %s6 = inlined_call_operand.vmem [shape: f32[1,1024], index: 6, kind: input, shape index: {}]
  %s7 = inlined_call_operand.vmem [shape: f32[2,1,1024], index: 7, kind: output, shape index: {}]
  %s8 = sld [smem:[#allocation0]]
  $region69: #{_lambda_.2} parent=0
    _
  %s10 = ssub.s32 1, %s8
  %s11 = scalar_select 0, %s10, %s8
  loop: start=0, step=1, limit=4
  $region2: #{_lambda_.2} parent=0 // loop_pre_header
    _
  $region3: #{_lambda_.2} parent=0 // loop_header
    %s13 = sphi 0, %s17
    %p14 = scmp.ge.s32.totalorder %s13, 4
    %s20 = sphi 0, %s32
    %s21 = sphi 0, %s28
    %s22 = sphi 0, %s20
    %s23 = sphi 0, %s21
    %s24 = sphi 0, %s22
    %s25 = sphi 0, %s23
    %s37 = sphi 0, %s39
    %s40 = sphi 0, %s37
    %s41 = sphi 0, %s40
    %s57 = sphi 0, %s41
    %s61 = sphi 0, %s61
    %s63 = sphi 0, %s61
    %s64 = sphi 0, %s63
    %s78 = sphi 0, %s64
    %s82 = sphi 0, %s82
    %s84 = sphi 0, %s82
    %s85 = sphi 0, %s84
    %s99 = sphi 0, %s85
    %s103 = sphi 0, %s103
    %s105 = sphi 0, %s103
    %s106 = sphi 0, %s105
    %s120 = sphi 0, %s106
    %s124 = sphi 0, %s124
    %s126 = sphi 0, %s124
    %s127 = sphi 0, %s126
    %s141 = sphi 0, %s127
    %s145 = sphi 0, %s145
    %s147 = sphi 0, %s145
    %s148 = sphi 0, %s147
    %s162 = sphi 0, %s148
    %s166 = sphi 0, %s166
    %s168 = sphi 0, %s166
    %s169 = sphi 0, %s168
    %s183 = sphi 0, %s169
    %s189 = sphi 0, %s191
    %s192 = sphi 0, %s189
    %s193 = sphi 0, %s192
    %s209 = sphi 0, %s193
  $region4: #{_lambda_.2} parent=0 // loop_header_branch
    %16 = sbr.rel (%p14) target = $region8
  $region5: #{_lambda_.2} parent=0 // loop_body
    %s18 = ssub.s32 %s13, 1
    %s19 = ssub.s32 %s13, 2
    %s26 = sadd.s32 1, %s21
    %p27 = scmp.ge.s32.totalorder %s26, 1
    %s28 = scalar_select %p27, 0, %s26
    %s29 = sadd.s32 1, %s20
    %s30 = scalar_select %p27, %s29, %s20
    %p31 = scmp.ge.s32.totalorder %s30, 2
    %s32 = scalar_select %p31, 0, %s30
    %s33 = ssub.s32 %s20, %s32
    %s34 = ssub.s32 %s21, %s28
    %s35 = sor.u32 %s33, %s34
    %p36 = scmp.eq.s32.totalorder %s35, 0
    %s38 = sadd.s32 %s37, 1
    %s39 = scalar_select %p36, %s37, %s38
    %p42 = pneg %p36
    %p43 = scmp.eq.s32.totalorder %s13, 1
    %p44 = por %p42, %p43
    %p45 = scmp.ne.s32.totalorder %s37, %s40
    %p46 = scmp.eq.s32.totalorder %s13, 0
    %p47 = por %p45, %p46
    %p48 = scmp.ne.s32.totalorder %s37, %s40
    %p49 = scmp.eq.s32.totalorder %s18, 1
    %p50 = por %p48, %p49
    %p51 = scmp.ne.s32.totalorder %s40, %s41
    %p52 = scmp.eq.s32.totalorder %s18, 0
    %p53 = por %p51, %p52
    %p54 = scmp.ne.s32.totalorder %s40, %s41
    %p55 = scmp.eq.s32.totalorder %s19, 1
    %p56 = por %p54, %p55
    %p58 = scmp.ne.s32.totalorder %s41, %s57
    %p59 = scmp.eq.s32.totalorder %s19, 0
    %p60 = por %p58, %p59
    %s62 = sadd.s32 %s61, 1
    %p65 = scmp.eq.s32.totalorder %s13, 1
    %p66 = scmp.ne.s32.totalorder %s61, %s63
    %p67 = scmp.eq.s32.totalorder %s13, 0
    %p68 = por %p66, %p67
    %p69 = scmp.ne.s32.totalorder %s61, %s63
    %p70 = scmp.eq.s32.totalorder %s18, 1
    %p71 = por %p69, %p70
    %p72 = scmp.ne.s32.totalorder %s63, %s64
    %p73 = scmp.eq.s32.totalorder %s18, 0
    %p74 = por %p72, %p73
    %p75 = scmp.ne.s32.totalorder %s63, %s64
    %p76 = scmp.eq.s32.totalorder %s19, 1
    %p77 = por %p75, %p76
    %p79 = scmp.ne.s32.totalorder %s64, %s78
    %p80 = scmp.eq.s32.totalorder %s19, 0
    %p81 = por %p79, %p80
    %s83 = sadd.s32 %s82, 1
    %p86 = scmp.eq.s32.totalorder %s13, 1
    %p87 = scmp.ne.s32.totalorder %s82, %s84
    %p88 = scmp.eq.s32.totalorder %s13, 0
    %p89 = por %p87, %p88
    %p90 = scmp.ne.s32.totalorder %s82, %s84
    %p91 = scmp.eq.s32.totalorder %s18, 1
    %p92 = por %p90, %p91
    %p93 = scmp.ne.s32.totalorder %s84, %s85
    %p94 = scmp.eq.s32.totalorder %s18, 0
    %p95 = por %p93, %p94
    %p96 = scmp.ne.s32.totalorder %s84, %s85
    %p97 = scmp.eq.s32.totalorder %s19, 1
    %p98 = por %p96, %p97
    %p100 = scmp.ne.s32.totalorder %s85, %s99
    %p101 = scmp.eq.s32.totalorder %s19, 0
    %p102 = por %p100, %p101
    %s104 = sadd.s32 %s103, 1
    %p107 = scmp.eq.s32.totalorder %s13, 1
    %p108 = scmp.ne.s32.totalorder %s103, %s105
    %p109 = scmp.eq.s32.totalorder %s13, 0
    %p110 = por %p108, %p109
    %p111 = scmp.ne.s32.totalorder %s103, %s105
    %p112 = scmp.eq.s32.totalorder %s18, 1
    %p113 = por %p111, %p112
    %p114 = scmp.ne.s32.totalorder %s105, %s106
    %p115 = scmp.eq.s32.totalorder %s18, 0
    %p116 = por %p114, %p115
    %p117 = scmp.ne.s32.totalorder %s105, %s106
    %p118 = scmp.eq.s32.totalorder %s19, 1
    %p119 = por %p117, %p118
    %p121 = scmp.ne.s32.totalorder %s106, %s120
    %p122 = scmp.eq.s32.totalorder %s19, 0
    %p123 = por %p121, %p122
    %s125 = sadd.s32 %s124, 1
    %p128 = scmp.eq.s32.totalorder %s13, 1
    %p129 = scmp.ne.s32.totalorder %s124, %s126
    %p130 = scmp.eq.s32.totalorder %s13, 0
    %p131 = por %p129, %p130
    %p132 = scmp.ne.s32.totalorder %s124, %s126
    %p133 = scmp.eq.s32.totalorder %s18, 1
    %p134 = por %p132, %p133
    %p135 = scmp.ne.s32.totalorder %s126, %s127
    %p136 = scmp.eq.s32.totalorder %s18, 0
    %p137 = por %p135, %p136
    %p138 = scmp.ne.s32.totalorder %s126, %s127
    %p139 = scmp.eq.s32.totalorder %s19, 1
    %p140 = por %p138, %p139
    %p142 = scmp.ne.s32.totalorder %s127, %s141
    %p143 = scmp.eq.s32.totalorder %s19, 0
    %p144 = por %p142, %p143
    %s146 = sadd.s32 %s145, 1
    %p149 = scmp.eq.s32.totalorder %s13, 1
    %p150 = scmp.ne.s32.totalorder %s145, %s147
    %p151 = scmp.eq.s32.totalorder %s13, 0
    %p152 = por %p150, %p151
    %p153 = scmp.ne.s32.totalorder %s145, %s147
    %p154 = scmp.eq.s32.totalorder %s18, 1
    %p155 = por %p153, %p154
    %p156 = scmp.ne.s32.totalorder %s147, %s148
    %p157 = scmp.eq.s32.totalorder %s18, 0
    %p158 = por %p156, %p157
    %p159 = scmp.ne.s32.totalorder %s147, %s148
    %p160 = scmp.eq.s32.totalorder %s19, 1
    %p161 = por %p159, %p160
    %p163 = scmp.ne.s32.totalorder %s148, %s162
    %p164 = scmp.eq.s32.totalorder %s19, 0
    %p165 = por %p163, %p164
    %s167 = sadd.s32 %s166, 1
    %p170 = scmp.eq.s32.totalorder %s13, 1
    %p171 = scmp.ne.s32.totalorder %s166, %s168
    %p172 = scmp.eq.s32.totalorder %s13, 0
    %p173 = por %p171, %p172
    %p174 = scmp.ne.s32.totalorder %s166, %s168
    %p175 = scmp.eq.s32.totalorder %s18, 1
    %p176 = por %p174, %p175
    %p177 = scmp.ne.s32.totalorder %s168, %s169
    %p178 = scmp.eq.s32.totalorder %s18, 0
    %p179 = por %p177, %p178
    %p180 = scmp.ne.s32.totalorder %s168, %s169
    %p181 = scmp.eq.s32.totalorder %s19, 1
    %p182 = por %p180, %p181
    %p184 = scmp.ne.s32.totalorder %s169, %s183
    %p185 = scmp.eq.s32.totalorder %s19, 0
    %p186 = por %p184, %p185
    %s187 = ssub.s32 %s20, %s32
    %p188 = scmp.eq.s32.totalorder %s187, 0
    %s190 = sadd.s32 %s189, 1
    %s191 = scalar_select %p188, %s189, %s190
    %p194 = pneg %p188
    %p195 = scmp.eq.s32.totalorder %s13, 1
    %p196 = por %p194, %p195
    %p197 = scmp.ne.s32.totalorder %s189, %s192
    %p198 = scmp.eq.s32.totalorder %s13, 0
    %p199 = por %p197, %p198
    %p200 = scmp.ne.s32.totalorder %s189, %s192
    %p201 = scmp.eq.s32.totalorder %s18, 1
    %p202 = por %p200, %p201
    %p203 = scmp.ne.s32.totalorder %s192, %s193
    %p204 = scmp.eq.s32.totalorder %s18, 0
    %p205 = por %p203, %p204
    %p206 = scmp.ne.s32.totalorder %s192, %s193
    %p207 = scmp.eq.s32.totalorder %s19, 1
    %p208 = por %p206, %p207
    %p210 = scmp.ne.s32.totalorder %s193, %s209
    %p211 = scmp.eq.s32.totalorder %s19, 0
    %p212 = por %p210, %p211
    %p213 = scmp.le.s32.totalorder 1, %s13
    %p214 = scmp.lt.s32.totalorder %s13, 3
    %p215 = pnand %p213, %p214
    %p216 = pneg %p215
    // Predicated region
    $region9: #{_lambda_.2} parent=5 // pred_check
      _
    $region10: #{_lambda_.2} parent=5 // pred_check_branch
      %218 = sbr.rel (%p215) target = $region12
    $region11: #{_lambda_.2} parent=5 // pred_region
      %s219 = ssub.s32 %s13, 1
      // Predicated region
      $region13: #{_lambda_.2} parent=11 // pred_check
        %p220 = pneg %p74
      $region14: #{_lambda_.2} parent=11 // pred_check_branch
        %222 = sbr.rel (%p220) target = $region16
      $region15: #{_lambda_.2} parent=11 // pred_region
        _
      $region16: #{_lambda_.2} parent=11 // pred_fallthru
        _
      // Predicated region
      $region17: #{_lambda_.2} parent=11 // pred_check
        %p223 = pneg %p95
      $region18: #{_lambda_.2} parent=11 // pred_check_branch
        %225 = sbr.rel (%p223) target = $region20
      $region19: #{_lambda_.2} parent=11 // pred_region
        _
      $region20: #{_lambda_.2} parent=11 // pred_fallthru
        _
      // Predicated region
      $region21: #{_lambda_.2} parent=11 // pred_check
        %p226 = pneg %p116
      $region22: #{_lambda_.2} parent=11 // pred_check_branch
        %228 = sbr.rel (%p226) target = $region24
      $region23: #{_lambda_.2} parent=11 // pred_region
        _
      $region24: #{_lambda_.2} parent=11 // pred_fallthru
        _
      // Predicated region
      $region25: #{_lambda_.2} parent=11 // pred_check
        %p229 = pneg %p137
      $region26: #{_lambda_.2} parent=11 // pred_check_branch
        %231 = sbr.rel (%p229) target = $region28
      $region27: #{_lambda_.2} parent=11 // pred_region
        _
      $region28: #{_lambda_.2} parent=11 // pred_fallthru
        _
      // Predicated region
      $region29: #{_lambda_.2} parent=11 // pred_check
        %p232 = pneg %p158
      $region30: #{_lambda_.2} parent=11 // pred_check_branch
        %234 = sbr.rel (%p232) target = $region32
      $region31: #{_lambda_.2} parent=11 // pred_region
        _
      $region32: #{_lambda_.2} parent=11 // pred_fallthru
        _
      // Predicated region
      $region33: #{_lambda_.2} parent=11 // pred_check
        %p235 = pneg %p179
      $region34: #{_lambda_.2} parent=11 // pred_check_branch
        %237 = sbr.rel (%p235) target = $region36
      $region35: #{_lambda_.2} parent=11 // pred_region
        _
      $region36: #{_lambda_.2} parent=11 // pred_fallthru
        _
    $region12: #{_lambda_.2} parent=5 // pred_fallthru
      _
    %p238 = scmp.lt.s32.totalorder %s13, 2
    // Predicated region
    $region37: #{_lambda_.2} parent=5 // pred_check
      %p239 = pneg %p238
    $region38: #{_lambda_.2} parent=5 // pred_check_branch
      %241 = sbr.rel (%p239) target = $region40
    $region39: #{_lambda_.2} parent=5 // pred_region
      // Predicated region
      $region41: #{_lambda_.2} parent=39 // pred_check
        %p242 = pneg %p47
      $region42: #{_lambda_.2} parent=39 // pred_check_branch
        %244 = sbr.rel (%p242) target = $region44
      $region43: #{_lambda_.2} parent=39 // pred_region
        %s245 = smul.u32 16, %s21
        %p246 = scmp.lt.s32.totalorder %s20, 1
        %s247 = scalar_select %p246, %s20, 1
        %p248 = scmp.lt.s32.totalorder %s245, 15
        %s249 = scalar_select %p248, %s245, 15
        %s250 = smul.addr %s247, 16
        %s251 = sadd.s32 %s249, %s250
        %s252 = smul.addr %s251, 8
        %s253 = scalar_lea.vmem %s0, %s252
        %s254 = smul.u32 16, %s21
      $region44: #{_lambda_.2} parent=39 // pred_fallthru
        _
    $region40: #{_lambda_.2} parent=5 // pred_fallthru
      _
    %p255 = scmp.le.s32.totalorder 1, %s13
    %p256 = scmp.lt.s32.totalorder %s13, 3
    %p257 = pnand %p255, %p256
    %p258 = pneg %p257
    // Predicated region
    $region45: #{_lambda_.2} parent=5 // pred_check
      _
    $region46: #{_lambda_.2} parent=5 // pred_check_branch
      %260 = sbr.rel (%p257) target = $region48
    $region47: #{_lambda_.2} parent=5 // pred_region
      %s261 = ssub.s32 %s13, 1
      %s262 = smul.u32 16, %s23
      %p263 = scmp.lt.s32.totalorder %s22, 1
      %s264 = scalar_select %p263, %s22, 1
      %p265 = scmp.lt.s32.totalorder %s262, 15
      %s266 = scalar_select %p265, %s262, 15
      %s267 = smul.addr %s264, 16
      %s268 = sadd.s32 %s266, %s267
      %s269 = smul.addr %s268, 8
      %s270 = scalar_lea.vmem %s0, %s269
      %p271 = pneg %p53
      %p272 = pneg %p50
      %p273 = pneg %p74
      %p274 = pneg %p71
      %p275 = pneg %p95
      %p276 = pneg %p92
      %p277 = pneg %p116
      %p278 = pneg %p113
      %p279 = pneg %p137
      %p280 = pneg %p134
      %p281 = pneg %p158
      %p282 = pneg %p155
      %p283 = pneg %p179
      %p284 = pneg %p176
      %p285 = pneg %p205
      %p286 = pneg %p202
      %p287 = scmp.lt.s32.totalorder %s22, 1
      %s288 = scalar_select %p287, %s22, 1
      %s289 = smul.addr %s288, 8
      %s290 = scalar_lea.vmem %s7, %s289
      %s291 = smul.u32 16, %s23
      %p292 = scmp.lt.s32.totalorder %s22, 1
      %s293 = scalar_select %p292, %s22, 1
      %p294 = scmp.lt.s32.totalorder %s291, 15
      %s295 = scalar_select %p294, %s291, 15
      %s296 = smul.addr %s293, 16
      %s297 = sadd.s32 %s295, %s296
      %s298 = smul.addr %s297, 8
      %s299 = scalar_lea.vmem %s0, %s298
      %s300 = smul.u32 16, %s23
      %p301 = scmp.lt.s32.totalorder %s22, 1
      %s302 = scalar_select %p301, %s22, 1
      %s303 = smul.addr %s302, 8
      %s304 = scalar_lea.vmem %s7, %s303
      %v306 = vld [vmem:[%s299] sm:$0xff]
      %v307 = vld [vmem:[%s299 + $0x8] sm:$0xff]
      %v308 = vld [vmem:[%s299 + $0x10] sm:$0xff]
      %v309 = vld [vmem:[%s299 + $0x18] sm:$0xff]
      %v310 = vld [vmem:[%s299 + $0x20] sm:$0xff]
      %v311 = vld [vmem:[%s299 + $0x28] sm:$0xff]
      %v312 = vld [vmem:[%s299 + $0x30] sm:$0xff]
      %v313 = vld [vmem:[%s299 + $0x38] sm:$0xff]
      %v314 = vld [vmem:[%s299 + $0x40] sm:$0xff]
      %v315 = vld [vmem:[%s299 + $0x48] sm:$0xff]
      %v316 = vld [vmem:[%s299 + $0x50] sm:$0xff]
      %v317 = vld [vmem:[%s299 + $0x58] sm:$0xff]
      %v318 = vld [vmem:[%s299 + $0x60] sm:$0xff]
      %v319 = vld [vmem:[%s299 + $0x68] sm:$0xff]
      %v320 = vld [vmem:[%s299 + $0x70] sm:$0xff]
      %v321 = vld [vmem:[%s299 + $0x78] sm:$0xff]
      %v322 = vpack.c.bf16 %v307, %v306
      %v323 = vpack.c.bf16 %v309, %v308
      %v324 = vpack.c.bf16 %v311, %v310
      %v325 = vpack.c.bf16 %v313, %v312
      %v326 = vpack.c.bf16 %v315, %v314
      %v327 = vpack.c.bf16 %v317, %v316
      %v328 = vpack.c.bf16 %v319, %v318
      %v329 = vpack.c.bf16 %v321, %v320
      %v330 = vld [vmem:[%s1] sm:$0xf]
      %v331 = vld [vmem:[%s2] sm:$0x1]
      %v333 = vperm.slane %v331, 0
      %vm335 = vcmask 64512
      %v337 = vsel %vm335, %v322, 0
      %v340 = vsel %vm335, %v323, 0
      %v343 = vsel %vm335, %v324, 0
      %v346 = vsel %vm335, %v325, 0
      %v349 = vsel %vm335, %v326, 0
      %v352 = vsel %vm335, %v327, 0
      %v355 = vsel %vm335, %v328, 0
      %v358 = vsel %vm335, %v329, 0
      %vm360 = vcmask 1043456
      %v362 = vsel %vm360, %v330, 0
      %364 = vmatpush.bf16.msra.mxu0 0
      %365 = vmatpush.bf16.msra.mxu0 0
      %366 = vmatpush.bf16.msra.mxu0 0
      %367 = vmatpush.bf16.msra.mxu0 0
      %368 = vmatpush.bf16.msra.mxu0 0
      %369 = vmatpush.bf16.msra.mxu0 0
      %370 = vmatpush.bf16.msra.mxu0 0
      %371 = vmatpush.bf16.msra.mxu0 %v362
      %372 = vmatmul.bf16.gmra.mxu0 %v337
      %v373 = vpop.f32.mrf.mxu0
      %v374 = vadd.f32 %v333, %v373
      %v375 = vpop.f32.mrf.mxu0
      %v376 = vadd.f32 %v333, %v375
      %377 = vmatmul.bf16.gmra.mxu0 %v340
      %v378 = vpop.f32.mrf.mxu0
      %v379 = vadd.f32 %v333, %v378
      %v380 = vpop.f32.mrf.mxu0
      %v381 = vadd.f32 %v333, %v380
      %382 = vmatmul.bf16.gmra.mxu0 %v343
      %v383 = vpop.f32.mrf.mxu0
      %v384 = vadd.f32 %v333, %v383
      %v385 = vpop.f32.mrf.mxu0
      %v386 = vadd.f32 %v333, %v385
      %387 = vmatmul.bf16.gmra.mxu0 %v346
      %v388 = vpop.f32.mrf.mxu0
      %v389 = vadd.f32 %v333, %v388
      %v390 = vpop.f32.mrf.mxu0
      %v391 = vadd.f32 %v333, %v390
      %392 = vmatmul.bf16.gmra.mxu0 %v349
      %v393 = vpop.f32.mrf.mxu0
      %v394 = vadd.f32 %v333, %v393
      %v395 = vpop.f32.mrf.mxu0
      %v396 = vadd.f32 %v333, %v395
      %397 = vmatmul.bf16.gmra.mxu0 %v352
      %v398 = vpop.f32.mrf.mxu0
      %v399 = vadd.f32 %v333, %v398
      %v400 = vpop.f32.mrf.mxu0
      %v401 = vadd.f32 %v333, %v400
      %402 = vmatmul.bf16.gmra.mxu0 %v355
      %v403 = vpop.f32.mrf.mxu0
      %v404 = vadd.f32 %v333, %v403
      %v405 = vpop.f32.mrf.mxu0
      %v406 = vadd.f32 %v333, %v405
      %407 = vmatmul.bf16.gmra.mxu0 %v358
      %v408 = vpop.f32.mrf.mxu0
      %v409 = vadd.f32 %v333, %v408
      %v410 = vpop.f32.mrf.mxu0
      %v411 = vadd.f32 %v333, %v410
      %412 = vdwg.mxu0
      %v413 = vmax.f32 %v374, 0.0
      %v414 = vmax.f32 %v376, 0.0
      %v415 = vmax.f32 %v379, 0.0
      %v416 = vmax.f32 %v381, 0.0
      %v417 = vmax.f32 %v384, 0.0
      %v418 = vmax.f32 %v386, 0.0
      %v419 = vmax.f32 %v389, 0.0
      %v420 = vmax.f32 %v391, 0.0
      %v421 = vmax.f32 %v394, 0.0
      %v422 = vmax.f32 %v396, 0.0
      %v423 = vmax.f32 %v399, 0.0
      %v424 = vmax.f32 %v401, 0.0
      %v425 = vmax.f32 %v404, 0.0
      %v426 = vmax.f32 %v406, 0.0
      %v427 = vmax.f32 %v409, 0.0
      %v428 = vmax.f32 %v411, 0.0
      %v429 = vpack.c.bf16 %v414, %v413
      %v430 = vpack.c.bf16 %v416, %v415
      %v431 = vpack.c.bf16 %v418, %v417
      %v432 = vpack.c.bf16 %v420, %v419
      %v433 = vpack.c.bf16 %v422, %v421
      %v434 = vpack.c.bf16 %v424, %v423
      %v435 = vpack.c.bf16 %v426, %v425
      %v436 = vpack.c.bf16 %v428, %v427
      %v437 = vld [vmem:[%s3] sm:$0xf]
      %v438 = vld [vmem:[%s3 + $0x4] sm:$0xf]
      %v439 = vld [vmem:[%s3 + $0x8] sm:$0xf]
      %v440 = vld [vmem:[%s3 + $0xc] sm:$0xf]
      %v441 = vld [vmem:[%s3 + $0x10] sm:$0xf]
      %v442 = vld [vmem:[%s3 + $0x14] sm:$0xf]
      %v443 = vld [vmem:[%s3 + $0x18] sm:$0xf]
      %v444 = vld [vmem:[%s3 + $0x1c] sm:$0xf]
      %v445 = vld [vmem:[%s4] sm:$0x1]
      %v447 = vperm.slane %v445, 0
      %v457 = vunpack.c.l.b16 %v437
      %v458 = vunpack.c.l.b16 %v438
      %v459 = vunpack.c.l.b16 %v439
      %v460 = vunpack.c.l.b16 %v440
      %v461 = vunpack.c.l.b16 %v441
      %v462 = vunpack.c.l.b16 %v442
      %v463 = vunpack.c.l.b16 %v443
      %v464 = vunpack.c.l.b16 %v444
      %v465 = vpack.c.b16 %v458, %v457
      %v466 = vpack.c.b16 %v460, %v459
      %v467 = vpack.c.b16 %v462, %v461
      %v468 = vpack.c.b16 %v464, %v463
      %vm473 = vcmask 523264
      %v475 = vsel %vm473, %v429, 0
      %v478 = vsel %vm473, %v430, 0
      %v481 = vsel %vm473, %v431, 0
      %v484 = vsel %vm473, %v432, 0
      %v487 = vsel %vm473, %v433, 0
      %v490 = vsel %vm473, %v434, 0
      %v493 = vsel %vm473, %v435, 0
      %v496 = vsel %vm473, %v436, 0
      %498 = vmatpush.bf16.msra.mxu0 0
      %499 = vmatpush.bf16.msra.mxu0 0
      %500 = vmatpush.bf16.msra.mxu0 0
      %501 = vmatpush.bf16.msra.mxu0 0
      %502 = vmatpush.bf16.msra.mxu0 %v468
      %503 = vmatpush.bf16.msra.mxu0 %v467
      %504 = vmatpush.bf16.msra.mxu0 %v466
      %505 = vmatpush.bf16.msra.mxu0 %v465
      %506 = vmatmul.bf16.gmra.mxu0 %v475
      %v507 = vpop.f32.mrf.mxu0
      %v508 = vadd.f32 %v447, %v507
      %v509 = vpop.f32.mrf.mxu0
      %v510 = vadd.f32 %v447, %v509
      %511 = vmatmul.bf16.gmra.mxu0 %v478
      %v512 = vpop.f32.mrf.mxu0
      %v513 = vadd.f32 %v447, %v512
      %v514 = vpop.f32.mrf.mxu0
      %v515 = vadd.f32 %v447, %v514
      %516 = vmatmul.bf16.gmra.mxu0 %v481
      %v517 = vpop.f32.mrf.mxu0
      %v518 = vadd.f32 %v447, %v517
      %v519 = vpop.f32.mrf.mxu0
      %v520 = vadd.f32 %v447, %v519
      %521 = vmatmul.bf16.gmra.mxu0 %v484
      %v522 = vpop.f32.mrf.mxu0
      %v523 = vadd.f32 %v447, %v522
      %v524 = vpop.f32.mrf.mxu0
      %v525 = vadd.f32 %v447, %v524
      %526 = vmatmul.bf16.gmra.mxu0 %v487
      %v527 = vpop.f32.mrf.mxu0
      %v528 = vadd.f32 %v447, %v527
      %v529 = vpop.f32.mrf.mxu0
      %v530 = vadd.f32 %v447, %v529
      %531 = vmatmul.bf16.gmra.mxu0 %v490
      %v532 = vpop.f32.mrf.mxu0
      %v533 = vadd.f32 %v447, %v532
      %v534 = vpop.f32.mrf.mxu0
      %v535 = vadd.f32 %v447, %v534
      %536 = vmatmul.bf16.gmra.mxu0 %v493
      %v537 = vpop.f32.mrf.mxu0
      %v538 = vadd.f32 %v447, %v537
      %v539 = vpop.f32.mrf.mxu0
      %v540 = vadd.f32 %v447, %v539
      %541 = vmatmul.bf16.gmra.mxu0 %v496
      %v542 = vpop.f32.mrf.mxu0
      %v543 = vadd.f32 %v447, %v542
      %v544 = vpop.f32.mrf.mxu0
      %v545 = vadd.f32 %v447, %v544
      %546 = vdwg.mxu0
      %v547 = vmax.f32 %v508, 0.0
      %v548 = vmax.f32 %v510, 0.0
      %v549 = vmax.f32 %v513, 0.0
      %v550 = vmax.f32 %v515, 0.0
      %v551 = vmax.f32 %v518, 0.0
      %v552 = vmax.f32 %v520, 0.0
      %v553 = vmax.f32 %v523, 0.0
      %v554 = vmax.f32 %v525, 0.0
      %v555 = vmax.f32 %v528, 0.0
      %v556 = vmax.f32 %v530, 0.0
      %v557 = vmax.f32 %v533, 0.0
      %v558 = vmax.f32 %v535, 0.0
      %v559 = vmax.f32 %v538, 0.0
      %v560 = vmax.f32 %v540, 0.0
      %v561 = vmax.f32 %v543, 0.0
      %v562 = vmax.f32 %v545, 0.0
      %v563 = vpack.c.bf16 %v548, %v547
      %v564 = vpack.c.bf16 %v550, %v549
      %v565 = vpack.c.bf16 %v552, %v551
      %v566 = vpack.c.bf16 %v554, %v553
      %v567 = vpack.c.bf16 %v556, %v555
      %v568 = vpack.c.bf16 %v558, %v557
      %v569 = vpack.c.bf16 %v560, %v559
      %v570 = vpack.c.bf16 %v562, %v561
      %v571 = vld [vmem:[%s5] sm:$0xff]
      %v572 = vld [vmem:[%s5 + $0x8] sm:$0xff]
      %v573 = vld [vmem:[%s5 + $0x10] sm:$0xff]
      %v574 = vld [vmem:[%s5 + $0x18] sm:$0xff]
      %v575 = vld [vmem:[%s5 + $0x20] sm:$0xff]
      %v576 = vld [vmem:[%s5 + $0x28] sm:$0xff]
      %v577 = vld [vmem:[%s5 + $0x30] sm:$0xff]
      %v578 = vld [vmem:[%s5 + $0x38] sm:$0xff]
      %v579 = vld [vmem:[%s5 + $0x40] sm:$0xff]
      %v580 = vld [vmem:[%s5 + $0x48] sm:$0xff]
      %v581 = vld [vmem:[%s5 + $0x50] sm:$0xff]
      %v582 = vld [vmem:[%s5 + $0x58] sm:$0xff]
      %v583 = vld [vmem:[%s5 + $0x60] sm:$0xff]
      %v584 = vld [vmem:[%s5 + $0x68] sm:$0xff]
      %v585 = vld [vmem:[%s5 + $0x70] sm:$0xff]
      %v586 = vld [vmem:[%s5 + $0x78] sm:$0xff]
      %v587 = vld [vmem:[%s5 + $0x80] sm:$0xff]
      %v588 = vld [vmem:[%s5 + $0x88] sm:$0xff]
      %v589 = vld [vmem:[%s5 + $0x90] sm:$0xff]
      %v590 = vld [vmem:[%s5 + $0x98] sm:$0xff]
      %v591 = vld [vmem:[%s5 + $0xa0] sm:$0xff]
      %v592 = vld [vmem:[%s5 + $0xa8] sm:$0xff]
      %v593 = vld [vmem:[%s5 + $0xb0] sm:$0xff]
      %v594 = vld [vmem:[%s5 + $0xb8] sm:$0xff]
      %v595 = vld [vmem:[%s5 + $0xc0] sm:$0xff]
      %v596 = vld [vmem:[%s5 + $0xc8] sm:$0xff]
      %v597 = vld [vmem:[%s5 + $0xd0] sm:$0xff]
      %v598 = vld [vmem:[%s5 + $0xd8] sm:$0xff]
      %v599 = vld [vmem:[%s5 + $0xe0] sm:$0xff]
      %v600 = vld [vmem:[%s5 + $0xe8] sm:$0xff]
      %v601 = vld [vmem:[%s5 + $0xf0] sm:$0xff]
      %v602 = vld [vmem:[%s5 + $0xf8] sm:$0xff]
      %v603 = vld [vmem:[%s5 + $0x100] sm:$0xff]
      %v604 = vld [vmem:[%s5 + $0x108] sm:$0xff]
      %v605 = vld [vmem:[%s5 + $0x110] sm:$0xff]
      %v606 = vld [vmem:[%s5 + $0x118] sm:$0xff]
      %v607 = vld [vmem:[%s5 + $0x120] sm:$0xff]
      %v608 = vld [vmem:[%s5 + $0x128] sm:$0xff]
      %v609 = vld [vmem:[%s5 + $0x130] sm:$0xff]
      %v610 = vld [vmem:[%s5 + $0x138] sm:$0xff]
      %v611 = vld [vmem:[%s5 + $0x140] sm:$0xff]
      %v612 = vld [vmem:[%s5 + $0x148] sm:$0xff]
      %v613 = vld [vmem:[%s5 + $0x150] sm:$0xff]
      %v614 = vld [vmem:[%s5 + $0x158] sm:$0xff]
      %v615 = vld [vmem:[%s5 + $0x160] sm:$0xff]
      %v616 = vld [vmem:[%s5 + $0x168] sm:$0xff]
      %v617 = vld [vmem:[%s5 + $0x170] sm:$0xff]
      %v618 = vld [vmem:[%s5 + $0x178] sm:$0xff]
      %v619 = vld [vmem:[%s5 + $0x180] sm:$0xff]
      %v620 = vld [vmem:[%s5 + $0x188] sm:$0xff]
      %v621 = vld [vmem:[%s5 + $0x190] sm:$0xff]
      %v622 = vld [vmem:[%s5 + $0x198] sm:$0xff]
      %v623 = vld [vmem:[%s5 + $0x1a0] sm:$0xff]
      %v624 = vld [vmem:[%s5 + $0x1a8] sm:$0xff]
      %v625 = vld [vmem:[%s5 + $0x1b0] sm:$0xff]
      %v626 = vld [vmem:[%s5 + $0x1b8] sm:$0xff]
      %v627 = vld [vmem:[%s5 + $0x1c0] sm:$0xff]
      %v628 = vld [vmem:[%s5 + $0x1c8] sm:$0xff]
      %v629 = vld [vmem:[%s5 + $0x1d0] sm:$0xff]
      %v630 = vld [vmem:[%s5 + $0x1d8] sm:$0xff]
      %v631 = vld [vmem:[%s5 + $0x1e0] sm:$0xff]
      %v632 = vld [vmem:[%s5 + $0x1e8] sm:$0xff]
      %v633 = vld [vmem:[%s5 + $0x1f0] sm:$0xff]
      %v634 = vld [vmem:[%s5 + $0x1f8] sm:$0xff]
      %v635 = vld [vmem:[%s6] sm:$0xff]
      %v637 = vperm.slane %v635, 0
      %v638 = vperm.slane %v635, 1
      %v639 = vperm.slane %v635, 2
      %v640 = vperm.slane %v635, 3
      %v641 = vperm.slane %v635, 4
      %v642 = vperm.slane %v635, 5
      %v643 = vperm.slane %v635, 6
      %v644 = vperm.slane %v635, 7
      %v717 = vunpack.c.l.b16 %v571
      %v718 = vunpack.c.h.b16 %v571
      %v719 = vunpack.c.l.b16 %v572
      %v720 = vunpack.c.h.b16 %v572
      %v721 = vunpack.c.l.b16 %v573
      %v722 = vunpack.c.h.b16 %v573
      %v723 = vunpack.c.l.b16 %v574
      %v724 = vunpack.c.h.b16 %v574
      %v725 = vunpack.c.l.b16 %v575
      %v726 = vunpack.c.h.b16 %v575
      %v727 = vunpack.c.l.b16 %v576
      %v728 = vunpack.c.h.b16 %v576
      %v729 = vunpack.c.l.b16 %v577
      %v730 = vunpack.c.h.b16 %v577
      %v731 = vunpack.c.l.b16 %v578
      %v732 = vunpack.c.h.b16 %v578
      %v733 = vunpack.c.l.b16 %v579
      %v734 = vunpack.c.h.b16 %v579
      %v735 = vunpack.c.l.b16 %v580
      %v736 = vunpack.c.h.b16 %v580
      %v737 = vunpack.c.l.b16 %v581
      %v738 = vunpack.c.h.b16 %v581
      %v739 = vunpack.c.l.b16 %v582
      %v740 = vunpack.c.h.b16 %v582
      %v741 = vunpack.c.l.b16 %v583
      %v742 = vunpack.c.h.b16 %v583
      %v743 = vunpack.c.l.b16 %v584
      %v744 = vunpack.c.h.b16 %v584
      %v745 = vunpack.c.l.b16 %v585
      %v746 = vunpack.c.h.b16 %v585
      %v747 = vunpack.c.l.b16 %v586
      %v748 = vunpack.c.h.b16 %v586
      %v749 = vunpack.c.l.b16 %v587
      %v750 = vunpack.c.h.b16 %v587
      %v751 = vunpack.c.l.b16 %v588
      %v752 = vunpack.c.h.b16 %v588
      %v753 = vunpack.c.l.b16 %v589
      %v754 = vunpack.c.h.b16 %v589
      %v755 = vunpack.c.l.b16 %v590
      %v756 = vunpack.c.h.b16 %v590
      %v757 = vunpack.c.l.b16 %v591
      %v758 = vunpack.c.h.b16 %v591
      %v759 = vunpack.c.l.b16 %v592
      %v760 = vunpack.c.h.b16 %v592
      %v761 = vunpack.c.l.b16 %v593
      %v762 = vunpack.c.h.b16 %v593
      %v763 = vunpack.c.l.b16 %v594
      %v764 = vunpack.c.h.b16 %v594
      %v765 = vunpack.c.l.b16 %v595
      %v766 = vunpack.c.h.b16 %v595
      %v767 = vunpack.c.l.b16 %v596
      %v768 = vunpack.c.h.b16 %v596
      %v769 = vunpack.c.l.b16 %v597
      %v770 = vunpack.c.h.b16 %v597
      %v771 = vunpack.c.l.b16 %v598
      %v772 = vunpack.c.h.b16 %v598
      %v773 = vunpack.c.l.b16 %v599
      %v774 = vunpack.c.h.b16 %v599
      %v775 = vunpack.c.l.b16 %v600
      %v776 = vunpack.c.h.b16 %v600
      %v777 = vunpack.c.l.b16 %v601
      %v778 = vunpack.c.h.b16 %v601
      %v779 = vunpack.c.l.b16 %v602
      %v780 = vunpack.c.h.b16 %v602
      %v781 = vunpack.c.l.b16 %v603
      %v782 = vunpack.c.h.b16 %v603
      %v783 = vunpack.c.l.b16 %v604
      %v784 = vunpack.c.h.b16 %v604
      %v785 = vunpack.c.l.b16 %v605
      %v786 = vunpack.c.h.b16 %v605
      %v787 = vunpack.c.l.b16 %v606
      %v788 = vunpack.c.h.b16 %v606
      %v789 = vunpack.c.l.b16 %v607
      %v790 = vunpack.c.h.b16 %v607
      %v791 = vunpack.c.l.b16 %v608
      %v792 = vunpack.c.h.b16 %v608
      %v793 = vunpack.c.l.b16 %v609
      %v794 = vunpack.c.h.b16 %v609
      %v795 = vunpack.c.l.b16 %v610
      %v796 = vunpack.c.h.b16 %v610
      %v797 = vunpack.c.l.b16 %v611
      %v798 = vunpack.c.h.b16 %v611
      %v799 = vunpack.c.l.b16 %v612
      %v800 = vunpack.c.h.b16 %v612
      %v801 = vunpack.c.l.b16 %v613
      %v802 = vunpack.c.h.b16 %v613
      %v803 = vunpack.c.l.b16 %v614
      %v804 = vunpack.c.h.b16 %v614
      %v805 = vunpack.c.l.b16 %v615
      %v806 = vunpack.c.h.b16 %v615
      %v807 = vunpack.c.l.b16 %v616
      %v808 = vunpack.c.h.b16 %v616
      %v809 = vunpack.c.l.b16 %v617
      %v810 = vunpack.c.h.b16 %v617
      %v811 = vunpack.c.l.b16 %v618
      %v812 = vunpack.c.h.b16 %v618
      %v813 = vunpack.c.l.b16 %v619
      %v814 = vunpack.c.h.b16 %v619
      %v815 = vunpack.c.l.b16 %v620
      %v816 = vunpack.c.h.b16 %v620
      %v817 = vunpack.c.l.b16 %v621
      %v818 = vunpack.c.h.b16 %v621
      %v819 = vunpack.c.l.b16 %v622
      %v820 = vunpack.c.h.b16 %v622
      %v821 = vunpack.c.l.b16 %v623
      %v822 = vunpack.c.h.b16 %v623
      %v823 = vunpack.c.l.b16 %v624
      %v824 = vunpack.c.h.b16 %v624
      %v825 = vunpack.c.l.b16 %v625
      %v826 = vunpack.c.h.b16 %v625
      %v827 = vunpack.c.l.b16 %v626
      %v828 = vunpack.c.h.b16 %v626
      %v829 = vunpack.c.l.b16 %v627
      %v830 = vunpack.c.h.b16 %v627
      %v831 = vunpack.c.l.b16 %v628
      %v832 = vunpack.c.h.b16 %v628
      %v833 = vunpack.c.l.b16 %v629
      %v834 = vunpack.c.h.b16 %v629
      %v835 = vunpack.c.l.b16 %v630
      %v836 = vunpack.c.h.b16 %v630
      %v837 = vunpack.c.l.b16 %v631
      %v838 = vunpack.c.h.b16 %v631
      %v839 = vunpack.c.l.b16 %v632
      %v840 = vunpack.c.h.b16 %v632
      %v841 = vunpack.c.l.b16 %v633
      %v842 = vunpack.c.h.b16 %v633
      %v843 = vunpack.c.l.b16 %v634
      %v844 = vunpack.c.h.b16 %v634
      %v845 = vpack.c.b16 %v725, %v717
      %v846 = vpack.c.b16 %v726, %v718
      %v847 = vpack.c.b16 %v727, %v719
      %v848 = vpack.c.b16 %v728, %v720
      %v849 = vpack.c.b16 %v729, %v721
      %v850 = vpack.c.b16 %v730, %v722
      %v851 = vpack.c.b16 %v731, %v723
      %v852 = vpack.c.b16 %v732, %v724
      %v853 = vpack.c.b16 %v741, %v733
      %v854 = vpack.c.b16 %v742, %v734
      %v855 = vpack.c.b16 %v743, %v735
      %v856 = vpack.c.b16 %v744, %v736
      %v857 = vpack.c.b16 %v745, %v737
      %v858 = vpack.c.b16 %v746, %v738
      %v859 = vpack.c.b16 %v747, %v739
      %v860 = vpack.c.b16 %v748, %v740
      %v861 = vpack.c.b16 %v757, %v749
      %v862 = vpack.c.b16 %v758, %v750
      %v863 = vpack.c.b16 %v759, %v751
      %v864 = vpack.c.b16 %v760, %v752
      %v865 = vpack.c.b16 %v761, %v753
      %v866 = vpack.c.b16 %v762, %v754
      %v867 = vpack.c.b16 %v763, %v755
      %v868 = vpack.c.b16 %v764, %v756
      %v869 = vpack.c.b16 %v773, %v765
      %v870 = vpack.c.b16 %v774, %v766
      %v871 = vpack.c.b16 %v775, %v767
      %v872 = vpack.c.b16 %v776, %v768
      %v873 = vpack.c.b16 %v777, %v769
      %v874 = vpack.c.b16 %v778, %v770
      %v875 = vpack.c.b16 %v779, %v771
      %v876 = vpack.c.b16 %v780, %v772
      %v877 = vpack.c.b16 %v789, %v781
      %v878 = vpack.c.b16 %v790, %v782
      %v879 = vpack.c.b16 %v791, %v783
      %v880 = vpack.c.b16 %v792, %v784
      %v881 = vpack.c.b16 %v793, %v785
      %v882 = vpack.c.b16 %v794, %v786
      %v883 = vpack.c.b16 %v795, %v787
      %v884 = vpack.c.b16 %v796, %v788
      %v885 = vpack.c.b16 %v805, %v797
      %v886 = vpack.c.b16 %v806, %v798
      %v887 = vpack.c.b16 %v807, %v799
      %v888 = vpack.c.b16 %v808, %v800
      %v889 = vpack.c.b16 %v809, %v801
      %v890 = vpack.c.b16 %v810, %v802
      %v891 = vpack.c.b16 %v811, %v803
      %v892 = vpack.c.b16 %v812, %v804
      %v893 = vpack.c.b16 %v821, %v813
      %v894 = vpack.c.b16 %v822, %v814
      %v895 = vpack.c.b16 %v823, %v815
      %v896 = vpack.c.b16 %v824, %v816
      %v897 = vpack.c.b16 %v825, %v817
      %v898 = vpack.c.b16 %v826, %v818
      %v899 = vpack.c.b16 %v827, %v819
      %v900 = vpack.c.b16 %v828, %v820
      %v901 = vpack.c.b16 %v837, %v829
      %v902 = vpack.c.b16 %v838, %v830
      %v903 = vpack.c.b16 %v839, %v831
      %v904 = vpack.c.b16 %v840, %v832
      %v905 = vpack.c.b16 %v841, %v833
      %v906 = vpack.c.b16 %v842, %v834
      %v907 = vpack.c.b16 %v843, %v835
      %v908 = vpack.c.b16 %v844, %v836
      %973 = vmatpush.bf16.msra.mxu0 %v901
      %974 = vmatpush.bf16.msra.mxu0 %v893
      %975 = vmatpush.bf16.msra.mxu0 %v885
      %976 = vmatpush.bf16.msra.mxu0 %v877
      %977 = vmatpush.bf16.msra.mxu0 %v869
      %978 = vmatpush.bf16.msra.mxu0 %v861
      %979 = vmatpush.bf16.msra.mxu0 %v853
      %980 = vmatpush.bf16.msra.mxu0 %v845
      %981 = vmatmul.bf16.gmra.mxu0 %v563
      %v982 = vpop.f32.mrf.mxu0
      %v983 = vadd.f32 %v637, %v982
      %v984 = vpop.f32.mrf.mxu0
      %v985 = vadd.f32 %v637, %v984
      %986 = vmatmul.bf16.gmra.mxu0 %v564
      %v987 = vpop.f32.mrf.mxu0
      %v988 = vadd.f32 %v637, %v987
      %v989 = vpop.f32.mrf.mxu0
      %v990 = vadd.f32 %v637, %v989
      %991 = vmatmul.bf16.gmra.mxu0 %v565
      %v992 = vpop.f32.mrf.mxu0
      %v993 = vadd.f32 %v637, %v992
      %v994 = vpop.f32.mrf.mxu0
      %v995 = vadd.f32 %v637, %v994
      %996 = vmatmul.bf16.gmra.mxu0 %v566
      %v997 = vpop.f32.mrf.mxu0
      %v998 = vadd.f32 %v637, %v997
      %v999 = vpop.f32.mrf.mxu0
      %v1000 = vadd.f32 %v637, %v999
      %1001 = vmatmul.bf16.gmra.mxu0 %v567
      %v1002 = vpop.f32.mrf.mxu0
      %v1003 = vadd.f32 %v637, %v1002
      %v1004 = vpop.f32.mrf.mxu0
      %v1005 = vadd.f32 %v637, %v1004
      %1006 = vmatmul.bf16.gmra.mxu0 %v568
      %v1007 = vpop.f32.mrf.mxu0
      %v1008 = vadd.f32 %v637, %v1007
      %v1009 = vpop.f32.mrf.mxu0
      %v1010 = vadd.f32 %v637, %v1009
      %1011 = vmatmul.bf16.gmra.mxu0 %v569
      %v1012 = vpop.f32.mrf.mxu0
      %v1013 = vadd.f32 %v637, %v1012
      %v1014 = vpop.f32.mrf.mxu0
      %v1015 = vadd.f32 %v637, %v1014
      %1016 = vmatmul.bf16.gmra.mxu0 %v570
      %v1017 = vpop.f32.mrf.mxu0
      %v1018 = vadd.f32 %v637, %v1017
      %v1019 = vpop.f32.mrf.mxu0
      %v1020 = vadd.f32 %v637, %v1019
      %1021 = vdwg.mxu0
      %1022 = vmatpush.bf16.msra.mxu0 %v902
      %1023 = vmatpush.bf16.msra.mxu0 %v894
      %1024 = vmatpush.bf16.msra.mxu0 %v886
      %1025 = vmatpush.bf16.msra.mxu0 %v878
      %1026 = vmatpush.bf16.msra.mxu0 %v870
      %1027 = vmatpush.bf16.msra.mxu0 %v862
      %1028 = vmatpush.bf16.msra.mxu0 %v854
      %1029 = vmatpush.bf16.msra.mxu0 %v846
      %1030 = vmatmul.bf16.gmra.mxu0 %v563
      %v1031 = vpop.f32.mrf.mxu0
      %v1032 = vadd.f32 %v638, %v1031
      %v1033 = vpop.f32.mrf.mxu0
      %v1034 = vadd.f32 %v638, %v1033
      %1035 = vmatmul.bf16.gmra.mxu0 %v564
      %v1036 = vpop.f32.mrf.mxu0
      %v1037 = vadd.f32 %v638, %v1036
      %v1038 = vpop.f32.mrf.mxu0
      %v1039 = vadd.f32 %v638, %v1038
      %1040 = vmatmul.bf16.gmra.mxu0 %v565
      %v1041 = vpop.f32.mrf.mxu0
      %v1042 = vadd.f32 %v638, %v1041
      %v1043 = vpop.f32.mrf.mxu0
      %v1044 = vadd.f32 %v638, %v1043
      %1045 = vmatmul.bf16.gmra.mxu0 %v566
      %v1046 = vpop.f32.mrf.mxu0
      %v1047 = vadd.f32 %v638, %v1046
      %v1048 = vpop.f32.mrf.mxu0
      %v1049 = vadd.f32 %v638, %v1048
      %1050 = vmatmul.bf16.gmra.mxu0 %v567
      %v1051 = vpop.f32.mrf.mxu0
      %v1052 = vadd.f32 %v638, %v1051
      %v1053 = vpop.f32.mrf.mxu0
      %v1054 = vadd.f32 %v638, %v1053
      %1055 = vmatmul.bf16.gmra.mxu0 %v568
      %v1056 = vpop.f32.mrf.mxu0
      %v1057 = vadd.f32 %v638, %v1056
      %v1058 = vpop.f32.mrf.mxu0
      %v1059 = vadd.f32 %v638, %v1058
      %1060 = vmatmul.bf16.gmra.mxu0 %v569
      %v1061 = vpop.f32.mrf.mxu0
      %v1062 = vadd.f32 %v638, %v1061
      %v1063 = vpop.f32.mrf.mxu0
      %v1064 = vadd.f32 %v638, %v1063
      %1065 = vmatmul.bf16.gmra.mxu0 %v570
      %v1066 = vpop.f32.mrf.mxu0
      %v1067 = vadd.f32 %v638, %v1066
      %v1068 = vpop.f32.mrf.mxu0
      %v1069 = vadd.f32 %v638, %v1068
      %1070 = vdwg.mxu0
      %1071 = vmatpush.bf16.msra.mxu0 %v903
      %1072 = vmatpush.bf16.msra.mxu0 %v895
      %1073 = vmatpush.bf16.msra.mxu0 %v887
      %1074 = vmatpush.bf16.msra.mxu0 %v879
      %1075 = vmatpush.bf16.msra.mxu0 %v871
      %1076 = vmatpush.bf16.msra.mxu0 %v863
      %1077 = vmatpush.bf16.msra.mxu0 %v855
      %1078 = vmatpush.bf16.msra.mxu0 %v847
      %1079 = vmatmul.bf16.gmra.mxu0 %v563
      %v1080 = vpop.f32.mrf.mxu0
      %v1081 = vadd.f32 %v639, %v1080
      %v1082 = vpop.f32.mrf.mxu0
      %v1083 = vadd.f32 %v639, %v1082
      %1084 = vmatmul.bf16.gmra.mxu0 %v564
      %v1085 = vpop.f32.mrf.mxu0
      %v1086 = vadd.f32 %v639, %v1085
      %v1087 = vpop.f32.mrf.mxu0
      %v1088 = vadd.f32 %v639, %v1087
      %1089 = vmatmul.bf16.gmra.mxu0 %v565
      %v1090 = vpop.f32.mrf.mxu0
      %v1091 = vadd.f32 %v639, %v1090
      %v1092 = vpop.f32.mrf.mxu0
      %v1093 = vadd.f32 %v639, %v1092
      %1094 = vmatmul.bf16.gmra.mxu0 %v566
      %v1095 = vpop.f32.mrf.mxu0
      %v1096 = vadd.f32 %v639, %v1095
      %v1097 = vpop.f32.mrf.mxu0
      %v1098 = vadd.f32 %v639, %v1097
      %1099 = vmatmul.bf16.gmra.mxu0 %v567
      %v1100 = vpop.f32.mrf.mxu0
      %v1101 = vadd.f32 %v639, %v1100
      %v1102 = vpop.f32.mrf.mxu0
      %v1103 = vadd.f32 %v639, %v1102
      %1104 = vmatmul.bf16.gmra.mxu0 %v568
      %v1105 = vpop.f32.mrf.mxu0
      %v1106 = vadd.f32 %v639, %v1105
      %v1107 = vpop.f32.mrf.mxu0
      %v1108 = vadd.f32 %v639, %v1107
      %1109 = vmatmul.bf16.gmra.mxu0 %v569
      %v1110 = vpop.f32.mrf.mxu0
      %v1111 = vadd.f32 %v639, %v1110
      %v1112 = vpop.f32.mrf.mxu0
      %v1113 = vadd.f32 %v639, %v1112
      %1114 = vmatmul.bf16.gmra.mxu0 %v570
      %v1115 = vpop.f32.mrf.mxu0
      %v1116 = vadd.f32 %v639, %v1115
      %v1117 = vpop.f32.mrf.mxu0
      %v1118 = vadd.f32 %v639, %v1117
      %1119 = vdwg.mxu0
      %1120 = vmatpush.bf16.msra.mxu0 %v904
      %1121 = vmatpush.bf16.msra.mxu0 %v896
      %1122 = vmatpush.bf16.msra.mxu0 %v888
      %1123 = vmatpush.bf16.msra.mxu0 %v880
      %1124 = vmatpush.bf16.msra.mxu0 %v872
      %1125 = vmatpush.bf16.msra.mxu0 %v864
      %1126 = vmatpush.bf16.msra.mxu0 %v856
      %1127 = vmatpush.bf16.msra.mxu0 %v848
      %1128 = vmatmul.bf16.gmra.mxu0 %v563
      %v1129 = vpop.f32.mrf.mxu0
      %v1130 = vadd.f32 %v640, %v1129
      %v1131 = vpop.f32.mrf.mxu0
      %v1132 = vadd.f32 %v640, %v1131
      %1133 = vmatmul.bf16.gmra.mxu0 %v564
      %v1134 = vpop.f32.mrf.mxu0
      %v1135 = vadd.f32 %v640, %v1134
      %v1136 = vpop.f32.mrf.mxu0
      %v1137 = vadd.f32 %v640, %v1136
      %1138 = vmatmul.bf16.gmra.mxu0 %v565
      %v1139 = vpop.f32.mrf.mxu0
      %v1140 = vadd.f32 %v640, %v1139
      %v1141 = vpop.f32.mrf.mxu0
      %v1142 = vadd.f32 %v640, %v1141
      %1143 = vmatmul.bf16.gmra.mxu0 %v566
      %v1144 = vpop.f32.mrf.mxu0
      %v1145 = vadd.f32 %v640, %v1144
      %v1146 = vpop.f32.mrf.mxu0
      %v1147 = vadd.f32 %v640, %v1146
      %1148 = vmatmul.bf16.gmra.mxu0 %v567
      %v1149 = vpop.f32.mrf.mxu0
      %v1150 = vadd.f32 %v640, %v1149
      %v1151 = vpop.f32.mrf.mxu0
      %v1152 = vadd.f32 %v640, %v1151
      %1153 = vmatmul.bf16.gmra.mxu0 %v568
      %v1154 = vpop.f32.mrf.mxu0
      %v1155 = vadd.f32 %v640, %v1154
      %v1156 = vpop.f32.mrf.mxu0
      %v1157 = vadd.f32 %v640, %v1156
      %1158 = vmatmul.bf16.gmra.mxu0 %v569
      %v1159 = vpop.f32.mrf.mxu0
      %v1160 = vadd.f32 %v640, %v1159
      %v1161 = vpop.f32.mrf.mxu0
      %v1162 = vadd.f32 %v640, %v1161
      %1163 = vmatmul.bf16.gmra.mxu0 %v570
      %v1164 = vpop.f32.mrf.mxu0
      %v1165 = vadd.f32 %v640, %v1164
      %v1166 = vpop.f32.mrf.mxu0
      %v1167 = vadd.f32 %v640, %v1166
      %1168 = vdwg.mxu0
      %1169 = vmatpush.bf16.msra.mxu0 %v905
      %1170 = vmatpush.bf16.msra.mxu0 %v897
      %1171 = vmatpush.bf16.msra.mxu0 %v889
      %1172 = vmatpush.bf16.msra.mxu0 %v881
      %1173 = vmatpush.bf16.msra.mxu0 %v873
      %1174 = vmatpush.bf16.msra.mxu0 %v865
      %1175 = vmatpush.bf16.msra.mxu0 %v857
      %1176 = vmatpush.bf16.msra.mxu0 %v849
      %1177 = vmatmul.bf16.gmra.mxu0 %v563
      %v1178 = vpop.f32.mrf.mxu0
      %v1179 = vadd.f32 %v641, %v1178
      %v1180 = vpop.f32.mrf.mxu0
      %v1181 = vadd.f32 %v641, %v1180
      %1182 = vmatmul.bf16.gmra.mxu0 %v564
      %v1183 = vpop.f32.mrf.mxu0
      %v1184 = vadd.f32 %v641, %v1183
      %v1185 = vpop.f32.mrf.mxu0
      %v1186 = vadd.f32 %v641, %v1185
      %1187 = vmatmul.bf16.gmra.mxu0 %v565
      %v1188 = vpop.f32.mrf.mxu0
      %v1189 = vadd.f32 %v641, %v1188
      %v1190 = vpop.f32.mrf.mxu0
      %v1191 = vadd.f32 %v641, %v1190
      %1192 = vmatmul.bf16.gmra.mxu0 %v566
      %v1193 = vpop.f32.mrf.mxu0
      %v1194 = vadd.f32 %v641, %v1193
      %v1195 = vpop.f32.mrf.mxu0
      %v1196 = vadd.f32 %v641, %v1195
      %1197 = vmatmul.bf16.gmra.mxu0 %v567
      %v1198 = vpop.f32.mrf.mxu0
      %v1199 = vadd.f32 %v641, %v1198
      %v1200 = vpop.f32.mrf.mxu0
      %v1201 = vadd.f32 %v641, %v1200
      %1202 = vmatmul.bf16.gmra.mxu0 %v568
      %v1203 = vpop.f32.mrf.mxu0
      %v1204 = vadd.f32 %v641, %v1203
      %v1205 = vpop.f32.mrf.mxu0
      %v1206 = vadd.f32 %v641, %v1205
      %1207 = vmatmul.bf16.gmra.mxu0 %v569
      %v1208 = vpop.f32.mrf.mxu0
      %v1209 = vadd.f32 %v641, %v1208
      %v1210 = vpop.f32.mrf.mxu0
      %v1211 = vadd.f32 %v641, %v1210
      %1212 = vmatmul.bf16.gmra.mxu0 %v570
      %v1213 = vpop.f32.mrf.mxu0
      %v1214 = vadd.f32 %v641, %v1213
      %v1215 = vpop.f32.mrf.mxu0
      %v1216 = vadd.f32 %v641, %v1215
      %1217 = vdwg.mxu0
      %1218 = vmatpush.bf16.msra.mxu0 %v906
      %1219 = vmatpush.bf16.msra.mxu0 %v898
      %1220 = vmatpush.bf16.msra.mxu0 %v890
      %1221 = vmatpush.bf16.msra.mxu0 %v882
      %1222 = vmatpush.bf16.msra.mxu0 %v874
      %1223 = vmatpush.bf16.msra.mxu0 %v866
      %1224 = vmatpush.bf16.msra.mxu0 %v858
      %1225 = vmatpush.bf16.msra.mxu0 %v850
      %1226 = vmatmul.bf16.gmra.mxu0 %v563
      %v1227 = vpop.f32.mrf.mxu0
      %v1228 = vadd.f32 %v642, %v1227
      %v1229 = vpop.f32.mrf.mxu0
      %v1230 = vadd.f32 %v642, %v1229
      %1231 = vmatmul.bf16.gmra.mxu0 %v564
      %v1232 = vpop.f32.mrf.mxu0
      %v1233 = vadd.f32 %v642, %v1232
      %v1234 = vpop.f32.mrf.mxu0
      %v1235 = vadd.f32 %v642, %v1234
      %1236 = vmatmul.bf16.gmra.mxu0 %v565
      %v1237 = vpop.f32.mrf.mxu0
      %v1238 = vadd.f32 %v642, %v1237
      %v1239 = vpop.f32.mrf.mxu0
      %v1240 = vadd.f32 %v642, %v1239
      %1241 = vmatmul.bf16.gmra.mxu0 %v566
      %v1242 = vpop.f32.mrf.mxu0
      %v1243 = vadd.f32 %v642, %v1242
      %v1244 = vpop.f32.mrf.mxu0
      %v1245 = vadd.f32 %v642, %v1244
      %1246 = vmatmul.bf16.gmra.mxu0 %v567
      %v1247 = vpop.f32.mrf.mxu0
      %v1248 = vadd.f32 %v642, %v1247
      %v1249 = vpop.f32.mrf.mxu0
      %v1250 = vadd.f32 %v642, %v1249
      %1251 = vmatmul.bf16.gmra.mxu0 %v568
      %v1252 = vpop.f32.mrf.mxu0
      %v1253 = vadd.f32 %v642, %v1252
      %v1254 = vpop.f32.mrf.mxu0
      %v1255 = vadd.f32 %v642, %v1254
      %1256 = vmatmul.bf16.gmra.mxu0 %v569
      %v1257 = vpop.f32.mrf.mxu0
      %v1258 = vadd.f32 %v642, %v1257
      %v1259 = vpop.f32.mrf.mxu0
      %v1260 = vadd.f32 %v642, %v1259
      %1261 = vmatmul.bf16.gmra.mxu0 %v570
      %v1262 = vpop.f32.mrf.mxu0
      %v1263 = vadd.f32 %v642, %v1262
      %v1264 = vpop.f32.mrf.mxu0
      %v1265 = vadd.f32 %v642, %v1264
      %1266 = vdwg.mxu0
      %1267 = vmatpush.bf16.msra.mxu0 %v907
      %1268 = vmatpush.bf16.msra.mxu0 %v899
      %1269 = vmatpush.bf16.msra.mxu0 %v891
      %1270 = vmatpush.bf16.msra.mxu0 %v883
      %1271 = vmatpush.bf16.msra.mxu0 %v875
      %1272 = vmatpush.bf16.msra.mxu0 %v867
      %1273 = vmatpush.bf16.msra.mxu0 %v859
      %1274 = vmatpush.bf16.msra.mxu0 %v851
      %1275 = vmatmul.bf16.gmra.mxu0 %v563
      %v1276 = vpop.f32.mrf.mxu0
      %v1277 = vadd.f32 %v643, %v1276
      %v1278 = vpop.f32.mrf.mxu0
      %v1279 = vadd.f32 %v643, %v1278
      %1280 = vmatmul.bf16.gmra.mxu0 %v564
      %v1281 = vpop.f32.mrf.mxu0
      %v1282 = vadd.f32 %v643, %v1281
      %v1283 = vpop.f32.mrf.mxu0
      %v1284 = vadd.f32 %v643, %v1283
      %1285 = vmatmul.bf16.gmra.mxu0 %v565
      %v1286 = vpop.f32.mrf.mxu0
      %v1287 = vadd.f32 %v643, %v1286
      %v1288 = vpop.f32.mrf.mxu0
      %v1289 = vadd.f32 %v643, %v1288
      %1290 = vmatmul.bf16.gmra.mxu0 %v566
      %v1291 = vpop.f32.mrf.mxu0
      %v1292 = vadd.f32 %v643, %v1291
      %v1293 = vpop.f32.mrf.mxu0
      %v1294 = vadd.f32 %v643, %v1293
      %1295 = vmatmul.bf16.gmra.mxu0 %v567
      %v1296 = vpop.f32.mrf.mxu0
      %v1297 = vadd.f32 %v643, %v1296
      %v1298 = vpop.f32.mrf.mxu0
      %v1299 = vadd.f32 %v643, %v1298
      %1300 = vmatmul.bf16.gmra.mxu0 %v568
      %v1301 = vpop.f32.mrf.mxu0
      %v1302 = vadd.f32 %v643, %v1301
      %v1303 = vpop.f32.mrf.mxu0
      %v1304 = vadd.f32 %v643, %v1303
      %1305 = vmatmul.bf16.gmra.mxu0 %v569
      %v1306 = vpop.f32.mrf.mxu0
      %v1307 = vadd.f32 %v643, %v1306
      %v1308 = vpop.f32.mrf.mxu0
      %v1309 = vadd.f32 %v643, %v1308
      %1310 = vmatmul.bf16.gmra.mxu0 %v570
      %v1311 = vpop.f32.mrf.mxu0
      %v1312 = vadd.f32 %v643, %v1311
      %v1313 = vpop.f32.mrf.mxu0
      %v1314 = vadd.f32 %v643, %v1313
      %1315 = vdwg.mxu0
      %1316 = vmatpush.bf16.msra.mxu0 %v908
      %1317 = vmatpush.bf16.msra.mxu0 %v900
      %1318 = vmatpush.bf16.msra.mxu0 %v892
      %1319 = vmatpush.bf16.msra.mxu0 %v884
      %1320 = vmatpush.bf16.msra.mxu0 %v876
      %1321 = vmatpush.bf16.msra.mxu0 %v868
      %1322 = vmatpush.bf16.msra.mxu0 %v860
      %1323 = vmatpush.bf16.msra.mxu0 %v852
      %1324 = vmatmul.bf16.gmra.mxu0 %v563
      %v1325 = vpop.f32.mrf.mxu0
      %v1326 = vadd.f32 %v644, %v1325
      %v1327 = vpop.f32.mrf.mxu0
      %v1328 = vadd.f32 %v644, %v1327
      %1329 = vmatmul.bf16.gmra.mxu0 %v564
      %v1330 = vpop.f32.mrf.mxu0
      %v1331 = vadd.f32 %v644, %v1330
      %v1332 = vpop.f32.mrf.mxu0
      %v1333 = vadd.f32 %v644, %v1332
      %1334 = vmatmul.bf16.gmra.mxu0 %v565
      %v1335 = vpop.f32.mrf.mxu0
      %v1336 = vadd.f32 %v644, %v1335
      %v1337 = vpop.f32.mrf.mxu0
      %v1338 = vadd.f32 %v644, %v1337
      %1339 = vmatmul.bf16.gmra.mxu0 %v566
      %v1340 = vpop.f32.mrf.mxu0
      %v1341 = vadd.f32 %v644, %v1340
      %v1342 = vpop.f32.mrf.mxu0
      %v1343 = vadd.f32 %v644, %v1342
      %1344 = vmatmul.bf16.gmra.mxu0 %v567
      %v1345 = vpop.f32.mrf.mxu0
      %v1346 = vadd.f32 %v644, %v1345
      %v1347 = vpop.f32.mrf.mxu0
      %v1348 = vadd.f32 %v644, %v1347
      %1349 = vmatmul.bf16.gmra.mxu0 %v568
      %v1350 = vpop.f32.mrf.mxu0
      %v1351 = vadd.f32 %v644, %v1350
      %v1352 = vpop.f32.mrf.mxu0
      %v1353 = vadd.f32 %v644, %v1352
      %1354 = vmatmul.bf16.gmra.mxu0 %v569
      %v1355 = vpop.f32.mrf.mxu0
      %v1356 = vadd.f32 %v644, %v1355
      %v1357 = vpop.f32.mrf.mxu0
      %v1358 = vadd.f32 %v644, %v1357
      %1359 = vmatmul.bf16.gmra.mxu0 %v570
      %v1360 = vpop.f32.mrf.mxu0
      %v1361 = vadd.f32 %v644, %v1360
      %v1362 = vpop.f32.mrf.mxu0
      %v1363 = vadd.f32 %v644, %v1362
      %1364 = vdwg.mxu0
      %v1365 = vmax.f32 %v983, 0.0
      %v1366 = vmax.f32 %v1032, 0.0
      %v1367 = vmax.f32 %v1081, 0.0
      %v1368 = vmax.f32 %v1130, 0.0
      %v1369 = vmax.f32 %v1179, 0.0
      %v1370 = vmax.f32 %v1228, 0.0
      %v1371 = vmax.f32 %v1277, 0.0
      %v1372 = vmax.f32 %v1326, 0.0
      %v1373 = vmax.f32 %v985, 0.0
      %v1374 = vmax.f32 %v1034, 0.0
      %v1375 = vmax.f32 %v1083, 0.0
      %v1376 = vmax.f32 %v1132, 0.0
      %v1377 = vmax.f32 %v1181, 0.0
      %v1378 = vmax.f32 %v1230, 0.0
      %v1379 = vmax.f32 %v1279, 0.0
      %v1380 = vmax.f32 %v1328, 0.0
      %v1381 = vmax.f32 %v988, 0.0
      %v1382 = vmax.f32 %v1037, 0.0
      %v1383 = vmax.f32 %v1086, 0.0
      %v1384 = vmax.f32 %v1135, 0.0
      %v1385 = vmax.f32 %v1184, 0.0
      %v1386 = vmax.f32 %v1233, 0.0
      %v1387 = vmax.f32 %v1282, 0.0
      %v1388 = vmax.f32 %v1331, 0.0
      %v1389 = vmax.f32 %v990, 0.0
      %v1390 = vmax.f32 %v1039, 0.0
      %v1391 = vmax.f32 %v1088, 0.0
      %v1392 = vmax.f32 %v1137, 0.0
      %v1393 = vmax.f32 %v1186, 0.0
      %v1394 = vmax.f32 %v1235, 0.0
      %v1395 = vmax.f32 %v1284, 0.0
      %v1396 = vmax.f32 %v1333, 0.0
      %v1397 = vmax.f32 %v993, 0.0
      %v1398 = vmax.f32 %v1042, 0.0
      %v1399 = vmax.f32 %v1091, 0.0
      %v1400 = vmax.f32 %v1140, 0.0
      %v1401 = vmax.f32 %v1189, 0.0
      %v1402 = vmax.f32 %v1238, 0.0
      %v1403 = vmax.f32 %v1287, 0.0
      %v1404 = vmax.f32 %v1336, 0.0
      %v1405 = vmax.f32 %v995, 0.0
      %v1406 = vmax.f32 %v1044, 0.0
      %v1407 = vmax.f32 %v1093, 0.0
      %v1408 = vmax.f32 %v1142, 0.0
      %v1409 = vmax.f32 %v1191, 0.0
      %v1410 = vmax.f32 %v1240, 0.0
      %v1411 = vmax.f32 %v1289, 0.0
      %v1412 = vmax.f32 %v1338, 0.0
      %v1413 = vmax.f32 %v998, 0.0
      %v1414 = vmax.f32 %v1047, 0.0
      %v1415 = vmax.f32 %v1096, 0.0
      %v1416 = vmax.f32 %v1145, 0.0
      %v1417 = vmax.f32 %v1194, 0.0
      %v1418 = vmax.f32 %v1243, 0.0
      %v1419 = vmax.f32 %v1292, 0.0
      %v1420 = vmax.f32 %v1341, 0.0
      %v1421 = vmax.f32 %v1000, 0.0
      %v1422 = vmax.f32 %v1049, 0.0
      %v1423 = vmax.f32 %v1098, 0.0
      %v1424 = vmax.f32 %v1147, 0.0
      %v1425 = vmax.f32 %v1196, 0.0
      %v1426 = vmax.f32 %v1245, 0.0
      %v1427 = vmax.f32 %v1294, 0.0
      %v1428 = vmax.f32 %v1343, 0.0
      %v1429 = vmax.f32 %v1003, 0.0
      %v1430 = vmax.f32 %v1052, 0.0
      %v1431 = vmax.f32 %v1101, 0.0
      %v1432 = vmax.f32 %v1150, 0.0
      %v1433 = vmax.f32 %v1199, 0.0
      %v1434 = vmax.f32 %v1248, 0.0
      %v1435 = vmax.f32 %v1297, 0.0
      %v1436 = vmax.f32 %v1346, 0.0
      %v1437 = vmax.f32 %v1005, 0.0
      %v1438 = vmax.f32 %v1054, 0.0
      %v1439 = vmax.f32 %v1103, 0.0
      %v1440 = vmax.f32 %v1152, 0.0
      %v1441 = vmax.f32 %v1201, 0.0
      %v1442 = vmax.f32 %v1250, 0.0
      %v1443 = vmax.f32 %v1299, 0.0
      %v1444 = vmax.f32 %v1348, 0.0
      %v1445 = vmax.f32 %v1008, 0.0
      %v1446 = vmax.f32 %v1057, 0.0
      %v1447 = vmax.f32 %v1106, 0.0
      %v1448 = vmax.f32 %v1155, 0.0
      %v1449 = vmax.f32 %v1204, 0.0
      %v1450 = vmax.f32 %v1253, 0.0
      %v1451 = vmax.f32 %v1302, 0.0
      %v1452 = vmax.f32 %v1351, 0.0
      %v1453 = vmax.f32 %v1010, 0.0
      %v1454 = vmax.f32 %v1059, 0.0
      %v1455 = vmax.f32 %v1108, 0.0
      %v1456 = vmax.f32 %v1157, 0.0
      %v1457 = vmax.f32 %v1206, 0.0
      %v1458 = vmax.f32 %v1255, 0.0
      %v1459 = vmax.f32 %v1304, 0.0
      %v1460 = vmax.f32 %v1353, 0.0
      %v1461 = vmax.f32 %v1013, 0.0
      %v1462 = vmax.f32 %v1062, 0.0
      %v1463 = vmax.f32 %v1111, 0.0
      %v1464 = vmax.f32 %v1160, 0.0
      %v1465 = vmax.f32 %v1209, 0.0
      %v1466 = vmax.f32 %v1258, 0.0
      %v1467 = vmax.f32 %v1307, 0.0
      %v1468 = vmax.f32 %v1356, 0.0
      %v1469 = vmax.f32 %v1015, 0.0
      %v1470 = vmax.f32 %v1064, 0.0
      %v1471 = vmax.f32 %v1113, 0.0
      %v1472 = vmax.f32 %v1162, 0.0
      %v1473 = vmax.f32 %v1211, 0.0
      %v1474 = vmax.f32 %v1260, 0.0
      %v1475 = vmax.f32 %v1309, 0.0
      %v1476 = vmax.f32 %v1358, 0.0
      %v1477 = vmax.f32 %v1018, 0.0
      %v1478 = vmax.f32 %v1067, 0.0
      %v1479 = vmax.f32 %v1116, 0.0
      %v1480 = vmax.f32 %v1165, 0.0
      %v1481 = vmax.f32 %v1214, 0.0
      %v1482 = vmax.f32 %v1263, 0.0
      %v1483 = vmax.f32 %v1312, 0.0
      %v1484 = vmax.f32 %v1361, 0.0
      %v1485 = vmax.f32 %v1020, 0.0
      %v1486 = vmax.f32 %v1069, 0.0
      %v1487 = vmax.f32 %v1118, 0.0
      %v1488 = vmax.f32 %v1167, 0.0
      %v1489 = vmax.f32 %v1216, 0.0
      %v1490 = vmax.f32 %v1265, 0.0
      %v1491 = vmax.f32 %v1314, 0.0
      %v1492 = vmax.f32 %v1363, 0.0
      %v1493 = vmax.f32 %v1365, %v1373
      %v1494 = vmax.f32 %v1493, %v1381
      %v1495 = vmax.f32 %v1494, %v1389
      %v1496 = vmax.f32 %v1495, %v1397
      %v1497 = vmax.f32 %v1496, %v1405
      %v1498 = vmax.f32 %v1497, %v1413
      %v1499 = vmax.f32 %v1498, %v1421
      %v1500 = vmax.f32 %v1499, %v1429
      %v1501 = vmax.f32 %v1500, %v1437
      %v1502 = vmax.f32 %v1501, %v1445
      %v1503 = vmax.f32 %v1502, %v1453
      %v1504 = vmax.f32 %v1503, %v1461
      %v1505 = vmax.f32 %v1504, %v1469
      %v1506 = vmax.f32 %v1505, %v1477
      %v1507 = vmax.f32 %v1506, %v1485
      %v1508 = vrot.slane %v1507, 4
      %v1509 = vmax.f32 %v1507, %v1508
      %v1510 = vrot.slane %v1509, 2
      %v1511 = vmax.f32 %v1509, %v1510
      %v1512 = vrot.slane %v1511, 1
      %v1513 = vmax.f32 %v1511, %v1512
      %v1514 = vmax.f32 %v1366, %v1374
      %v1515 = vmax.f32 %v1514, %v1382
      %v1516 = vmax.f32 %v1515, %v1390
      %v1517 = vmax.f32 %v1516, %v1398
      %v1518 = vmax.f32 %v1517, %v1406
      %v1519 = vmax.f32 %v1518, %v1414
      %v1520 = vmax.f32 %v1519, %v1422
      %v1521 = vmax.f32 %v1520, %v1430
      %v1522 = vmax.f32 %v1521, %v1438
      %v1523 = vmax.f32 %v1522, %v1446
      %v1524 = vmax.f32 %v1523, %v1454
      %v1525 = vmax.f32 %v1524, %v1462
      %v1526 = vmax.f32 %v1525, %v1470
      %v1527 = vmax.f32 %v1526, %v1478
      %v1528 = vmax.f32 %v1527, %v1486
      %v1529 = vrot.slane %v1528, 4
      %v1530 = vmax.f32 %v1528, %v1529
      %v1531 = vrot.slane %v1530, 2
      %v1532 = vmax.f32 %v1530, %v1531
      %v1533 = vrot.slane %v1532, 1
      %v1534 = vmax.f32 %v1532, %v1533
      %v1535 = vmax.f32 %v1367, %v1375
      %v1536 = vmax.f32 %v1535, %v1383
      %v1537 = vmax.f32 %v1536, %v1391
      %v1538 = vmax.f32 %v1537, %v1399
      %v1539 = vmax.f32 %v1538, %v1407
      %v1540 = vmax.f32 %v1539, %v1415
      %v1541 = vmax.f32 %v1540, %v1423
      %v1542 = vmax.f32 %v1541, %v1431
      %v1543 = vmax.f32 %v1542, %v1439
      %v1544 = vmax.f32 %v1543, %v1447
      %v1545 = vmax.f32 %v1544, %v1455
      %v1546 = vmax.f32 %v1545, %v1463
      %v1547 = vmax.f32 %v1546, %v1471
      %v1548 = vmax.f32 %v1547, %v1479
      %v1549 = vmax.f32 %v1548, %v1487
      %v1550 = vrot.slane %v1549, 4
      %v1551 = vmax.f32 %v1549, %v1550
      %v1552 = vrot.slane %v1551, 2
      %v1553 = vmax.f32 %v1551, %v1552
      %v1554 = vrot.slane %v1553, 1
      %v1555 = vmax.f32 %v1553, %v1554
      %v1556 = vmax.f32 %v1368, %v1376
      %v1557 = vmax.f32 %v1556, %v1384
      %v1558 = vmax.f32 %v1557, %v1392
      %v1559 = vmax.f32 %v1558, %v1400
      %v1560 = vmax.f32 %v1559, %v1408
      %v1561 = vmax.f32 %v1560, %v1416
      %v1562 = vmax.f32 %v1561, %v1424
      %v1563 = vmax.f32 %v1562, %v1432
      %v1564 = vmax.f32 %v1563, %v1440
      %v1565 = vmax.f32 %v1564, %v1448
      %v1566 = vmax.f32 %v1565, %v1456
      %v1567 = vmax.f32 %v1566, %v1464
      %v1568 = vmax.f32 %v1567, %v1472
      %v1569 = vmax.f32 %v1568, %v1480
      %v1570 = vmax.f32 %v1569, %v1488
      %v1571 = vrot.slane %v1570, 4
      %v1572 = vmax.f32 %v1570, %v1571
      %v1573 = vrot.slane %v1572, 2
      %v1574 = vmax.f32 %v1572, %v1573
      %v1575 = vrot.slane %v1574, 1
      %v1576 = vmax.f32 %v1574, %v1575
      %v1577 = vmax.f32 %v1369, %v1377
      %v1578 = vmax.f32 %v1577, %v1385
      %v1579 = vmax.f32 %v1578, %v1393
      %v1580 = vmax.f32 %v1579, %v1401
      %v1581 = vmax.f32 %v1580, %v1409
      %v1582 = vmax.f32 %v1581, %v1417
      %v1583 = vmax.f32 %v1582, %v1425
      %v1584 = vmax.f32 %v1583, %v1433
      %v1585 = vmax.f32 %v1584, %v1441
      %v1586 = vmax.f32 %v1585, %v1449
      %v1587 = vmax.f32 %v1586, %v1457
      %v1588 = vmax.f32 %v1587, %v1465
      %v1589 = vmax.f32 %v1588, %v1473
      %v1590 = vmax.f32 %v1589, %v1481
      %v1591 = vmax.f32 %v1590, %v1489
      %v1592 = vrot.slane %v1591, 4
      %v1593 = vmax.f32 %v1591, %v1592
      %v1594 = vrot.slane %v1593, 2
      %v1595 = vmax.f32 %v1593, %v1594
      %v1596 = vrot.slane %v1595, 1
      %v1597 = vmax.f32 %v1595, %v1596
      %v1598 = vmax.f32 %v1370, %v1378
      %v1599 = vmax.f32 %v1598, %v1386
      %v1600 = vmax.f32 %v1599, %v1394
      %v1601 = vmax.f32 %v1600, %v1402
      %v1602 = vmax.f32 %v1601, %v1410
      %v1603 = vmax.f32 %v1602, %v1418
      %v1604 = vmax.f32 %v1603, %v1426
      %v1605 = vmax.f32 %v1604, %v1434
      %v1606 = vmax.f32 %v1605, %v1442
      %v1607 = vmax.f32 %v1606, %v1450
      %v1608 = vmax.f32 %v1607, %v1458
      %v1609 = vmax.f32 %v1608, %v1466
      %v1610 = vmax.f32 %v1609, %v1474
      %v1611 = vmax.f32 %v1610, %v1482
      %v1612 = vmax.f32 %v1611, %v1490
      %v1613 = vrot.slane %v1612, 4
      %v1614 = vmax.f32 %v1612, %v1613
      %v1615 = vrot.slane %v1614, 2
      %v1616 = vmax.f32 %v1614, %v1615
      %v1617 = vrot.slane %v1616, 1
      %v1618 = vmax.f32 %v1616, %v1617
      %v1619 = vmax.f32 %v1371, %v1379
      %v1620 = vmax.f32 %v1619, %v1387
      %v1621 = vmax.f32 %v1620, %v1395
      %v1622 = vmax.f32 %v1621, %v1403
      %v1623 = vmax.f32 %v1622, %v1411
      %v1624 = vmax.f32 %v1623, %v1419
      %v1625 = vmax.f32 %v1624, %v1427
      %v1626 = vmax.f32 %v1625, %v1435
      %v1627 = vmax.f32 %v1626, %v1443
      %v1628 = vmax.f32 %v1627, %v1451
      %v1629 = vmax.f32 %v1628, %v1459
      %v1630 = vmax.f32 %v1629, %v1467
      %v1631 = vmax.f32 %v1630, %v1475
      %v1632 = vmax.f32 %v1631, %v1483
      %v1633 = vmax.f32 %v1632, %v1491
      %v1634 = vrot.slane %v1633, 4
      %v1635 = vmax.f32 %v1633, %v1634
      %v1636 = vrot.slane %v1635, 2
      %v1637 = vmax.f32 %v1635, %v1636
      %v1638 = vrot.slane %v1637, 1
      %v1639 = vmax.f32 %v1637, %v1638
      %v1640 = vmax.f32 %v1372, %v1380
      %v1641 = vmax.f32 %v1640, %v1388
      %v1642 = vmax.f32 %v1641, %v1396
      %v1643 = vmax.f32 %v1642, %v1404
      %v1644 = vmax.f32 %v1643, %v1412
      %v1645 = vmax.f32 %v1644, %v1420
      %v1646 = vmax.f32 %v1645, %v1428
      %v1647 = vmax.f32 %v1646, %v1436
      %v1648 = vmax.f32 %v1647, %v1444
      %v1649 = vmax.f32 %v1648, %v1452
      %v1650 = vmax.f32 %v1649, %v1460
      %v1651 = vmax.f32 %v1650, %v1468
      %v1652 = vmax.f32 %v1651, %v1476
      %v1653 = vmax.f32 %v1652, %v1484
      %v1654 = vmax.f32 %v1653, %v1492
      %v1655 = vrot.slane %v1654, 4
      %v1656 = vmax.f32 %v1654, %v1655
      %v1657 = vrot.slane %v1656, 2
      %v1658 = vmax.f32 %v1656, %v1657
      %v1659 = vrot.slane %v1658, 1
      %v1660 = vmax.f32 %v1658, %v1659
      %p1661 = scmp.eq.s32.totalorder %s23, 0
      // Predicated region
      $region49: #{_lambda_.2} parent=47 // pred_check
        %p1662 = pneg %p1661
      $region50: #{_lambda_.2} parent=47 // pred_check_branch
        %1664 = sbr.rel (%p1662) target = $region52
      $region51: #{_lambda_.2} parent=47 // pred_region
        %v1673 = vrot.slane %v1534, 7
        %v1674 = vrot.slane %v1555, 6
        %v1675 = vrot.slane %v1576, 5
        %v1676 = vrot.slane %v1597, 4
        %v1677 = vrot.slane %v1618, 3
        %v1678 = vrot.slane %v1639, 2
        %v1679 = vrot.slane %v1660, 1
        %vm1680 = vcmask 1040384
        %v1681 = vsel %vm1680, %v1513, %v1673
        %vm1682 = vcmask 1042434
        %v1683 = vsel %vm1682, %v1674, %v1675
        %vm1684 = vcmask 1041408
        %v1685 = vsel %vm1684, %v1681, %v1683
        %vm1686 = vcmask 1044484
        %v1687 = vsel %vm1686, %v1676, %v1677
        %vm1688 = vcmask 1046534
        %v1689 = vsel %vm1688, %v1678, %v1679
        %vm1690 = vcmask 1045508
        %v1691 = vsel %vm1690, %v1687, %v1689
        %v1692 = vsel %vm360, %v1685, %v1691
        %1694 = vst [vmem:[%s304] sm:$0xff] %v1692
      $region52: #{_lambda_.2} parent=47 // pred_fallthru
        _
      %p1695 = scmp.gt.s32.totalorder %s23, 0
      // Predicated region
      $region53: #{_lambda_.2} parent=47 // pred_check
        %p1696 = pneg %p1695
      $region54: #{_lambda_.2} parent=47 // pred_check_branch
        %1698 = sbr.rel (%p1696) target = $region56
      $region55: #{_lambda_.2} parent=47 // pred_region
        %v1699 = vld [vmem:[%s304] sm:$0xff]
        %v1708 = vrot.slane %v1534, 7
        %v1709 = vrot.slane %v1555, 6
        %v1710 = vrot.slane %v1576, 5
        %v1711 = vrot.slane %v1597, 4
        %v1712 = vrot.slane %v1618, 3
        %v1713 = vrot.slane %v1639, 2
        %v1714 = vrot.slane %v1660, 1
        %vm1715 = vcmask 1040384
        %v1716 = vsel %vm1715, %v1513, %v1708
        %vm1717 = vcmask 1042434
        %v1718 = vsel %vm1717, %v1709, %v1710
        %vm1719 = vcmask 1041408
        %v1720 = vsel %vm1719, %v1716, %v1718
        %vm1721 = vcmask 1044484
        %v1722 = vsel %vm1721, %v1711, %v1712
        %vm1723 = vcmask 1046534
        %v1724 = vsel %vm1723, %v1713, %v1714
        %vm1725 = vcmask 1045508
        %v1726 = vsel %vm1725, %v1722, %v1724
        %v1727 = vsel %vm360, %v1720, %v1726
        %v1729 = vmax.f32 %v1699, %v1727
        %1730 = vst [vmem:[%s304] sm:$0xff] %v1729
      $region56: #{_lambda_.2} parent=47 // pred_fallthru
        _
      %p1731 = scmp.lt.s32.totalorder %s22, 1
      %s1732 = scalar_select %p1731, %s22, 1
      %s1733 = smul.addr %s1732, 8
      %s1734 = scalar_lea.vmem %s7, %s1733
      // Predicated region
      $region57: #{_lambda_.2} parent=47 // pred_check
        %p1735 = pneg %p202
      $region58: #{_lambda_.2} parent=47 // pred_check_branch
        %1737 = sbr.rel (%p1735) target = $region60
      $region59: #{_lambda_.2} parent=47 // pred_region
        _
      $region60: #{_lambda_.2} parent=47 // pred_fallthru
        _
    $region48: #{_lambda_.2} parent=5 // pred_fallthru
      _
    %p1738 = scmp.le.s32.totalorder 2, %s13
    // Predicated region
    $region61: #{_lambda_.2} parent=5 // pred_check
      %p1739 = pneg %p1738
    $region62: #{_lambda_.2} parent=5 // pred_check_branch
      %1741 = sbr.rel (%p1739) target = $region64
    $region63: #{_lambda_.2} parent=5 // pred_region
      %s1742 = ssub.s32 %s13, 2
      // Predicated region
      $region65: #{_lambda_.2} parent=63 // pred_check
        %p1743 = pneg %p208
      $region66: #{_lambda_.2} parent=63 // pred_check_branch
        %1745 = sbr.rel (%p1743) target = $region68
      $region67: #{_lambda_.2} parent=63 // pred_region
        %p1746 = scmp.lt.s32.totalorder %s24, 1
        %s1747 = scalar_select %p1746, %s24, 1
        %s1748 = smul.addr %s1747, 8
        %s1749 = scalar_lea.vmem %s7, %s1748
      $region68: #{_lambda_.2} parent=63 // pred_fallthru
        _
    $region64: #{_lambda_.2} parent=5 // pred_fallthru
      _
  $region6: #{_lambda_.2} parent=0 // loop_footer
    %s17 = sadd.s32 1, %s13
  $region7: #{_lambda_.2} parent=0 // loop_footer_branch
    %12 = sbr.rel target = $region3
  $region8: #{_lambda_.2} parent=0 // loop_exit
    _

// kernel: _lambda_.3
$region0: #{_lambda_.3}
  #allocation0 [shape = 'u32[]', space=smem, size = 0x4, offset = 0x4, fixed_abs, tag = 'smem constant byte address 0x4 - core index']
  #allocation1 [shape = 'u32[72,128]{1,0:T(1,128)}', space=vmem, size = 0x9000, scoped, tag = 'internal scratch']
  %s0 = inlined_call_operand.vmem [shape: f32[2,128,8], index: 0, kind: input, shape index: {}]
  %s1 = inlined_call_operand.vmem [shape: bf16[2,8,64], index: 1, kind: input, shape index: {}]
  %s2 = inlined_call_operand.vmem [shape: f32[1,64], index: 2, kind: input, shape index: {}]
  %s3 = inlined_call_operand.vmem [shape: bf16[64,64], index: 3, kind: input, shape index: {}]
  %s4 = inlined_call_operand.vmem [shape: f32[1,64], index: 4, kind: input, shape index: {}]
  %s5 = inlined_call_operand.vmem [shape: bf16[64,64], index: 5, kind: input, shape index: {}]
  %s6 = inlined_call_operand.vmem [shape: f32[1,64], index: 6, kind: input, shape index: {}]
  %s7 = inlined_call_operand.vmem [shape: bf16[64,128], index: 7, kind: input, shape index: {}]
  %s8 = inlined_call_operand.vmem [shape: f32[1,128], index: 8, kind: input, shape index: {}]
  %s9 = inlined_call_operand.vmem [shape: bf16[128,1024], index: 9, kind: input, shape index: {}]
  %s10 = inlined_call_operand.vmem [shape: f32[1,1024], index: 10, kind: input, shape index: {}]
  %s11 = inlined_call_operand.vmem [shape: f32[2,1,1024], index: 11, kind: output, shape index: {}]
  %s12 = sld [smem:[#allocation0]]
  $region85: #{_lambda_.3} parent=0
    _
  %s14 = ssub.s32 1, %s12
  %s15 = scalar_select 0, %s14, %s12
  loop: start=0, step=1, limit=4
  $region2: #{_lambda_.3} parent=0 // loop_pre_header
    _
  $region3: #{_lambda_.3} parent=0 // loop_header
    %s17 = sphi 0, %s21
    %p18 = scmp.ge.s32.totalorder %s17, 4
    %s24 = sphi 0, %s36
    %s25 = sphi 0, %s32
    %s26 = sphi 0, %s24
    %s27 = sphi 0, %s25
    %s28 = sphi 0, %s26
    %s29 = sphi 0, %s27
    %s41 = sphi 0, %s43
    %s44 = sphi 0, %s41
    %s45 = sphi 0, %s44
    %s61 = sphi 0, %s45
    %s67 = sphi 0, %s69
    %s70 = sphi 0, %s67
    %s71 = sphi 0, %s70
    %s87 = sphi 0, %s71
    %s91 = sphi 0, %s91
    %s93 = sphi 0, %s91
    %s94 = sphi 0, %s93
    %s108 = sphi 0, %s94
    %s112 = sphi 0, %s112
    %s114 = sphi 0, %s112
    %s115 = sphi 0, %s114
    %s129 = sphi 0, %s115
    %s133 = sphi 0, %s133
    %s135 = sphi 0, %s133
    %s136 = sphi 0, %s135
    %s150 = sphi 0, %s136
    %s154 = sphi 0, %s154
    %s156 = sphi 0, %s154
    %s157 = sphi 0, %s156
    %s171 = sphi 0, %s157
    %s175 = sphi 0, %s175
    %s177 = sphi 0, %s175
    %s178 = sphi 0, %s177
    %s192 = sphi 0, %s178
    %s196 = sphi 0, %s196
    %s198 = sphi 0, %s196
    %s199 = sphi 0, %s198
    %s213 = sphi 0, %s199
    %s217 = sphi 0, %s217
    %s219 = sphi 0, %s217
    %s220 = sphi 0, %s219
    %s234 = sphi 0, %s220
    %s238 = sphi 0, %s238
    %s240 = sphi 0, %s238
    %s241 = sphi 0, %s240
    %s255 = sphi 0, %s241
    %s259 = sphi 0, %s259
    %s261 = sphi 0, %s259
    %s262 = sphi 0, %s261
    %s276 = sphi 0, %s262
    %s282 = sphi 0, %s284
    %s285 = sphi 0, %s282
    %s286 = sphi 0, %s285
    %s302 = sphi 0, %s286
  $region4: #{_lambda_.3} parent=0 // loop_header_branch
    %20 = sbr.rel (%p18) target = $region8
  $region5: #{_lambda_.3} parent=0 // loop_body
    %s22 = ssub.s32 %s17, 1
    %s23 = ssub.s32 %s17, 2
    %s30 = sadd.s32 1, %s25
    %p31 = scmp.ge.s32.totalorder %s30, 1
    %s32 = scalar_select %p31, 0, %s30
    %s33 = sadd.s32 1, %s24
    %s34 = scalar_select %p31, %s33, %s24
    %p35 = scmp.ge.s32.totalorder %s34, 2
    %s36 = scalar_select %p35, 0, %s34
    %s37 = ssub.s32 %s24, %s36
    %s38 = ssub.s32 %s25, %s32
    %s39 = sor.u32 %s37, %s38
    %p40 = scmp.eq.s32.totalorder %s39, 0
    %s42 = sadd.s32 %s41, 1
    %s43 = scalar_select %p40, %s41, %s42
    %p46 = pneg %p40
    %p47 = scmp.eq.s32.totalorder %s17, 1
    %p48 = por %p46, %p47
    %p49 = scmp.ne.s32.totalorder %s41, %s44
    %p50 = scmp.eq.s32.totalorder %s17, 0
    %p51 = por %p49, %p50
    %p52 = scmp.ne.s32.totalorder %s41, %s44
    %p53 = scmp.eq.s32.totalorder %s22, 1
    %p54 = por %p52, %p53
    %p55 = scmp.ne.s32.totalorder %s44, %s45
    %p56 = scmp.eq.s32.totalorder %s22, 0
    %p57 = por %p55, %p56
    %p58 = scmp.ne.s32.totalorder %s44, %s45
    %p59 = scmp.eq.s32.totalorder %s23, 1
    %p60 = por %p58, %p59
    %p62 = scmp.ne.s32.totalorder %s45, %s61
    %p63 = scmp.eq.s32.totalorder %s23, 0
    %p64 = por %p62, %p63
    %s65 = ssub.s32 %s24, %s36
    %p66 = scmp.eq.s32.totalorder %s65, 0
    %s68 = sadd.s32 %s67, 1
    %s69 = scalar_select %p66, %s67, %s68
    %p72 = pneg %p66
    %p73 = scmp.eq.s32.totalorder %s17, 1
    %p74 = por %p72, %p73
    %p75 = scmp.ne.s32.totalorder %s67, %s70
    %p76 = scmp.eq.s32.totalorder %s17, 0
    %p77 = por %p75, %p76
    %p78 = scmp.ne.s32.totalorder %s67, %s70
    %p79 = scmp.eq.s32.totalorder %s22, 1
    %p80 = por %p78, %p79
    %p81 = scmp.ne.s32.totalorder %s70, %s71
    %p82 = scmp.eq.s32.totalorder %s22, 0
    %p83 = por %p81, %p82
    %p84 = scmp.ne.s32.totalorder %s70, %s71
    %p85 = scmp.eq.s32.totalorder %s23, 1
    %p86 = por %p84, %p85
    %p88 = scmp.ne.s32.totalorder %s71, %s87
    %p89 = scmp.eq.s32.totalorder %s23, 0
    %p90 = por %p88, %p89
    %s92 = sadd.s32 %s91, 1
    %p95 = scmp.eq.s32.totalorder %s17, 1
    %p96 = scmp.ne.s32.totalorder %s91, %s93
    %p97 = scmp.eq.s32.totalorder %s17, 0
    %p98 = por %p96, %p97
    %p99 = scmp.ne.s32.totalorder %s91, %s93
    %p100 = scmp.eq.s32.totalorder %s22, 1
    %p101 = por %p99, %p100
    %p102 = scmp.ne.s32.totalorder %s93, %s94
    %p103 = scmp.eq.s32.totalorder %s22, 0
    %p104 = por %p102, %p103
    %p105 = scmp.ne.s32.totalorder %s93, %s94
    %p106 = scmp.eq.s32.totalorder %s23, 1
    %p107 = por %p105, %p106
    %p109 = scmp.ne.s32.totalorder %s94, %s108
    %p110 = scmp.eq.s32.totalorder %s23, 0
    %p111 = por %p109, %p110
    %s113 = sadd.s32 %s112, 1
    %p116 = scmp.eq.s32.totalorder %s17, 1
    %p117 = scmp.ne.s32.totalorder %s112, %s114
    %p118 = scmp.eq.s32.totalorder %s17, 0
    %p119 = por %p117, %p118
    %p120 = scmp.ne.s32.totalorder %s112, %s114
    %p121 = scmp.eq.s32.totalorder %s22, 1
    %p122 = por %p120, %p121
    %p123 = scmp.ne.s32.totalorder %s114, %s115
    %p124 = scmp.eq.s32.totalorder %s22, 0
    %p125 = por %p123, %p124
    %p126 = scmp.ne.s32.totalorder %s114, %s115
    %p127 = scmp.eq.s32.totalorder %s23, 1
    %p128 = por %p126, %p127
    %p130 = scmp.ne.s32.totalorder %s115, %s129
    %p131 = scmp.eq.s32.totalorder %s23, 0
    %p132 = por %p130, %p131
    %s134 = sadd.s32 %s133, 1
    %p137 = scmp.eq.s32.totalorder %s17, 1
    %p138 = scmp.ne.s32.totalorder %s133, %s135
    %p139 = scmp.eq.s32.totalorder %s17, 0
    %p140 = por %p138, %p139
    %p141 = scmp.ne.s32.totalorder %s133, %s135
    %p142 = scmp.eq.s32.totalorder %s22, 1
    %p143 = por %p141, %p142
    %p144 = scmp.ne.s32.totalorder %s135, %s136
    %p145 = scmp.eq.s32.totalorder %s22, 0
    %p146 = por %p144, %p145
    %p147 = scmp.ne.s32.totalorder %s135, %s136
    %p148 = scmp.eq.s32.totalorder %s23, 1
    %p149 = por %p147, %p148
    %p151 = scmp.ne.s32.totalorder %s136, %s150
    %p152 = scmp.eq.s32.totalorder %s23, 0
    %p153 = por %p151, %p152
    %s155 = sadd.s32 %s154, 1
    %p158 = scmp.eq.s32.totalorder %s17, 1
    %p159 = scmp.ne.s32.totalorder %s154, %s156
    %p160 = scmp.eq.s32.totalorder %s17, 0
    %p161 = por %p159, %p160
    %p162 = scmp.ne.s32.totalorder %s154, %s156
    %p163 = scmp.eq.s32.totalorder %s22, 1
    %p164 = por %p162, %p163
    %p165 = scmp.ne.s32.totalorder %s156, %s157
    %p166 = scmp.eq.s32.totalorder %s22, 0
    %p167 = por %p165, %p166
    %p168 = scmp.ne.s32.totalorder %s156, %s157
    %p169 = scmp.eq.s32.totalorder %s23, 1
    %p170 = por %p168, %p169
    %p172 = scmp.ne.s32.totalorder %s157, %s171
    %p173 = scmp.eq.s32.totalorder %s23, 0
    %p174 = por %p172, %p173
    %s176 = sadd.s32 %s175, 1
    %p179 = scmp.eq.s32.totalorder %s17, 1
    %p180 = scmp.ne.s32.totalorder %s175, %s177
    %p181 = scmp.eq.s32.totalorder %s17, 0
    %p182 = por %p180, %p181
    %p183 = scmp.ne.s32.totalorder %s175, %s177
    %p184 = scmp.eq.s32.totalorder %s22, 1
    %p185 = por %p183, %p184
    %p186 = scmp.ne.s32.totalorder %s177, %s178
    %p187 = scmp.eq.s32.totalorder %s22, 0
    %p188 = por %p186, %p187
    %p189 = scmp.ne.s32.totalorder %s177, %s178
    %p190 = scmp.eq.s32.totalorder %s23, 1
    %p191 = por %p189, %p190
    %p193 = scmp.ne.s32.totalorder %s178, %s192
    %p194 = scmp.eq.s32.totalorder %s23, 0
    %p195 = por %p193, %p194
    %s197 = sadd.s32 %s196, 1
    %p200 = scmp.eq.s32.totalorder %s17, 1
    %p201 = scmp.ne.s32.totalorder %s196, %s198
    %p202 = scmp.eq.s32.totalorder %s17, 0
    %p203 = por %p201, %p202
    %p204 = scmp.ne.s32.totalorder %s196, %s198
    %p205 = scmp.eq.s32.totalorder %s22, 1
    %p206 = por %p204, %p205
    %p207 = scmp.ne.s32.totalorder %s198, %s199
    %p208 = scmp.eq.s32.totalorder %s22, 0
    %p209 = por %p207, %p208
    %p210 = scmp.ne.s32.totalorder %s198, %s199
    %p211 = scmp.eq.s32.totalorder %s23, 1
    %p212 = por %p210, %p211
    %p214 = scmp.ne.s32.totalorder %s199, %s213
    %p215 = scmp.eq.s32.totalorder %s23, 0
    %p216 = por %p214, %p215
    %s218 = sadd.s32 %s217, 1
    %p221 = scmp.eq.s32.totalorder %s17, 1
    %p222 = scmp.ne.s32.totalorder %s217, %s219
    %p223 = scmp.eq.s32.totalorder %s17, 0
    %p224 = por %p222, %p223
    %p225 = scmp.ne.s32.totalorder %s217, %s219
    %p226 = scmp.eq.s32.totalorder %s22, 1
    %p227 = por %p225, %p226
    %p228 = scmp.ne.s32.totalorder %s219, %s220
    %p229 = scmp.eq.s32.totalorder %s22, 0
    %p230 = por %p228, %p229
    %p231 = scmp.ne.s32.totalorder %s219, %s220
    %p232 = scmp.eq.s32.totalorder %s23, 1
    %p233 = por %p231, %p232
    %p235 = scmp.ne.s32.totalorder %s220, %s234
    %p236 = scmp.eq.s32.totalorder %s23, 0
    %p237 = por %p235, %p236
    %s239 = sadd.s32 %s238, 1
    %p242 = scmp.eq.s32.totalorder %s17, 1
    %p243 = scmp.ne.s32.totalorder %s238, %s240
    %p244 = scmp.eq.s32.totalorder %s17, 0
    %p245 = por %p243, %p244
    %p246 = scmp.ne.s32.totalorder %s238, %s240
    %p247 = scmp.eq.s32.totalorder %s22, 1
    %p248 = por %p246, %p247
    %p249 = scmp.ne.s32.totalorder %s240, %s241
    %p250 = scmp.eq.s32.totalorder %s22, 0
    %p251 = por %p249, %p250
    %p252 = scmp.ne.s32.totalorder %s240, %s241
    %p253 = scmp.eq.s32.totalorder %s23, 1
    %p254 = por %p252, %p253
    %p256 = scmp.ne.s32.totalorder %s241, %s255
    %p257 = scmp.eq.s32.totalorder %s23, 0
    %p258 = por %p256, %p257
    %s260 = sadd.s32 %s259, 1
    %p263 = scmp.eq.s32.totalorder %s17, 1
    %p264 = scmp.ne.s32.totalorder %s259, %s261
    %p265 = scmp.eq.s32.totalorder %s17, 0
    %p266 = por %p264, %p265
    %p267 = scmp.ne.s32.totalorder %s259, %s261
    %p268 = scmp.eq.s32.totalorder %s22, 1
    %p269 = por %p267, %p268
    %p270 = scmp.ne.s32.totalorder %s261, %s262
    %p271 = scmp.eq.s32.totalorder %s22, 0
    %p272 = por %p270, %p271
    %p273 = scmp.ne.s32.totalorder %s261, %s262
    %p274 = scmp.eq.s32.totalorder %s23, 1
    %p275 = por %p273, %p274
    %p277 = scmp.ne.s32.totalorder %s262, %s276
    %p278 = scmp.eq.s32.totalorder %s23, 0
    %p279 = por %p277, %p278
    %s280 = ssub.s32 %s24, %s36
    %p281 = scmp.eq.s32.totalorder %s280, 0
    %s283 = sadd.s32 %s282, 1
    %s284 = scalar_select %p281, %s282, %s283
    %p287 = pneg %p281
    %p288 = scmp.eq.s32.totalorder %s17, 1
    %p289 = por %p287, %p288
    %p290 = scmp.ne.s32.totalorder %s282, %s285
    %p291 = scmp.eq.s32.totalorder %s17, 0
    %p292 = por %p290, %p291
    %p293 = scmp.ne.s32.totalorder %s282, %s285
    %p294 = scmp.eq.s32.totalorder %s22, 1
    %p295 = por %p293, %p294
    %p296 = scmp.ne.s32.totalorder %s285, %s286
    %p297 = scmp.eq.s32.totalorder %s22, 0
    %p298 = por %p296, %p297
    %p299 = scmp.ne.s32.totalorder %s285, %s286
    %p300 = scmp.eq.s32.totalorder %s23, 1
    %p301 = por %p299, %p300
    %p303 = scmp.ne.s32.totalorder %s286, %s302
    %p304 = scmp.eq.s32.totalorder %s23, 0
    %p305 = por %p303, %p304
    %p306 = scmp.le.s32.totalorder 1, %s17
    %p307 = scmp.lt.s32.totalorder %s17, 3
    %p308 = pnand %p306, %p307
    %p309 = pneg %p308
    // Predicated region
    $region9: #{_lambda_.3} parent=5 // pred_check
      _
    $region10: #{_lambda_.3} parent=5 // pred_check_branch
      %311 = sbr.rel (%p308) target = $region12
    $region11: #{_lambda_.3} parent=5 // pred_region
      %s312 = ssub.s32 %s17, 1
      // Predicated region
      $region13: #{_lambda_.3} parent=11 // pred_check
        %p313 = pneg %p104
      $region14: #{_lambda_.3} parent=11 // pred_check_branch
        %315 = sbr.rel (%p313) target = $region16
      $region15: #{_lambda_.3} parent=11 // pred_region
        _
      $region16: #{_lambda_.3} parent=11 // pred_fallthru
        _
      // Predicated region
      $region17: #{_lambda_.3} parent=11 // pred_check
        %p316 = pneg %p125
      $region18: #{_lambda_.3} parent=11 // pred_check_branch
        %318 = sbr.rel (%p316) target = $region20
      $region19: #{_lambda_.3} parent=11 // pred_region
        _
      $region20: #{_lambda_.3} parent=11 // pred_fallthru
        _
      // Predicated region
      $region21: #{_lambda_.3} parent=11 // pred_check
        %p319 = pneg %p146
      $region22: #{_lambda_.3} parent=11 // pred_check_branch
        %321 = sbr.rel (%p319) target = $region24
      $region23: #{_lambda_.3} parent=11 // pred_region
        _
      $region24: #{_lambda_.3} parent=11 // pred_fallthru
        _
      // Predicated region
      $region25: #{_lambda_.3} parent=11 // pred_check
        %p322 = pneg %p167
      $region26: #{_lambda_.3} parent=11 // pred_check_branch
        %324 = sbr.rel (%p322) target = $region28
      $region27: #{_lambda_.3} parent=11 // pred_region
        _
      $region28: #{_lambda_.3} parent=11 // pred_fallthru
        _
      // Predicated region
      $region29: #{_lambda_.3} parent=11 // pred_check
        %p325 = pneg %p188
      $region30: #{_lambda_.3} parent=11 // pred_check_branch
        %327 = sbr.rel (%p325) target = $region32
      $region31: #{_lambda_.3} parent=11 // pred_region
        _
      $region32: #{_lambda_.3} parent=11 // pred_fallthru
        _
      // Predicated region
      $region33: #{_lambda_.3} parent=11 // pred_check
        %p328 = pneg %p209
      $region34: #{_lambda_.3} parent=11 // pred_check_branch
        %330 = sbr.rel (%p328) target = $region36
      $region35: #{_lambda_.3} parent=11 // pred_region
        _
      $region36: #{_lambda_.3} parent=11 // pred_fallthru
        _
      // Predicated region
      $region37: #{_lambda_.3} parent=11 // pred_check
        %p331 = pneg %p230
      $region38: #{_lambda_.3} parent=11 // pred_check_branch
        %333 = sbr.rel (%p331) target = $region40
      $region39: #{_lambda_.3} parent=11 // pred_region
        _
      $region40: #{_lambda_.3} parent=11 // pred_fallthru
        _
      // Predicated region
      $region41: #{_lambda_.3} parent=11 // pred_check
        %p334 = pneg %p251
      $region42: #{_lambda_.3} parent=11 // pred_check_branch
        %336 = sbr.rel (%p334) target = $region44
      $region43: #{_lambda_.3} parent=11 // pred_region
        _
      $region44: #{_lambda_.3} parent=11 // pred_fallthru
        _
      // Predicated region
      $region45: #{_lambda_.3} parent=11 // pred_check
        %p337 = pneg %p272
      $region46: #{_lambda_.3} parent=11 // pred_check_branch
        %339 = sbr.rel (%p337) target = $region48
      $region47: #{_lambda_.3} parent=11 // pred_region
        _
      $region48: #{_lambda_.3} parent=11 // pred_fallthru
        _
    $region12: #{_lambda_.3} parent=5 // pred_fallthru
      _
    %p340 = scmp.lt.s32.totalorder %s17, 2
    // Predicated region
    $region49: #{_lambda_.3} parent=5 // pred_check
      %p341 = pneg %p340
    $region50: #{_lambda_.3} parent=5 // pred_check_branch
      %343 = sbr.rel (%p341) target = $region52
    $region51: #{_lambda_.3} parent=5 // pred_region
      // Predicated region
      $region53: #{_lambda_.3} parent=51 // pred_check
        %p344 = pneg %p51
      $region54: #{_lambda_.3} parent=51 // pred_check_branch
        %346 = sbr.rel (%p344) target = $region56
      $region55: #{_lambda_.3} parent=51 // pred_region
        %s347 = smul.u32 16, %s25
        %p348 = scmp.lt.s32.totalorder %s24, 1
        %s349 = scalar_select %p348, %s24, 1
        %p350 = scmp.lt.s32.totalorder %s347, 15
        %s351 = scalar_select %p350, %s347, 15
        %s352 = smul.addr %s349, 16
        %s353 = sadd.s32 %s351, %s352
        %s354 = smul.addr %s353, 8
        %s355 = scalar_lea.vmem %s0, %s354
        %s356 = smul.u32 16, %s25
      $region56: #{_lambda_.3} parent=51 // pred_fallthru
        _
      // Predicated region
      $region57: #{_lambda_.3} parent=51 // pred_check
        %p357 = pneg %p77
      $region58: #{_lambda_.3} parent=51 // pred_check_branch
        %359 = sbr.rel (%p357) target = $region60
      $region59: #{_lambda_.3} parent=51 // pred_region
        %p360 = scmp.lt.s32.totalorder %s24, 1
        %s361 = scalar_select %p360, %s24, 1
        %s362 = smul.addr %s361, 4
        %s363 = scalar_lea.vmem %s1, %s362
      $region60: #{_lambda_.3} parent=51 // pred_fallthru
        _
    $region52: #{_lambda_.3} parent=5 // pred_fallthru
      _
    %p364 = scmp.le.s32.totalorder 1, %s17
    %p365 = scmp.lt.s32.totalorder %s17, 3
    %p366 = pnand %p364, %p365
    %p367 = pneg %p366
    // Predicated region
    $region61: #{_lambda_.3} parent=5 // pred_check
      _
    $region62: #{_lambda_.3} parent=5 // pred_check_branch
      %369 = sbr.rel (%p366) target = $region64
    $region63: #{_lambda_.3} parent=5 // pred_region
      %s370 = ssub.s32 %s17, 1
      %s371 = smul.u32 16, %s27
      %p372 = scmp.lt.s32.totalorder %s26, 1
      %s373 = scalar_select %p372, %s26, 1
      %p374 = scmp.lt.s32.totalorder %s371, 15
      %s375 = scalar_select %p374, %s371, 15
      %s376 = smul.addr %s373, 16
      %s377 = sadd.s32 %s375, %s376
      %s378 = smul.addr %s377, 8
      %s379 = scalar_lea.vmem %s0, %s378
      %p380 = pneg %p57
      %p381 = pneg %p54
      %p382 = scmp.lt.s32.totalorder %s26, 1
      %s383 = scalar_select %p382, %s26, 1
      %s384 = smul.addr %s383, 4
      %s385 = scalar_lea.vmem %s1, %s384
      %p386 = pneg %p83
      %p387 = pneg %p80
      %p388 = pneg %p104
      %p389 = pneg %p101
      %p390 = pneg %p125
      %p391 = pneg %p122
      %p392 = pneg %p146
      %p393 = pneg %p143
      %p394 = pneg %p167
      %p395 = pneg %p164
      %p396 = pneg %p188
      %p397 = pneg %p185
      %p398 = pneg %p209
      %p399 = pneg %p206
      %p400 = pneg %p230
      %p401 = pneg %p227
      %p402 = pneg %p251
      %p403 = pneg %p248
      %p404 = pneg %p272
      %p405 = pneg %p269
      %p406 = pneg %p298
      %p407 = pneg %p295
      %p408 = scmp.lt.s32.totalorder %s26, 1
      %s409 = scalar_select %p408, %s26, 1
      %s410 = smul.addr %s409, 8
      %s411 = scalar_lea.vmem %s11, %s410
      %s412 = smul.u32 16, %s27
      %p413 = scmp.lt.s32.totalorder %s26, 1
      %s414 = scalar_select %p413, %s26, 1
      %p415 = scmp.lt.s32.totalorder %s412, 15
      %s416 = scalar_select %p415, %s412, 15
      %s417 = smul.addr %s414, 16
      %s418 = sadd.s32 %s416, %s417
      %s419 = smul.addr %s418, 8
      %s420 = scalar_lea.vmem %s0, %s419
      %s421 = smul.u32 16, %s27
      %p422 = scmp.lt.s32.totalorder %s26, 1
      %s423 = scalar_select %p422, %s26, 1
      %s424 = smul.addr %s423, 4
      %s425 = scalar_lea.vmem %s1, %s424
      %p426 = scmp.lt.s32.totalorder %s26, 1
      %s427 = scalar_select %p426, %s26, 1
      %s428 = smul.addr %s427, 8
      %s429 = scalar_lea.vmem %s11, %s428
      %v431 = vld [vmem:[%s420] sm:$0xff]
      %v432 = vld [vmem:[%s420 + $0x8] sm:$0xff]
      %v433 = vld [vmem:[%s420 + $0x10] sm:$0xff]
      %v434 = vld [vmem:[%s420 + $0x18] sm:$0xff]
      %v435 = vld [vmem:[%s420 + $0x20] sm:$0xff]
      %v436 = vld [vmem:[%s420 + $0x28] sm:$0xff]
      %v437 = vld [vmem:[%s420 + $0x30] sm:$0xff]
      %v438 = vld [vmem:[%s420 + $0x38] sm:$0xff]
      %v439 = vld [vmem:[%s420 + $0x40] sm:$0xff]
      %v440 = vld [vmem:[%s420 + $0x48] sm:$0xff]
      %v441 = vld [vmem:[%s420 + $0x50] sm:$0xff]
      %v442 = vld [vmem:[%s420 + $0x58] sm:$0xff]
      %v443 = vld [vmem:[%s420 + $0x60] sm:$0xff]
      %v444 = vld [vmem:[%s420 + $0x68] sm:$0xff]
      %v445 = vld [vmem:[%s420 + $0x70] sm:$0xff]
      %v446 = vld [vmem:[%s420 + $0x78] sm:$0xff]
      %v447 = vld [vmem:[%s425] sm:$0xf]
      %v448 = vpack.c.bf16 %v432, %v431
      %v449 = vpack.c.bf16 %v434, %v433
      %v450 = vpack.c.bf16 %v436, %v435
      %v451 = vpack.c.bf16 %v438, %v437
      %v452 = vpack.c.bf16 %v440, %v439
      %v453 = vpack.c.bf16 %v442, %v441
      %v454 = vpack.c.bf16 %v444, %v443
      %v455 = vpack.c.bf16 %v446, %v445
      %v456 = vld [vmem:[%s2] sm:$0x1]
      %v458 = vperm.slane %v456, 0
      %vm460 = vcmask 64512
      %v462 = vsel %vm460, %v448, 0
      %v465 = vsel %vm460, %v449, 0
      %v468 = vsel %vm460, %v450, 0
      %v471 = vsel %vm460, %v451, 0
      %v474 = vsel %vm460, %v452, 0
      %v477 = vsel %vm460, %v453, 0
      %v480 = vsel %vm460, %v454, 0
      %v483 = vsel %vm460, %v455, 0
      %vm485 = vcmask 1043456
      %v487 = vsel %vm485, %v447, 0
      %489 = vmatpush.bf16.msra.mxu0 0
      %490 = vmatpush.bf16.msra.mxu0 0
      %491 = vmatpush.bf16.msra.mxu0 0
      %492 = vmatpush.bf16.msra.mxu0 0
      %493 = vmatpush.bf16.msra.mxu0 0
      %494 = vmatpush.bf16.msra.mxu0 0
      %495 = vmatpush.bf16.msra.mxu0 0
      %496 = vmatpush.bf16.msra.mxu0 %v487
      %497 = vmatmul.bf16.gmra.mxu0 %v462
      %v498 = vpop.f32.mrf.mxu0
      %v499 = vadd.f32 %v458, %v498
      %v500 = vpop.f32.mrf.mxu0
      %v501 = vadd.f32 %v458, %v500
      %502 = vmatmul.bf16.gmra.mxu0 %v465
      %v503 = vpop.f32.mrf.mxu0
      %v504 = vadd.f32 %v458, %v503
      %v505 = vpop.f32.mrf.mxu0
      %v506 = vadd.f32 %v458, %v505
      %507 = vmatmul.bf16.gmra.mxu0 %v468
      %v508 = vpop.f32.mrf.mxu0
      %v509 = vadd.f32 %v458, %v508
      %v510 = vpop.f32.mrf.mxu0
      %v511 = vadd.f32 %v458, %v510
      %512 = vmatmul.bf16.gmra.mxu0 %v471
      %v513 = vpop.f32.mrf.mxu0
      %v514 = vadd.f32 %v458, %v513
      %v515 = vpop.f32.mrf.mxu0
      %v516 = vadd.f32 %v458, %v515
      %517 = vmatmul.bf16.gmra.mxu0 %v474
      %v518 = vpop.f32.mrf.mxu0
      %v519 = vadd.f32 %v458, %v518
      %v520 = vpop.f32.mrf.mxu0
      %v521 = vadd.f32 %v458, %v520
      %522 = vmatmul.bf16.gmra.mxu0 %v477
      %v523 = vpop.f32.mrf.mxu0
      %v524 = vadd.f32 %v458, %v523
      %v525 = vpop.f32.mrf.mxu0
      %v526 = vadd.f32 %v458, %v525
      %527 = vmatmul.bf16.gmra.mxu0 %v480
      %v528 = vpop.f32.mrf.mxu0
      %v529 = vadd.f32 %v458, %v528
      %v530 = vpop.f32.mrf.mxu0
      %v531 = vadd.f32 %v458, %v530
      %532 = vmatmul.bf16.gmra.mxu0 %v483
      %v533 = vpop.f32.mrf.mxu0
      %v534 = vadd.f32 %v458, %v533
      %v535 = vpop.f32.mrf.mxu0
      %v536 = vadd.f32 %v458, %v535
      %537 = vdwg.mxu0
      %v538 = vmax.f32 %v499, 0.0
      %v539 = vmax.f32 %v501, 0.0
      %v540 = vmax.f32 %v504, 0.0
      %v541 = vmax.f32 %v506, 0.0
      %v542 = vmax.f32 %v509, 0.0
      %v543 = vmax.f32 %v511, 0.0
      %v544 = vmax.f32 %v514, 0.0
      %v545 = vmax.f32 %v516, 0.0
      %v546 = vmax.f32 %v519, 0.0
      %v547 = vmax.f32 %v521, 0.0
      %v548 = vmax.f32 %v524, 0.0
      %v549 = vmax.f32 %v526, 0.0
      %v550 = vmax.f32 %v529, 0.0
      %v551 = vmax.f32 %v531, 0.0
      %v552 = vmax.f32 %v534, 0.0
      %v553 = vmax.f32 %v536, 0.0
      %v554 = vpack.c.bf16 %v539, %v538
      %v555 = vpack.c.bf16 %v541, %v540
      %v556 = vpack.c.bf16 %v543, %v542
      %v557 = vpack.c.bf16 %v545, %v544
      %v558 = vpack.c.bf16 %v547, %v546
      %v559 = vpack.c.bf16 %v549, %v548
      %v560 = vpack.c.bf16 %v551, %v550
      %v561 = vpack.c.bf16 %v553, %v552
      %v562 = vld [vmem:[%s3] sm:$0xf]
      %v563 = vld [vmem:[%s3 + $0x4] sm:$0xf]
      %v564 = vld [vmem:[%s3 + $0x8] sm:$0xf]
      %v565 = vld [vmem:[%s3 + $0xc] sm:$0xf]
      %v566 = vld [vmem:[%s3 + $0x10] sm:$0xf]
      %v567 = vld [vmem:[%s3 + $0x14] sm:$0xf]
      %v568 = vld [vmem:[%s3 + $0x18] sm:$0xf]
      %v569 = vld [vmem:[%s3 + $0x1c] sm:$0xf]
      %v570 = vld [vmem:[%s4] sm:$0x1]
      %v572 = vperm.slane %v570, 0
      %v582 = vunpack.c.l.b16 %v562
      %v583 = vunpack.c.l.b16 %v563
      %v584 = vunpack.c.l.b16 %v564
      %v585 = vunpack.c.l.b16 %v565
      %v586 = vunpack.c.l.b16 %v566
      %v587 = vunpack.c.l.b16 %v567
      %v588 = vunpack.c.l.b16 %v568
      %v589 = vunpack.c.l.b16 %v569
      %v590 = vpack.c.b16 %v583, %v582
      %v591 = vpack.c.b16 %v585, %v584
      %v592 = vpack.c.b16 %v587, %v586
      %v593 = vpack.c.b16 %v589, %v588
      %vm598 = vcmask 523264
      %v600 = vsel %vm598, %v554, 0
      %v603 = vsel %vm598, %v555, 0
      %v606 = vsel %vm598, %v556, 0
      %v609 = vsel %vm598, %v557, 0
      %v612 = vsel %vm598, %v558, 0
      %v615 = vsel %vm598, %v559, 0
      %v618 = vsel %vm598, %v560, 0
      %v621 = vsel %vm598, %v561, 0
      %623 = vmatpush.bf16.msra.mxu0 0
      %624 = vmatpush.bf16.msra.mxu0 0
      %625 = vmatpush.bf16.msra.mxu0 0
      %626 = vmatpush.bf16.msra.mxu0 0
      %627 = vmatpush.bf16.msra.mxu0 %v593
      %628 = vmatpush.bf16.msra.mxu0 %v592
      %629 = vmatpush.bf16.msra.mxu0 %v591
      %630 = vmatpush.bf16.msra.mxu0 %v590
      %631 = vmatmul.bf16.gmra.mxu0 %v600
      %v632 = vpop.f32.mrf.mxu0
      %v633 = vadd.f32 %v572, %v632
      %v634 = vpop.f32.mrf.mxu0
      %v635 = vadd.f32 %v572, %v634
      %636 = vmatmul.bf16.gmra.mxu0 %v603
      %v637 = vpop.f32.mrf.mxu0
      %v638 = vadd.f32 %v572, %v637
      %v639 = vpop.f32.mrf.mxu0
      %v640 = vadd.f32 %v572, %v639
      %641 = vmatmul.bf16.gmra.mxu0 %v606
      %v642 = vpop.f32.mrf.mxu0
      %v643 = vadd.f32 %v572, %v642
      %v644 = vpop.f32.mrf.mxu0
      %v645 = vadd.f32 %v572, %v644
      %646 = vmatmul.bf16.gmra.mxu0 %v609
      %v647 = vpop.f32.mrf.mxu0
      %v648 = vadd.f32 %v572, %v647
      %v649 = vpop.f32.mrf.mxu0
      %v650 = vadd.f32 %v572, %v649
      %651 = vmatmul.bf16.gmra.mxu0 %v612
      %v652 = vpop.f32.mrf.mxu0
      %v653 = vadd.f32 %v572, %v652
      %v654 = vpop.f32.mrf.mxu0
      %v655 = vadd.f32 %v572, %v654
      %656 = vmatmul.bf16.gmra.mxu0 %v615
      %v657 = vpop.f32.mrf.mxu0
      %v658 = vadd.f32 %v572, %v657
      %v659 = vpop.f32.mrf.mxu0
      %v660 = vadd.f32 %v572, %v659
      %661 = vmatmul.bf16.gmra.mxu0 %v618
      %v662 = vpop.f32.mrf.mxu0
      %v663 = vadd.f32 %v572, %v662
      %v664 = vpop.f32.mrf.mxu0
      %v665 = vadd.f32 %v572, %v664
      %666 = vmatmul.bf16.gmra.mxu0 %v621
      %v667 = vpop.f32.mrf.mxu0
      %v668 = vadd.f32 %v572, %v667
      %v669 = vpop.f32.mrf.mxu0
      %v670 = vadd.f32 %v572, %v669
      %671 = vdwg.mxu0
      %v672 = vmax.f32 %v633, 0.0
      %v673 = vmax.f32 %v635, 0.0
      %v674 = vmax.f32 %v638, 0.0
      %v675 = vmax.f32 %v640, 0.0
      %v676 = vmax.f32 %v643, 0.0
      %v677 = vmax.f32 %v645, 0.0
      %v678 = vmax.f32 %v648, 0.0
      %v679 = vmax.f32 %v650, 0.0
      %v680 = vmax.f32 %v653, 0.0
      %v681 = vmax.f32 %v655, 0.0
      %v682 = vmax.f32 %v658, 0.0
      %v683 = vmax.f32 %v660, 0.0
      %v684 = vmax.f32 %v663, 0.0
      %v685 = vmax.f32 %v665, 0.0
      %v686 = vmax.f32 %v668, 0.0
      %v687 = vmax.f32 %v670, 0.0
      %v688 = vpack.c.bf16 %v673, %v672
      %v689 = vpack.c.bf16 %v675, %v674
      %v690 = vpack.c.bf16 %v677, %v676
      %v691 = vpack.c.bf16 %v679, %v678
      %v692 = vpack.c.bf16 %v681, %v680
      %v693 = vpack.c.bf16 %v683, %v682
      %v694 = vpack.c.bf16 %v685, %v684
      %v695 = vpack.c.bf16 %v687, %v686
      %v696 = vld [vmem:[%s5] sm:$0xf]
      %v697 = vld [vmem:[%s5 + $0x4] sm:$0xf]
      %v698 = vld [vmem:[%s5 + $0x8] sm:$0xf]
      %v699 = vld [vmem:[%s5 + $0xc] sm:$0xf]
      %v700 = vld [vmem:[%s5 + $0x10] sm:$0xf]
      %v701 = vld [vmem:[%s5 + $0x14] sm:$0xf]
      %v702 = vld [vmem:[%s5 + $0x18] sm:$0xf]
      %v703 = vld [vmem:[%s5 + $0x1c] sm:$0xf]
      %v704 = vld [vmem:[%s6] sm:$0x1]
      %v706 = vperm.slane %v704, 0
      %v716 = vunpack.c.l.b16 %v696
      %v717 = vunpack.c.l.b16 %v697
      %v718 = vunpack.c.l.b16 %v698
      %v719 = vunpack.c.l.b16 %v699
      %v720 = vunpack.c.l.b16 %v700
      %v721 = vunpack.c.l.b16 %v701
      %v722 = vunpack.c.l.b16 %v702
      %v723 = vunpack.c.l.b16 %v703
      %v724 = vpack.c.b16 %v717, %v716
      %v725 = vpack.c.b16 %v719, %v718
      %v726 = vpack.c.b16 %v721, %v720
      %v727 = vpack.c.b16 %v723, %v722
      %v733 = vsel %vm598, %v688, 0
      %v736 = vsel %vm598, %v689, 0
      %v739 = vsel %vm598, %v690, 0
      %v742 = vsel %vm598, %v691, 0
      %v745 = vsel %vm598, %v692, 0
      %v748 = vsel %vm598, %v693, 0
      %v751 = vsel %vm598, %v694, 0
      %v754 = vsel %vm598, %v695, 0
      %756 = vmatpush.bf16.msra.mxu0 0
      %757 = vmatpush.bf16.msra.mxu0 0
      %758 = vmatpush.bf16.msra.mxu0 0
      %759 = vmatpush.bf16.msra.mxu0 0
      %760 = vmatpush.bf16.msra.mxu0 %v727
      %761 = vmatpush.bf16.msra.mxu0 %v726
      %762 = vmatpush.bf16.msra.mxu0 %v725
      %763 = vmatpush.bf16.msra.mxu0 %v724
      %764 = vmatmul.bf16.gmra.mxu0 %v733
      %v765 = vpop.f32.mrf.mxu0
      %v766 = vadd.f32 %v706, %v765
      %v767 = vpop.f32.mrf.mxu0
      %v768 = vadd.f32 %v706, %v767
      %769 = vmatmul.bf16.gmra.mxu0 %v736
      %v770 = vpop.f32.mrf.mxu0
      %v771 = vadd.f32 %v706, %v770
      %v772 = vpop.f32.mrf.mxu0
      %v773 = vadd.f32 %v706, %v772
      %774 = vmatmul.bf16.gmra.mxu0 %v739
      %v775 = vpop.f32.mrf.mxu0
      %v776 = vadd.f32 %v706, %v775
      %v777 = vpop.f32.mrf.mxu0
      %v778 = vadd.f32 %v706, %v777
      %779 = vmatmul.bf16.gmra.mxu0 %v742
      %v780 = vpop.f32.mrf.mxu0
      %v781 = vadd.f32 %v706, %v780
      %v782 = vpop.f32.mrf.mxu0
      %v783 = vadd.f32 %v706, %v782
      %784 = vmatmul.bf16.gmra.mxu0 %v745
      %v785 = vpop.f32.mrf.mxu0
      %v786 = vadd.f32 %v706, %v785
      %v787 = vpop.f32.mrf.mxu0
      %v788 = vadd.f32 %v706, %v787
      %789 = vmatmul.bf16.gmra.mxu0 %v748
      %v790 = vpop.f32.mrf.mxu0
      %v791 = vadd.f32 %v706, %v790
      %v792 = vpop.f32.mrf.mxu0
      %v793 = vadd.f32 %v706, %v792
      %794 = vmatmul.bf16.gmra.mxu0 %v751
      %v795 = vpop.f32.mrf.mxu0
      %v796 = vadd.f32 %v706, %v795
      %v797 = vpop.f32.mrf.mxu0
      %v798 = vadd.f32 %v706, %v797
      %799 = vmatmul.bf16.gmra.mxu0 %v754
      %v800 = vpop.f32.mrf.mxu0
      %v801 = vadd.f32 %v706, %v800
      %v802 = vpop.f32.mrf.mxu0
      %v803 = vadd.f32 %v706, %v802
      %804 = vdwg.mxu0
      %v805 = vmax.f32 %v766, 0.0
      %v806 = vmax.f32 %v768, 0.0
      %v807 = vmax.f32 %v771, 0.0
      %v808 = vmax.f32 %v773, 0.0
      %v809 = vmax.f32 %v776, 0.0
      %v810 = vmax.f32 %v778, 0.0
      %v811 = vmax.f32 %v781, 0.0
      %v812 = vmax.f32 %v783, 0.0
      %v813 = vmax.f32 %v786, 0.0
      %v814 = vmax.f32 %v788, 0.0
      %v815 = vmax.f32 %v791, 0.0
      %v816 = vmax.f32 %v793, 0.0
      %v817 = vmax.f32 %v796, 0.0
      %v818 = vmax.f32 %v798, 0.0
      %v819 = vmax.f32 %v801, 0.0
      %v820 = vmax.f32 %v803, 0.0
      %v821 = vpack.c.bf16 %v806, %v805
      %v822 = vpack.c.bf16 %v808, %v807
      %v823 = vpack.c.bf16 %v810, %v809
      %v824 = vpack.c.bf16 %v812, %v811
      %v825 = vpack.c.bf16 %v814, %v813
      %v826 = vpack.c.bf16 %v816, %v815
      %v827 = vpack.c.bf16 %v818, %v817
      %v828 = vpack.c.bf16 %v820, %v819
      %v829 = vld [vmem:[%s7] sm:$0xf]
      %v830 = vld [vmem:[%s7 + $0x4] sm:$0xf]
      %v831 = vld [vmem:[%s7 + $0x8] sm:$0xf]
      %v832 = vld [vmem:[%s7 + $0xc] sm:$0xf]
      %v833 = vld [vmem:[%s7 + $0x10] sm:$0xf]
      %v834 = vld [vmem:[%s7 + $0x14] sm:$0xf]
      %v835 = vld [vmem:[%s7 + $0x18] sm:$0xf]
      %v836 = vld [vmem:[%s7 + $0x1c] sm:$0xf]
      %v837 = vld [vmem:[%s8] sm:$0x1]
      %v839 = vperm.slane %v837, 0
      %v849 = vunpack.c.l.b16 %v829
      %v850 = vunpack.c.l.b16 %v830
      %v851 = vunpack.c.l.b16 %v831
      %v852 = vunpack.c.l.b16 %v832
      %v853 = vunpack.c.l.b16 %v833
      %v854 = vunpack.c.l.b16 %v834
      %v855 = vunpack.c.l.b16 %v835
      %v856 = vunpack.c.l.b16 %v836
      %v857 = vpack.c.b16 %v850, %v849
      %v858 = vpack.c.b16 %v852, %v851
      %v859 = vpack.c.b16 %v854, %v853
      %v860 = vpack.c.b16 %v856, %v855
      %v866 = vsel %vm598, %v821, 0
      %v869 = vsel %vm598, %v822, 0
      %v872 = vsel %vm598, %v823, 0
      %v875 = vsel %vm598, %v824, 0
      %v878 = vsel %vm598, %v825, 0
      %v881 = vsel %vm598, %v826, 0
      %v884 = vsel %vm598, %v827, 0
      %v887 = vsel %vm598, %v828, 0
      %889 = vmatpush.bf16.msra.mxu0 0
      %890 = vmatpush.bf16.msra.mxu0 0
      %891 = vmatpush.bf16.msra.mxu0 0
      %892 = vmatpush.bf16.msra.mxu0 0
      %893 = vmatpush.bf16.msra.mxu0 %v860
      %894 = vmatpush.bf16.msra.mxu0 %v859
      %895 = vmatpush.bf16.msra.mxu0 %v858
      %896 = vmatpush.bf16.msra.mxu0 %v857
      %897 = vmatmul.bf16.gmra.mxu0 %v866
      %v898 = vpop.f32.mrf.mxu0
      %v899 = vadd.f32 %v839, %v898
      %v900 = vpop.f32.mrf.mxu0
      %v901 = vadd.f32 %v839, %v900
      %902 = vmatmul.bf16.gmra.mxu0 %v869
      %v903 = vpop.f32.mrf.mxu0
      %v904 = vadd.f32 %v839, %v903
      %v905 = vpop.f32.mrf.mxu0
      %v906 = vadd.f32 %v839, %v905
      %907 = vmatmul.bf16.gmra.mxu0 %v872
      %v908 = vpop.f32.mrf.mxu0
      %v909 = vadd.f32 %v839, %v908
      %v910 = vpop.f32.mrf.mxu0
      %v911 = vadd.f32 %v839, %v910
      %912 = vmatmul.bf16.gmra.mxu0 %v875
      %v913 = vpop.f32.mrf.mxu0
      %v914 = vadd.f32 %v839, %v913
      %v915 = vpop.f32.mrf.mxu0
      %v916 = vadd.f32 %v839, %v915
      %917 = vmatmul.bf16.gmra.mxu0 %v878
      %v918 = vpop.f32.mrf.mxu0
      %v919 = vadd.f32 %v839, %v918
      %v920 = vpop.f32.mrf.mxu0
      %v921 = vadd.f32 %v839, %v920
      %922 = vmatmul.bf16.gmra.mxu0 %v881
      %v923 = vpop.f32.mrf.mxu0
      %v924 = vadd.f32 %v839, %v923
      %v925 = vpop.f32.mrf.mxu0
      %v926 = vadd.f32 %v839, %v925
      %927 = vmatmul.bf16.gmra.mxu0 %v884
      %v928 = vpop.f32.mrf.mxu0
      %v929 = vadd.f32 %v839, %v928
      %v930 = vpop.f32.mrf.mxu0
      %v931 = vadd.f32 %v839, %v930
      %932 = vmatmul.bf16.gmra.mxu0 %v887
      %v933 = vpop.f32.mrf.mxu0
      %v934 = vadd.f32 %v839, %v933
      %v935 = vpop.f32.mrf.mxu0
      %v936 = vadd.f32 %v839, %v935
      %937 = vdwg.mxu0
      %v938 = vmax.f32 %v899, 0.0
      %v939 = vmax.f32 %v901, 0.0
      %v940 = vmax.f32 %v904, 0.0
      %v941 = vmax.f32 %v906, 0.0
      %v942 = vmax.f32 %v909, 0.0
      %v943 = vmax.f32 %v911, 0.0
      %v944 = vmax.f32 %v914, 0.0
      %v945 = vmax.f32 %v916, 0.0
      %v946 = vmax.f32 %v919, 0.0
      %v947 = vmax.f32 %v921, 0.0
      %v948 = vmax.f32 %v924, 0.0
      %v949 = vmax.f32 %v926, 0.0
      %v950 = vmax.f32 %v929, 0.0
      %v951 = vmax.f32 %v931, 0.0
      %v952 = vmax.f32 %v934, 0.0
      %v953 = vmax.f32 %v936, 0.0
      %v954 = vpack.c.bf16 %v939, %v938
      %v955 = vpack.c.bf16 %v941, %v940
      %v956 = vpack.c.bf16 %v943, %v942
      %v957 = vpack.c.bf16 %v945, %v944
      %v958 = vpack.c.bf16 %v947, %v946
      %v959 = vpack.c.bf16 %v949, %v948
      %v960 = vpack.c.bf16 %v951, %v950
      %v961 = vpack.c.bf16 %v953, %v952
      %v962 = vld [vmem:[%s9] sm:$0xff]
      %v963 = vld [vmem:[%s9 + $0x8] sm:$0xff]
      %v964 = vld [vmem:[%s9 + $0x10] sm:$0xff]
      %v965 = vld [vmem:[%s9 + $0x18] sm:$0xff]
      %v966 = vld [vmem:[%s9 + $0x20] sm:$0xff]
      %v967 = vld [vmem:[%s9 + $0x28] sm:$0xff]
      %v968 = vld [vmem:[%s9 + $0x30] sm:$0xff]
      %v969 = vld [vmem:[%s9 + $0x38] sm:$0xff]
      %v970 = vld [vmem:[%s9 + $0x40] sm:$0xff]
      %v971 = vld [vmem:[%s9 + $0x48] sm:$0xff]
      %v972 = vld [vmem:[%s9 + $0x50] sm:$0xff]
      %v973 = vld [vmem:[%s9 + $0x58] sm:$0xff]
      %v974 = vld [vmem:[%s9 + $0x60] sm:$0xff]
      %v975 = vld [vmem:[%s9 + $0x68] sm:$0xff]
      %v976 = vld [vmem:[%s9 + $0x70] sm:$0xff]
      %v977 = vld [vmem:[%s9 + $0x78] sm:$0xff]
      %v978 = vld [vmem:[%s9 + $0x80] sm:$0xff]
      %v979 = vld [vmem:[%s9 + $0x88] sm:$0xff]
      %v980 = vld [vmem:[%s9 + $0x90] sm:$0xff]
      %v981 = vld [vmem:[%s9 + $0x98] sm:$0xff]
      %v982 = vld [vmem:[%s9 + $0xa0] sm:$0xff]
      %v983 = vld [vmem:[%s9 + $0xa8] sm:$0xff]
      %v984 = vld [vmem:[%s9 + $0xb0] sm:$0xff]
      %v985 = vld [vmem:[%s9 + $0xb8] sm:$0xff]
      %v986 = vld [vmem:[%s9 + $0xc0] sm:$0xff]
      %v987 = vld [vmem:[%s9 + $0xc8] sm:$0xff]
      %v988 = vld [vmem:[%s9 + $0xd0] sm:$0xff]
      %v989 = vld [vmem:[%s9 + $0xd8] sm:$0xff]
      %v990 = vld [vmem:[%s9 + $0xe0] sm:$0xff]
      %v991 = vld [vmem:[%s9 + $0xe8] sm:$0xff]
      %v992 = vld [vmem:[%s9 + $0xf0] sm:$0xff]
      %v993 = vld [vmem:[%s9 + $0xf8] sm:$0xff]
      %v994 = vld [vmem:[%s9 + $0x100] sm:$0xff]
      %v995 = vld [vmem:[%s9 + $0x108] sm:$0xff]
      %v996 = vld [vmem:[%s9 + $0x110] sm:$0xff]
      %v997 = vld [vmem:[%s9 + $0x118] sm:$0xff]
      %v998 = vld [vmem:[%s9 + $0x120] sm:$0xff]
      %v999 = vld [vmem:[%s9 + $0x128] sm:$0xff]
      %v1000 = vld [vmem:[%s9 + $0x130] sm:$0xff]
      %v1001 = vld [vmem:[%s9 + $0x138] sm:$0xff]
      %v1002 = vld [vmem:[%s9 + $0x140] sm:$0xff]
      %v1003 = vld [vmem:[%s9 + $0x148] sm:$0xff]
      %v1004 = vld [vmem:[%s9 + $0x150] sm:$0xff]
      %v1005 = vld [vmem:[%s9 + $0x158] sm:$0xff]
      %v1006 = vld [vmem:[%s9 + $0x160] sm:$0xff]
      %v1007 = vld [vmem:[%s9 + $0x168] sm:$0xff]
      %v1008 = vld [vmem:[%s9 + $0x170] sm:$0xff]
      %v1009 = vld [vmem:[%s9 + $0x178] sm:$0xff]
      %v1010 = vld [vmem:[%s9 + $0x180] sm:$0xff]
      %v1011 = vld [vmem:[%s9 + $0x188] sm:$0xff]
      %v1012 = vld [vmem:[%s9 + $0x190] sm:$0xff]
      %v1013 = vld [vmem:[%s9 + $0x198] sm:$0xff]
      %v1014 = vld [vmem:[%s9 + $0x1a0] sm:$0xff]
      %v1015 = vld [vmem:[%s9 + $0x1a8] sm:$0xff]
      %v1016 = vld [vmem:[%s9 + $0x1b0] sm:$0xff]
      %v1017 = vld [vmem:[%s9 + $0x1b8] sm:$0xff]
      %v1018 = vld [vmem:[%s9 + $0x1c0] sm:$0xff]
      %v1019 = vld [vmem:[%s9 + $0x1c8] sm:$0xff]
      %v1020 = vld [vmem:[%s9 + $0x1d0] sm:$0xff]
      %v1021 = vld [vmem:[%s9 + $0x1d8] sm:$0xff]
      %v1022 = vld [vmem:[%s9 + $0x1e0] sm:$0xff]
      %v1023 = vld [vmem:[%s9 + $0x1e8] sm:$0xff]
      %v1024 = vld [vmem:[%s9 + $0x1f0] sm:$0xff]
      %v1025 = vld [vmem:[%s9 + $0x1f8] sm:$0xff]
      %v1026 = vld [vmem:[%s10] sm:$0xff]
      %v1028 = vperm.slane %v1026, 0
      %v1029 = vperm.slane %v1026, 1
      %v1030 = vperm.slane %v1026, 2
      %v1031 = vperm.slane %v1026, 3
      %v1032 = vperm.slane %v1026, 4
      %v1033 = vperm.slane %v1026, 5
      %v1034 = vperm.slane %v1026, 6
      %v1035 = vperm.slane %v1026, 7
      %v1108 = vunpack.c.l.b16 %v962
      %v1109 = vunpack.c.h.b16 %v962
      %v1110 = vunpack.c.l.b16 %v963
      %v1111 = vunpack.c.h.b16 %v963
      %v1112 = vunpack.c.l.b16 %v964
      %v1113 = vunpack.c.h.b16 %v964
      %v1114 = vunpack.c.l.b16 %v965
      %v1115 = vunpack.c.h.b16 %v965
      %v1116 = vunpack.c.l.b16 %v966
      %v1117 = vunpack.c.h.b16 %v966
      %v1118 = vunpack.c.l.b16 %v967
      %v1119 = vunpack.c.h.b16 %v967
      %v1120 = vunpack.c.l.b16 %v968
      %v1121 = vunpack.c.h.b16 %v968
      %v1122 = vunpack.c.l.b16 %v969
      %v1123 = vunpack.c.h.b16 %v969
      %v1124 = vunpack.c.l.b16 %v970
      %v1125 = vunpack.c.h.b16 %v970
      %v1126 = vunpack.c.l.b16 %v971
      %v1127 = vunpack.c.h.b16 %v971
      %v1128 = vunpack.c.l.b16 %v972
      %v1129 = vunpack.c.h.b16 %v972
      %v1130 = vunpack.c.l.b16 %v973
      %v1131 = vunpack.c.h.b16 %v973
      %v1132 = vunpack.c.l.b16 %v974
      %v1133 = vunpack.c.h.b16 %v974
      %v1134 = vunpack.c.l.b16 %v975
      %v1135 = vunpack.c.h.b16 %v975
      %v1136 = vunpack.c.l.b16 %v976
      %v1137 = vunpack.c.h.b16 %v976
      %v1138 = vunpack.c.l.b16 %v977
      %v1139 = vunpack.c.h.b16 %v977
      %v1140 = vunpack.c.l.b16 %v978
      %v1141 = vunpack.c.h.b16 %v978
      %v1142 = vunpack.c.l.b16 %v979
      %v1143 = vunpack.c.h.b16 %v979
      %v1144 = vunpack.c.l.b16 %v980
      %v1145 = vunpack.c.h.b16 %v980
      %v1146 = vunpack.c.l.b16 %v981
      %v1147 = vunpack.c.h.b16 %v981
      %v1148 = vunpack.c.l.b16 %v982
      %v1149 = vunpack.c.h.b16 %v982
      %v1150 = vunpack.c.l.b16 %v983
      %v1151 = vunpack.c.h.b16 %v983
      %v1152 = vunpack.c.l.b16 %v984
      %v1153 = vunpack.c.h.b16 %v984
      %v1154 = vunpack.c.l.b16 %v985
      %v1155 = vunpack.c.h.b16 %v985
      %v1156 = vunpack.c.l.b16 %v986
      %v1157 = vunpack.c.h.b16 %v986
      %v1158 = vunpack.c.l.b16 %v987
      %v1159 = vunpack.c.h.b16 %v987
      %v1160 = vunpack.c.l.b16 %v988
      %v1161 = vunpack.c.h.b16 %v988
      %v1162 = vunpack.c.l.b16 %v989
      %v1163 = vunpack.c.h.b16 %v989
      %v1164 = vunpack.c.l.b16 %v990
      %v1165 = vunpack.c.h.b16 %v990
      %v1166 = vunpack.c.l.b16 %v991
      %v1167 = vunpack.c.h.b16 %v991
      %v1168 = vunpack.c.l.b16 %v992
      %v1169 = vunpack.c.h.b16 %v992
      %v1170 = vunpack.c.l.b16 %v993
      %v1171 = vunpack.c.h.b16 %v993
      %v1172 = vunpack.c.l.b16 %v994
      %v1173 = vunpack.c.h.b16 %v994
      %v1174 = vunpack.c.l.b16 %v995
      %v1175 = vunpack.c.h.b16 %v995
      %v1176 = vunpack.c.l.b16 %v996
      %v1177 = vunpack.c.h.b16 %v996
      %v1178 = vunpack.c.l.b16 %v997
      %v1179 = vunpack.c.h.b16 %v997
      %v1180 = vunpack.c.l.b16 %v998
      %v1181 = vunpack.c.h.b16 %v998
      %v1182 = vunpack.c.l.b16 %v999
      %v1183 = vunpack.c.h.b16 %v999
      %v1184 = vunpack.c.l.b16 %v1000
      %v1185 = vunpack.c.h.b16 %v1000
      %v1186 = vunpack.c.l.b16 %v1001
      %v1187 = vunpack.c.h.b16 %v1001
      %v1188 = vunpack.c.l.b16 %v1002
      %v1189 = vunpack.c.h.b16 %v1002
      %v1190 = vunpack.c.l.b16 %v1003
      %v1191 = vunpack.c.h.b16 %v1003
      %v1192 = vunpack.c.l.b16 %v1004
      %v1193 = vunpack.c.h.b16 %v1004
      %v1194 = vunpack.c.l.b16 %v1005
      %v1195 = vunpack.c.h.b16 %v1005
      %v1196 = vunpack.c.l.b16 %v1006
      %v1197 = vunpack.c.h.b16 %v1006
      %v1198 = vunpack.c.l.b16 %v1007
      %v1199 = vunpack.c.h.b16 %v1007
      %v1200 = vunpack.c.l.b16 %v1008
      %v1201 = vunpack.c.h.b16 %v1008
      %v1202 = vunpack.c.l.b16 %v1009
      %v1203 = vunpack.c.h.b16 %v1009
      %v1204 = vunpack.c.l.b16 %v1010
      %v1205 = vunpack.c.h.b16 %v1010
      %v1206 = vunpack.c.l.b16 %v1011
      %v1207 = vunpack.c.h.b16 %v1011
      %v1208 = vunpack.c.l.b16 %v1012
      %v1209 = vunpack.c.h.b16 %v1012
      %v1210 = vunpack.c.l.b16 %v1013
      %v1211 = vunpack.c.h.b16 %v1013
      %v1212 = vunpack.c.l.b16 %v1014
      %v1213 = vunpack.c.h.b16 %v1014
      %v1214 = vunpack.c.l.b16 %v1015
      %v1215 = vunpack.c.h.b16 %v1015
      %v1216 = vunpack.c.l.b16 %v1016
      %v1217 = vunpack.c.h.b16 %v1016
      %v1218 = vunpack.c.l.b16 %v1017
      %v1219 = vunpack.c.h.b16 %v1017
      %v1220 = vunpack.c.l.b16 %v1018
      %v1221 = vunpack.c.h.b16 %v1018
      %v1222 = vunpack.c.l.b16 %v1019
      %v1223 = vunpack.c.h.b16 %v1019
      %v1224 = vunpack.c.l.b16 %v1020
      %v1225 = vunpack.c.h.b16 %v1020
      %v1226 = vunpack.c.l.b16 %v1021
      %v1227 = vunpack.c.h.b16 %v1021
      %v1228 = vunpack.c.l.b16 %v1022
      %v1229 = vunpack.c.h.b16 %v1022
      %v1230 = vunpack.c.l.b16 %v1023
      %v1231 = vunpack.c.h.b16 %v1023
      %v1232 = vunpack.c.l.b16 %v1024
      %v1233 = vunpack.c.h.b16 %v1024
      %v1234 = vunpack.c.l.b16 %v1025
      %v1235 = vunpack.c.h.b16 %v1025
      %v1236 = vpack.c.b16 %v1116, %v1108
      %v1237 = vpack.c.b16 %v1117, %v1109
      %v1238 = vpack.c.b16 %v1118, %v1110
      %v1239 = vpack.c.b16 %v1119, %v1111
      %v1240 = vpack.c.b16 %v1120, %v1112
      %v1241 = vpack.c.b16 %v1121, %v1113
      %v1242 = vpack.c.b16 %v1122, %v1114
      %v1243 = vpack.c.b16 %v1123, %v1115
      %v1244 = vpack.c.b16 %v1132, %v1124
      %v1245 = vpack.c.b16 %v1133, %v1125
      %v1246 = vpack.c.b16 %v1134, %v1126
      %v1247 = vpack.c.b16 %v1135, %v1127
      %v1248 = vpack.c.b16 %v1136, %v1128
      %v1249 = vpack.c.b16 %v1137, %v1129
      %v1250 = vpack.c.b16 %v1138, %v1130
      %v1251 = vpack.c.b16 %v1139, %v1131
      %v1252 = vpack.c.b16 %v1148, %v1140
      %v1253 = vpack.c.b16 %v1149, %v1141
      %v1254 = vpack.c.b16 %v1150, %v1142
      %v1255 = vpack.c.b16 %v1151, %v1143
      %v1256 = vpack.c.b16 %v1152, %v1144
      %v1257 = vpack.c.b16 %v1153, %v1145
      %v1258 = vpack.c.b16 %v1154, %v1146
      %v1259 = vpack.c.b16 %v1155, %v1147
      %v1260 = vpack.c.b16 %v1164, %v1156
      %v1261 = vpack.c.b16 %v1165, %v1157
      %v1262 = vpack.c.b16 %v1166, %v1158
      %v1263 = vpack.c.b16 %v1167, %v1159
      %v1264 = vpack.c.b16 %v1168, %v1160
      %v1265 = vpack.c.b16 %v1169, %v1161
      %v1266 = vpack.c.b16 %v1170, %v1162
      %v1267 = vpack.c.b16 %v1171, %v1163
      %v1268 = vpack.c.b16 %v1180, %v1172
      %v1269 = vpack.c.b16 %v1181, %v1173
      %v1270 = vpack.c.b16 %v1182, %v1174
      %v1271 = vpack.c.b16 %v1183, %v1175
      %v1272 = vpack.c.b16 %v1184, %v1176
      %v1273 = vpack.c.b16 %v1185, %v1177
      %v1274 = vpack.c.b16 %v1186, %v1178
      %v1275 = vpack.c.b16 %v1187, %v1179
      %v1276 = vpack.c.b16 %v1196, %v1188
      %v1277 = vpack.c.b16 %v1197, %v1189
      %v1278 = vpack.c.b16 %v1198, %v1190
      %v1279 = vpack.c.b16 %v1199, %v1191
      %v1280 = vpack.c.b16 %v1200, %v1192
      %v1281 = vpack.c.b16 %v1201, %v1193
      %v1282 = vpack.c.b16 %v1202, %v1194
      %v1283 = vpack.c.b16 %v1203, %v1195
      %v1284 = vpack.c.b16 %v1212, %v1204
      %v1285 = vpack.c.b16 %v1213, %v1205
      %v1286 = vpack.c.b16 %v1214, %v1206
      %v1287 = vpack.c.b16 %v1215, %v1207
      %v1288 = vpack.c.b16 %v1216, %v1208
      %v1289 = vpack.c.b16 %v1217, %v1209
      %v1290 = vpack.c.b16 %v1218, %v1210
      %v1291 = vpack.c.b16 %v1219, %v1211
      %v1292 = vpack.c.b16 %v1228, %v1220
      %v1293 = vpack.c.b16 %v1229, %v1221
      %v1294 = vpack.c.b16 %v1230, %v1222
      %v1295 = vpack.c.b16 %v1231, %v1223
      %v1296 = vpack.c.b16 %v1232, %v1224
      %v1297 = vpack.c.b16 %v1233, %v1225
      %v1298 = vpack.c.b16 %v1234, %v1226
      %v1299 = vpack.c.b16 %v1235, %v1227
      %1364 = vmatpush.bf16.msra.mxu0 %v1292
      %1365 = vmatpush.bf16.msra.mxu0 %v1284
      %1366 = vmatpush.bf16.msra.mxu0 %v1276
      %1367 = vmatpush.bf16.msra.mxu0 %v1268
      %1368 = vmatpush.bf16.msra.mxu0 %v1260
      %1369 = vmatpush.bf16.msra.mxu0 %v1252
      %1370 = vmatpush.bf16.msra.mxu0 %v1244
      %1371 = vmatpush.bf16.msra.mxu0 %v1236
      %1372 = vmatmul.bf16.gmra.mxu0 %v954
      %v1373 = vpop.f32.mrf.mxu0
      %v1374 = vadd.f32 %v1028, %v1373
      %v1375 = vpop.f32.mrf.mxu0
      %v1376 = vadd.f32 %v1028, %v1375
      %1377 = vmatmul.bf16.gmra.mxu0 %v955
      %v1378 = vpop.f32.mrf.mxu0
      %v1379 = vadd.f32 %v1028, %v1378
      %v1380 = vpop.f32.mrf.mxu0
      %v1381 = vadd.f32 %v1028, %v1380
      %1382 = vmatmul.bf16.gmra.mxu0 %v956
      %v1383 = vpop.f32.mrf.mxu0
      %v1384 = vadd.f32 %v1028, %v1383
      %v1385 = vpop.f32.mrf.mxu0
      %v1386 = vadd.f32 %v1028, %v1385
      %1387 = vmatmul.bf16.gmra.mxu0 %v957
      %v1388 = vpop.f32.mrf.mxu0
      %v1389 = vadd.f32 %v1028, %v1388
      %v1390 = vpop.f32.mrf.mxu0
      %v1391 = vadd.f32 %v1028, %v1390
      %1392 = vmatmul.bf16.gmra.mxu0 %v958
      %v1393 = vpop.f32.mrf.mxu0
      %v1394 = vadd.f32 %v1028, %v1393
      %v1395 = vpop.f32.mrf.mxu0
      %v1396 = vadd.f32 %v1028, %v1395
      %1397 = vmatmul.bf16.gmra.mxu0 %v959
      %v1398 = vpop.f32.mrf.mxu0
      %v1399 = vadd.f32 %v1028, %v1398
      %v1400 = vpop.f32.mrf.mxu0
      %v1401 = vadd.f32 %v1028, %v1400
      %1402 = vmatmul.bf16.gmra.mxu0 %v960
      %v1403 = vpop.f32.mrf.mxu0
      %v1404 = vadd.f32 %v1028, %v1403
      %v1405 = vpop.f32.mrf.mxu0
      %v1406 = vadd.f32 %v1028, %v1405
      %1407 = vmatmul.bf16.gmra.mxu0 %v961
      %v1408 = vpop.f32.mrf.mxu0
      %v1409 = vadd.f32 %v1028, %v1408
      %v1410 = vpop.f32.mrf.mxu0
      %v1411 = vadd.f32 %v1028, %v1410
      %1412 = vdwg.mxu0
      %1413 = vmatpush.bf16.msra.mxu0 %v1293
      %1414 = vmatpush.bf16.msra.mxu0 %v1285
      %1415 = vmatpush.bf16.msra.mxu0 %v1277
      %1416 = vmatpush.bf16.msra.mxu0 %v1269
      %1417 = vmatpush.bf16.msra.mxu0 %v1261
      %1418 = vmatpush.bf16.msra.mxu0 %v1253
      %1419 = vmatpush.bf16.msra.mxu0 %v1245
      %1420 = vmatpush.bf16.msra.mxu0 %v1237
      %1421 = vmatmul.bf16.gmra.mxu0 %v954
      %v1422 = vpop.f32.mrf.mxu0
      %v1423 = vadd.f32 %v1029, %v1422
      %v1424 = vpop.f32.mrf.mxu0
      %v1425 = vadd.f32 %v1029, %v1424
      %1426 = vmatmul.bf16.gmra.mxu0 %v955
      %v1427 = vpop.f32.mrf.mxu0
      %v1428 = vadd.f32 %v1029, %v1427
      %v1429 = vpop.f32.mrf.mxu0
      %v1430 = vadd.f32 %v1029, %v1429
      %1431 = vmatmul.bf16.gmra.mxu0 %v956
      %v1432 = vpop.f32.mrf.mxu0
      %v1433 = vadd.f32 %v1029, %v1432
      %v1434 = vpop.f32.mrf.mxu0
      %v1435 = vadd.f32 %v1029, %v1434
      %1436 = vmatmul.bf16.gmra.mxu0 %v957
      %v1437 = vpop.f32.mrf.mxu0
      %v1438 = vadd.f32 %v1029, %v1437
      %v1439 = vpop.f32.mrf.mxu0
      %v1440 = vadd.f32 %v1029, %v1439
      %1441 = vmatmul.bf16.gmra.mxu0 %v958
      %v1442 = vpop.f32.mrf.mxu0
      %v1443 = vadd.f32 %v1029, %v1442
      %v1444 = vpop.f32.mrf.mxu0
      %v1445 = vadd.f32 %v1029, %v1444
      %1446 = vmatmul.bf16.gmra.mxu0 %v959
      %v1447 = vpop.f32.mrf.mxu0
      %v1448 = vadd.f32 %v1029, %v1447
      %v1449 = vpop.f32.mrf.mxu0
      %v1450 = vadd.f32 %v1029, %v1449
      %1451 = vmatmul.bf16.gmra.mxu0 %v960
      %v1452 = vpop.f32.mrf.mxu0
      %v1453 = vadd.f32 %v1029, %v1452
      %v1454 = vpop.f32.mrf.mxu0
      %v1455 = vadd.f32 %v1029, %v1454
      %1456 = vmatmul.bf16.gmra.mxu0 %v961
      %v1457 = vpop.f32.mrf.mxu0
      %v1458 = vadd.f32 %v1029, %v1457
      %v1459 = vpop.f32.mrf.mxu0
      %v1460 = vadd.f32 %v1029, %v1459
      %1461 = vdwg.mxu0
      %1462 = vmatpush.bf16.msra.mxu0 %v1294
      %1463 = vmatpush.bf16.msra.mxu0 %v1286
      %1464 = vmatpush.bf16.msra.mxu0 %v1278
      %1465 = vmatpush.bf16.msra.mxu0 %v1270
      %1466 = vmatpush.bf16.msra.mxu0 %v1262
      %1467 = vmatpush.bf16.msra.mxu0 %v1254
      %1468 = vmatpush.bf16.msra.mxu0 %v1246
      %1469 = vmatpush.bf16.msra.mxu0 %v1238
      %1470 = vmatmul.bf16.gmra.mxu0 %v954
      %v1471 = vpop.f32.mrf.mxu0
      %v1472 = vadd.f32 %v1030, %v1471
      %v1473 = vpop.f32.mrf.mxu0
      %v1474 = vadd.f32 %v1030, %v1473
      %1475 = vmatmul.bf16.gmra.mxu0 %v955
      %v1476 = vpop.f32.mrf.mxu0
      %v1477 = vadd.f32 %v1030, %v1476
      %v1478 = vpop.f32.mrf.mxu0
      %v1479 = vadd.f32 %v1030, %v1478
      %1480 = vmatmul.bf16.gmra.mxu0 %v956
      %v1481 = vpop.f32.mrf.mxu0
      %v1482 = vadd.f32 %v1030, %v1481
      %v1483 = vpop.f32.mrf.mxu0
      %v1484 = vadd.f32 %v1030, %v1483
      %1485 = vmatmul.bf16.gmra.mxu0 %v957
      %v1486 = vpop.f32.mrf.mxu0
      %v1487 = vadd.f32 %v1030, %v1486
      %v1488 = vpop.f32.mrf.mxu0
      %v1489 = vadd.f32 %v1030, %v1488
      %1490 = vmatmul.bf16.gmra.mxu0 %v958
      %v1491 = vpop.f32.mrf.mxu0
      %v1492 = vadd.f32 %v1030, %v1491
      %v1493 = vpop.f32.mrf.mxu0
      %v1494 = vadd.f32 %v1030, %v1493
      %1495 = vmatmul.bf16.gmra.mxu0 %v959
      %v1496 = vpop.f32.mrf.mxu0
      %v1497 = vadd.f32 %v1030, %v1496
      %v1498 = vpop.f32.mrf.mxu0
      %v1499 = vadd.f32 %v1030, %v1498
      %1500 = vmatmul.bf16.gmra.mxu0 %v960
      %v1501 = vpop.f32.mrf.mxu0
      %v1502 = vadd.f32 %v1030, %v1501
      %v1503 = vpop.f32.mrf.mxu0
      %v1504 = vadd.f32 %v1030, %v1503
      %1505 = vmatmul.bf16.gmra.mxu0 %v961
      %v1506 = vpop.f32.mrf.mxu0
      %v1507 = vadd.f32 %v1030, %v1506
      %v1508 = vpop.f32.mrf.mxu0
      %v1509 = vadd.f32 %v1030, %v1508
      %1510 = vdwg.mxu0
      %1511 = vmatpush.bf16.msra.mxu0 %v1295
      %1512 = vmatpush.bf16.msra.mxu0 %v1287
      %1513 = vmatpush.bf16.msra.mxu0 %v1279
      %1514 = vmatpush.bf16.msra.mxu0 %v1271
      %1515 = vmatpush.bf16.msra.mxu0 %v1263
      %1516 = vmatpush.bf16.msra.mxu0 %v1255
      %1517 = vmatpush.bf16.msra.mxu0 %v1247
      %1518 = vmatpush.bf16.msra.mxu0 %v1239
      %1519 = vmatmul.bf16.gmra.mxu0 %v954
      %v1520 = vpop.f32.mrf.mxu0
      %v1521 = vadd.f32 %v1031, %v1520
      %v1522 = vpop.f32.mrf.mxu0
      %v1523 = vadd.f32 %v1031, %v1522
      %1524 = vmatmul.bf16.gmra.mxu0 %v955
      %v1525 = vpop.f32.mrf.mxu0
      %v1526 = vadd.f32 %v1031, %v1525
      %v1527 = vpop.f32.mrf.mxu0
      %v1528 = vadd.f32 %v1031, %v1527
      %1529 = vmatmul.bf16.gmra.mxu0 %v956
      %v1530 = vpop.f32.mrf.mxu0
      %v1531 = vadd.f32 %v1031, %v1530
      %v1532 = vpop.f32.mrf.mxu0
      %v1533 = vadd.f32 %v1031, %v1532
      %1534 = vmatmul.bf16.gmra.mxu0 %v957
      %v1535 = vpop.f32.mrf.mxu0
      %v1536 = vadd.f32 %v1031, %v1535
      %v1537 = vpop.f32.mrf.mxu0
      %v1538 = vadd.f32 %v1031, %v1537
      %1539 = vmatmul.bf16.gmra.mxu0 %v958
      %v1540 = vpop.f32.mrf.mxu0
      %v1541 = vadd.f32 %v1031, %v1540
      %v1542 = vpop.f32.mrf.mxu0
      %v1543 = vadd.f32 %v1031, %v1542
      %1544 = vmatmul.bf16.gmra.mxu0 %v959
      %v1545 = vpop.f32.mrf.mxu0
      %v1546 = vadd.f32 %v1031, %v1545
      %v1547 = vpop.f32.mrf.mxu0
      %v1548 = vadd.f32 %v1031, %v1547
      %1549 = vmatmul.bf16.gmra.mxu0 %v960
      %v1550 = vpop.f32.mrf.mxu0
      %v1551 = vadd.f32 %v1031, %v1550
      %v1552 = vpop.f32.mrf.mxu0
      %v1553 = vadd.f32 %v1031, %v1552
      %1554 = vmatmul.bf16.gmra.mxu0 %v961
      %v1555 = vpop.f32.mrf.mxu0
      %v1556 = vadd.f32 %v1031, %v1555
      %v1557 = vpop.f32.mrf.mxu0
      %v1558 = vadd.f32 %v1031, %v1557
      %1559 = vdwg.mxu0
      %1560 = vmatpush.bf16.msra.mxu0 %v1296
      %1561 = vmatpush.bf16.msra.mxu0 %v1288
      %1562 = vmatpush.bf16.msra.mxu0 %v1280
      %1563 = vmatpush.bf16.msra.mxu0 %v1272
      %1564 = vmatpush.bf16.msra.mxu0 %v1264
      %1565 = vmatpush.bf16.msra.mxu0 %v1256
      %1566 = vmatpush.bf16.msra.mxu0 %v1248
      %1567 = vmatpush.bf16.msra.mxu0 %v1240
      %1568 = vmatmul.bf16.gmra.mxu0 %v954
      %v1569 = vpop.f32.mrf.mxu0
      %v1570 = vadd.f32 %v1032, %v1569
      %v1571 = vpop.f32.mrf.mxu0
      %v1572 = vadd.f32 %v1032, %v1571
      %1573 = vmatmul.bf16.gmra.mxu0 %v955
      %v1574 = vpop.f32.mrf.mxu0
      %v1575 = vadd.f32 %v1032, %v1574
      %v1576 = vpop.f32.mrf.mxu0
      %v1577 = vadd.f32 %v1032, %v1576
      %1578 = vmatmul.bf16.gmra.mxu0 %v956
      %v1579 = vpop.f32.mrf.mxu0
      %v1580 = vadd.f32 %v1032, %v1579
      %v1581 = vpop.f32.mrf.mxu0
      %v1582 = vadd.f32 %v1032, %v1581
      %1583 = vmatmul.bf16.gmra.mxu0 %v957
      %v1584 = vpop.f32.mrf.mxu0
      %v1585 = vadd.f32 %v1032, %v1584
      %v1586 = vpop.f32.mrf.mxu0
      %v1587 = vadd.f32 %v1032, %v1586
      %1588 = vmatmul.bf16.gmra.mxu0 %v958
      %v1589 = vpop.f32.mrf.mxu0
      %v1590 = vadd.f32 %v1032, %v1589
      %v1591 = vpop.f32.mrf.mxu0
      %v1592 = vadd.f32 %v1032, %v1591
      %1593 = vmatmul.bf16.gmra.mxu0 %v959
      %v1594 = vpop.f32.mrf.mxu0
      %v1595 = vadd.f32 %v1032, %v1594
      %v1596 = vpop.f32.mrf.mxu0
      %v1597 = vadd.f32 %v1032, %v1596
      %1598 = vmatmul.bf16.gmra.mxu0 %v960
      %v1599 = vpop.f32.mrf.mxu0
      %v1600 = vadd.f32 %v1032, %v1599
      %v1601 = vpop.f32.mrf.mxu0
      %v1602 = vadd.f32 %v1032, %v1601
      %1603 = vmatmul.bf16.gmra.mxu0 %v961
      %v1604 = vpop.f32.mrf.mxu0
      %v1605 = vadd.f32 %v1032, %v1604
      %v1606 = vpop.f32.mrf.mxu0
      %v1607 = vadd.f32 %v1032, %v1606
      %1608 = vdwg.mxu0
      %1609 = vmatpush.bf16.msra.mxu0 %v1297
      %1610 = vmatpush.bf16.msra.mxu0 %v1289
      %1611 = vmatpush.bf16.msra.mxu0 %v1281
      %1612 = vmatpush.bf16.msra.mxu0 %v1273
      %1613 = vmatpush.bf16.msra.mxu0 %v1265
      %1614 = vmatpush.bf16.msra.mxu0 %v1257
      %1615 = vmatpush.bf16.msra.mxu0 %v1249
      %1616 = vmatpush.bf16.msra.mxu0 %v1241
      %1617 = vmatmul.bf16.gmra.mxu0 %v954
      %v1618 = vpop.f32.mrf.mxu0
      %v1619 = vadd.f32 %v1033, %v1618
      %v1620 = vpop.f32.mrf.mxu0
      %v1621 = vadd.f32 %v1033, %v1620
      %1622 = vmatmul.bf16.gmra.mxu0 %v955
      %v1623 = vpop.f32.mrf.mxu0
      %v1624 = vadd.f32 %v1033, %v1623
      %v1625 = vpop.f32.mrf.mxu0
      %v1626 = vadd.f32 %v1033, %v1625
      %1627 = vmatmul.bf16.gmra.mxu0 %v956
      %v1628 = vpop.f32.mrf.mxu0
      %v1629 = vadd.f32 %v1033, %v1628
      %v1630 = vpop.f32.mrf.mxu0
      %v1631 = vadd.f32 %v1033, %v1630
      %1632 = vmatmul.bf16.gmra.mxu0 %v957
      %v1633 = vpop.f32.mrf.mxu0
      %v1634 = vadd.f32 %v1033, %v1633
      %v1635 = vpop.f32.mrf.mxu0
      %v1636 = vadd.f32 %v1033, %v1635
      %1637 = vmatmul.bf16.gmra.mxu0 %v958
      %v1638 = vpop.f32.mrf.mxu0
      %v1639 = vadd.f32 %v1033, %v1638
      %v1640 = vpop.f32.mrf.mxu0
      %v1641 = vadd.f32 %v1033, %v1640
      %1642 = vmatmul.bf16.gmra.mxu0 %v959
      %v1643 = vpop.f32.mrf.mxu0
      %v1644 = vadd.f32 %v1033, %v1643
      %v1645 = vpop.f32.mrf.mxu0
      %v1646 = vadd.f32 %v1033, %v1645
      %1647 = vmatmul.bf16.gmra.mxu0 %v960
      %v1648 = vpop.f32.mrf.mxu0
      %v1649 = vadd.f32 %v1033, %v1648
      %v1650 = vpop.f32.mrf.mxu0
      %v1651 = vadd.f32 %v1033, %v1650
      %1652 = vmatmul.bf16.gmra.mxu0 %v961
      %v1653 = vpop.f32.mrf.mxu0
      %v1654 = vadd.f32 %v1033, %v1653
      %v1655 = vpop.f32.mrf.mxu0
      %v1656 = vadd.f32 %v1033, %v1655
      %1657 = vdwg.mxu0
      %1658 = vmatpush.bf16.msra.mxu0 %v1298
      %1659 = vmatpush.bf16.msra.mxu0 %v1290
      %1660 = vmatpush.bf16.msra.mxu0 %v1282
      %1661 = vmatpush.bf16.msra.mxu0 %v1274
      %1662 = vmatpush.bf16.msra.mxu0 %v1266
      %1663 = vmatpush.bf16.msra.mxu0 %v1258
      %1664 = vmatpush.bf16.msra.mxu0 %v1250
      %1665 = vmatpush.bf16.msra.mxu0 %v1242
      %1666 = vmatmul.bf16.gmra.mxu0 %v954
      %v1667 = vpop.f32.mrf.mxu0
      %v1668 = vadd.f32 %v1034, %v1667
      %v1669 = vpop.f32.mrf.mxu0
      %v1670 = vadd.f32 %v1034, %v1669
      %1671 = vmatmul.bf16.gmra.mxu0 %v955
      %v1672 = vpop.f32.mrf.mxu0
      %v1673 = vadd.f32 %v1034, %v1672
      %v1674 = vpop.f32.mrf.mxu0
      %v1675 = vadd.f32 %v1034, %v1674
      %1676 = vmatmul.bf16.gmra.mxu0 %v956
      %v1677 = vpop.f32.mrf.mxu0
      %v1678 = vadd.f32 %v1034, %v1677
      %v1679 = vpop.f32.mrf.mxu0
      %v1680 = vadd.f32 %v1034, %v1679
      %1681 = vmatmul.bf16.gmra.mxu0 %v957
      %v1682 = vpop.f32.mrf.mxu0
      %v1683 = vadd.f32 %v1034, %v1682
      %v1684 = vpop.f32.mrf.mxu0
      %v1685 = vadd.f32 %v1034, %v1684
      %1686 = vmatmul.bf16.gmra.mxu0 %v958
      %v1687 = vpop.f32.mrf.mxu0
      %v1688 = vadd.f32 %v1034, %v1687
      %v1689 = vpop.f32.mrf.mxu0
      %v1690 = vadd.f32 %v1034, %v1689
      %1691 = vmatmul.bf16.gmra.mxu0 %v959
      %v1692 = vpop.f32.mrf.mxu0
      %v1693 = vadd.f32 %v1034, %v1692
      %v1694 = vpop.f32.mrf.mxu0
      %v1695 = vadd.f32 %v1034, %v1694
      %1696 = vmatmul.bf16.gmra.mxu0 %v960
      %v1697 = vpop.f32.mrf.mxu0
      %v1698 = vadd.f32 %v1034, %v1697
      %v1699 = vpop.f32.mrf.mxu0
      %v1700 = vadd.f32 %v1034, %v1699
      %1701 = vmatmul.bf16.gmra.mxu0 %v961
      %v1702 = vpop.f32.mrf.mxu0
      %v1703 = vadd.f32 %v1034, %v1702
      %v1704 = vpop.f32.mrf.mxu0
      %v1705 = vadd.f32 %v1034, %v1704
      %1706 = vdwg.mxu0
      %1707 = vmatpush.bf16.msra.mxu0 %v1299
      %1708 = vmatpush.bf16.msra.mxu0 %v1291
      %1709 = vmatpush.bf16.msra.mxu0 %v1283
      %1710 = vmatpush.bf16.msra.mxu0 %v1275
      %1711 = vmatpush.bf16.msra.mxu0 %v1267
      %1712 = vmatpush.bf16.msra.mxu0 %v1259
      %1713 = vmatpush.bf16.msra.mxu0 %v1251
      %1714 = vmatpush.bf16.msra.mxu0 %v1243
      %1715 = vmatmul.bf16.gmra.mxu0 %v954
      %v1716 = vpop.f32.mrf.mxu0
      %v1717 = vadd.f32 %v1035, %v1716
      %v1718 = vpop.f32.mrf.mxu0
      %v1719 = vadd.f32 %v1035, %v1718
      %1720 = vmatmul.bf16.gmra.mxu0 %v955
      %v1721 = vpop.f32.mrf.mxu0
      %v1722 = vadd.f32 %v1035, %v1721
      %v1723 = vpop.f32.mrf.mxu0
      %v1724 = vadd.f32 %v1035, %v1723
      %1725 = vmatmul.bf16.gmra.mxu0 %v956
      %v1726 = vpop.f32.mrf.mxu0
      %v1727 = vadd.f32 %v1035, %v1726
      %v1728 = vpop.f32.mrf.mxu0
      %v1729 = vadd.f32 %v1035, %v1728
      %1730 = vmatmul.bf16.gmra.mxu0 %v957
      %v1731 = vpop.f32.mrf.mxu0
      %v1732 = vadd.f32 %v1035, %v1731
      %v1733 = vpop.f32.mrf.mxu0
      %v1734 = vadd.f32 %v1035, %v1733
      %1735 = vmatmul.bf16.gmra.mxu0 %v958
      %v1736 = vpop.f32.mrf.mxu0
      %v1737 = vadd.f32 %v1035, %v1736
      %v1738 = vpop.f32.mrf.mxu0
      %v1739 = vadd.f32 %v1035, %v1738
      %1740 = vmatmul.bf16.gmra.mxu0 %v959
      %v1741 = vpop.f32.mrf.mxu0
      %v1742 = vadd.f32 %v1035, %v1741
      %v1743 = vpop.f32.mrf.mxu0
      %v1744 = vadd.f32 %v1035, %v1743
      %1745 = vmatmul.bf16.gmra.mxu0 %v960
      %v1746 = vpop.f32.mrf.mxu0
      %v1747 = vadd.f32 %v1035, %v1746
      %v1748 = vpop.f32.mrf.mxu0
      %v1749 = vadd.f32 %v1035, %v1748
      %1750 = vmatmul.bf16.gmra.mxu0 %v961
      %v1751 = vpop.f32.mrf.mxu0
      %v1752 = vadd.f32 %v1035, %v1751
      %v1753 = vpop.f32.mrf.mxu0
      %v1754 = vadd.f32 %v1035, %v1753
      %1755 = vdwg.mxu0
      %v1756 = vmax.f32 %v1374, %v1376
      %v1757 = vmax.f32 %v1756, %v1379
      %v1758 = vmax.f32 %v1757, %v1381
      %v1759 = vmax.f32 %v1758, %v1384
      %v1760 = vmax.f32 %v1759, %v1386
      %v1761 = vmax.f32 %v1760, %v1389
      %v1762 = vmax.f32 %v1761, %v1391
      %v1763 = vmax.f32 %v1762, %v1394
      %v1764 = vmax.f32 %v1763, %v1396
      %v1765 = vmax.f32 %v1764, %v1399
      %v1766 = vmax.f32 %v1765, %v1401
      %v1767 = vmax.f32 %v1766, %v1404
      %v1768 = vmax.f32 %v1767, %v1406
      %v1769 = vmax.f32 %v1768, %v1409
      %v1770 = vmax.f32 %v1769, %v1411
      %v1771 = vrot.slane %v1770, 4
      %v1772 = vmax.f32 %v1770, %v1771
      %v1773 = vrot.slane %v1772, 2
      %v1774 = vmax.f32 %v1772, %v1773
      %v1775 = vrot.slane %v1774, 1
      %v1776 = vmax.f32 %v1774, %v1775
      %v1777 = vmax.f32 %v1423, %v1425
      %v1778 = vmax.f32 %v1777, %v1428
      %v1779 = vmax.f32 %v1778, %v1430
      %v1780 = vmax.f32 %v1779, %v1433
      %v1781 = vmax.f32 %v1780, %v1435
      %v1782 = vmax.f32 %v1781, %v1438
      %v1783 = vmax.f32 %v1782, %v1440
      %v1784 = vmax.f32 %v1783, %v1443
      %v1785 = vmax.f32 %v1784, %v1445
      %v1786 = vmax.f32 %v1785, %v1448
      %v1787 = vmax.f32 %v1786, %v1450
      %v1788 = vmax.f32 %v1787, %v1453
      %v1789 = vmax.f32 %v1788, %v1455
      %v1790 = vmax.f32 %v1789, %v1458
      %v1791 = vmax.f32 %v1790, %v1460
      %v1792 = vrot.slane %v1791, 4
      %v1793 = vmax.f32 %v1791, %v1792
      %v1794 = vrot.slane %v1793, 2
      %v1795 = vmax.f32 %v1793, %v1794
      %v1796 = vrot.slane %v1795, 1
      %v1797 = vmax.f32 %v1795, %v1796
      %v1798 = vmax.f32 %v1472, %v1474
      %v1799 = vmax.f32 %v1798, %v1477
      %v1800 = vmax.f32 %v1799, %v1479
      %v1801 = vmax.f32 %v1800, %v1482
      %v1802 = vmax.f32 %v1801, %v1484
      %v1803 = vmax.f32 %v1802, %v1487
      %v1804 = vmax.f32 %v1803, %v1489
      %v1805 = vmax.f32 %v1804, %v1492
      %v1806 = vmax.f32 %v1805, %v1494
      %v1807 = vmax.f32 %v1806, %v1497
      %v1808 = vmax.f32 %v1807, %v1499
      %v1809 = vmax.f32 %v1808, %v1502
      %v1810 = vmax.f32 %v1809, %v1504
      %v1811 = vmax.f32 %v1810, %v1507
      %v1812 = vmax.f32 %v1811, %v1509
      %v1813 = vrot.slane %v1812, 4
      %v1814 = vmax.f32 %v1812, %v1813
      %v1815 = vrot.slane %v1814, 2
      %v1816 = vmax.f32 %v1814, %v1815
      %v1817 = vrot.slane %v1816, 1
      %v1818 = vmax.f32 %v1816, %v1817
      %v1819 = vmax.f32 %v1521, %v1523
      %v1820 = vmax.f32 %v1819, %v1526
      %v1821 = vmax.f32 %v1820, %v1528
      %v1822 = vmax.f32 %v1821, %v1531
      %v1823 = vmax.f32 %v1822, %v1533
      %v1824 = vmax.f32 %v1823, %v1536
      %v1825 = vmax.f32 %v1824, %v1538
      %v1826 = vmax.f32 %v1825, %v1541
      %v1827 = vmax.f32 %v1826, %v1543
      %v1828 = vmax.f32 %v1827, %v1546
      %v1829 = vmax.f32 %v1828, %v1548
      %v1830 = vmax.f32 %v1829, %v1551
      %v1831 = vmax.f32 %v1830, %v1553
      %v1832 = vmax.f32 %v1831, %v1556
      %v1833 = vmax.f32 %v1832, %v1558
      %v1834 = vrot.slane %v1833, 4
      %v1835 = vmax.f32 %v1833, %v1834
      %v1836 = vrot.slane %v1835, 2
      %v1837 = vmax.f32 %v1835, %v1836
      %v1838 = vrot.slane %v1837, 1
      %v1839 = vmax.f32 %v1837, %v1838
      %v1840 = vmax.f32 %v1570, %v1572
      %v1841 = vmax.f32 %v1840, %v1575
      %v1842 = vmax.f32 %v1841, %v1577
      %v1843 = vmax.f32 %v1842, %v1580
      %v1844 = vmax.f32 %v1843, %v1582
      %v1845 = vmax.f32 %v1844, %v1585
      %v1846 = vmax.f32 %v1845, %v1587
      %v1847 = vmax.f32 %v1846, %v1590
      %v1848 = vmax.f32 %v1847, %v1592
      %v1849 = vmax.f32 %v1848, %v1595
      %v1850 = vmax.f32 %v1849, %v1597
      %v1851 = vmax.f32 %v1850, %v1600
      %v1852 = vmax.f32 %v1851, %v1602
      %v1853 = vmax.f32 %v1852, %v1605
      %v1854 = vmax.f32 %v1853, %v1607
      %v1855 = vrot.slane %v1854, 4
      %v1856 = vmax.f32 %v1854, %v1855
      %v1857 = vrot.slane %v1856, 2
      %v1858 = vmax.f32 %v1856, %v1857
      %v1859 = vrot.slane %v1858, 1
      %v1860 = vmax.f32 %v1858, %v1859
      %v1861 = vmax.f32 %v1619, %v1621
      %v1862 = vmax.f32 %v1861, %v1624
      %v1863 = vmax.f32 %v1862, %v1626
      %v1864 = vmax.f32 %v1863, %v1629
      %v1865 = vmax.f32 %v1864, %v1631
      %v1866 = vmax.f32 %v1865, %v1634
      %v1867 = vmax.f32 %v1866, %v1636
      %v1868 = vmax.f32 %v1867, %v1639
      %v1869 = vmax.f32 %v1868, %v1641
      %v1870 = vmax.f32 %v1869, %v1644
      %v1871 = vmax.f32 %v1870, %v1646
      %v1872 = vmax.f32 %v1871, %v1649
      %v1873 = vmax.f32 %v1872, %v1651
      %v1874 = vmax.f32 %v1873, %v1654
      %v1875 = vmax.f32 %v1874, %v1656
      %v1876 = vrot.slane %v1875, 4
      %v1877 = vmax.f32 %v1875, %v1876
      %v1878 = vrot.slane %v1877, 2
      %v1879 = vmax.f32 %v1877, %v1878
      %v1880 = vrot.slane %v1879, 1
      %v1881 = vmax.f32 %v1879, %v1880
      %v1882 = vmax.f32 %v1668, %v1670
      %v1883 = vmax.f32 %v1882, %v1673
      %v1884 = vmax.f32 %v1883, %v1675
      %v1885 = vmax.f32 %v1884, %v1678
      %v1886 = vmax.f32 %v1885, %v1680
      %v1887 = vmax.f32 %v1886, %v1683
      %v1888 = vmax.f32 %v1887, %v1685
      %v1889 = vmax.f32 %v1888, %v1688
      %v1890 = vmax.f32 %v1889, %v1690
      %v1891 = vmax.f32 %v1890, %v1693
      %v1892 = vmax.f32 %v1891, %v1695
      %v1893 = vmax.f32 %v1892, %v1698
      %v1894 = vmax.f32 %v1893, %v1700
      %v1895 = vmax.f32 %v1894, %v1703
      %v1896 = vmax.f32 %v1895, %v1705
      %v1897 = vrot.slane %v1896, 4
      %v1898 = vmax.f32 %v1896, %v1897
      %v1899 = vrot.slane %v1898, 2
      %v1900 = vmax.f32 %v1898, %v1899
      %v1901 = vrot.slane %v1900, 1
      %v1902 = vmax.f32 %v1900, %v1901
      %v1903 = vmax.f32 %v1717, %v1719
      %v1904 = vmax.f32 %v1903, %v1722
      %v1905 = vmax.f32 %v1904, %v1724
      %v1906 = vmax.f32 %v1905, %v1727
      %v1907 = vmax.f32 %v1906, %v1729
      %v1908 = vmax.f32 %v1907, %v1732
      %v1909 = vmax.f32 %v1908, %v1734
      %v1910 = vmax.f32 %v1909, %v1737
      %v1911 = vmax.f32 %v1910, %v1739
      %v1912 = vmax.f32 %v1911, %v1742
      %v1913 = vmax.f32 %v1912, %v1744
      %v1914 = vmax.f32 %v1913, %v1747
      %v1915 = vmax.f32 %v1914, %v1749
      %v1916 = vmax.f32 %v1915, %v1752
      %v1917 = vmax.f32 %v1916, %v1754
      %v1918 = vrot.slane %v1917, 4
      %v1919 = vmax.f32 %v1917, %v1918
      %v1920 = vrot.slane %v1919, 2
      %v1921 = vmax.f32 %v1919, %v1920
      %v1922 = vrot.slane %v1921, 1
      %v1923 = vmax.f32 %v1921, %v1922
      %p1924 = scmp.eq.s32.totalorder %s27, 0
      // Predicated region
      $region65: #{_lambda_.3} parent=63 // pred_check
        %p1925 = pneg %p1924
      $region66: #{_lambda_.3} parent=63 // pred_check_branch
        %1927 = sbr.rel (%p1925) target = $region68
      $region67: #{_lambda_.3} parent=63 // pred_region
        %v1936 = vrot.slane %v1797, 7
        %v1937 = vrot.slane %v1818, 6
        %v1938 = vrot.slane %v1839, 5
        %v1939 = vrot.slane %v1860, 4
        %v1940 = vrot.slane %v1881, 3
        %v1941 = vrot.slane %v1902, 2
        %v1942 = vrot.slane %v1923, 1
        %vm1943 = vcmask 1040384
        %v1944 = vsel %vm1943, %v1776, %v1936
        %vm1945 = vcmask 1042434
        %v1946 = vsel %vm1945, %v1937, %v1938
        %vm1947 = vcmask 1041408
        %v1948 = vsel %vm1947, %v1944, %v1946
        %vm1949 = vcmask 1044484
        %v1950 = vsel %vm1949, %v1939, %v1940
        %vm1951 = vcmask 1046534
        %v1952 = vsel %vm1951, %v1941, %v1942
        %vm1953 = vcmask 1045508
        %v1954 = vsel %vm1953, %v1950, %v1952
        %v1955 = vsel %vm485, %v1948, %v1954
        %1957 = vst [vmem:[%s429] sm:$0xff] %v1955
      $region68: #{_lambda_.3} parent=63 // pred_fallthru
        _
      %p1958 = scmp.gt.s32.totalorder %s27, 0
      // Predicated region
      $region69: #{_lambda_.3} parent=63 // pred_check
        %p1959 = pneg %p1958
      $region70: #{_lambda_.3} parent=63 // pred_check_branch
        %1961 = sbr.rel (%p1959) target = $region72
      $region71: #{_lambda_.3} parent=63 // pred_region
        %v1962 = vld [vmem:[%s429] sm:$0xff]
        %v1971 = vrot.slane %v1797, 7
        %v1972 = vrot.slane %v1818, 6
        %v1973 = vrot.slane %v1839, 5
        %v1974 = vrot.slane %v1860, 4
        %v1975 = vrot.slane %v1881, 3
        %v1976 = vrot.slane %v1902, 2
        %v1977 = vrot.slane %v1923, 1
        %vm1978 = vcmask 1040384
        %v1979 = vsel %vm1978, %v1776, %v1971
        %vm1980 = vcmask 1042434
        %v1981 = vsel %vm1980, %v1972, %v1973
        %vm1982 = vcmask 1041408
        %v1983 = vsel %vm1982, %v1979, %v1981
        %vm1984 = vcmask 1044484
        %v1985 = vsel %vm1984, %v1974, %v1975
        %vm1986 = vcmask 1046534
        %v1987 = vsel %vm1986, %v1976, %v1977
        %vm1988 = vcmask 1045508
        %v1989 = vsel %vm1988, %v1985, %v1987
        %v1990 = vsel %vm485, %v1983, %v1989
        %v1992 = vmax.f32 %v1962, %v1990
        %1993 = vst [vmem:[%s429] sm:$0xff] %v1992
      $region72: #{_lambda_.3} parent=63 // pred_fallthru
        _
      %p1994 = scmp.lt.s32.totalorder %s26, 1
      %s1995 = scalar_select %p1994, %s26, 1
      %s1996 = smul.addr %s1995, 8
      %s1997 = scalar_lea.vmem %s11, %s1996
      // Predicated region
      $region73: #{_lambda_.3} parent=63 // pred_check
        %p1998 = pneg %p295
      $region74: #{_lambda_.3} parent=63 // pred_check_branch
        %2000 = sbr.rel (%p1998) target = $region76
      $region75: #{_lambda_.3} parent=63 // pred_region
        _
      $region76: #{_lambda_.3} parent=63 // pred_fallthru
        _
    $region64: #{_lambda_.3} parent=5 // pred_fallthru
      _
    %p2001 = scmp.le.s32.totalorder 2, %s17
    // Predicated region
    $region77: #{_lambda_.3} parent=5 // pred_check
      %p2002 = pneg %p2001
    $region78: #{_lambda_.3} parent=5 // pred_check_branch
      %2004 = sbr.rel (%p2002) target = $region80
    $region79: #{_lambda_.3} parent=5 // pred_region
      %s2005 = ssub.s32 %s17, 2
      // Predicated region
      $region81: #{_lambda_.3} parent=79 // pred_check
        %p2006 = pneg %p301
      $region82: #{_lambda_.3} parent=79 // pred_check_branch
        %2008 = sbr.rel (%p2006) target = $region84
      $region83: #{_lambda_.3} parent=79 // pred_region
        %p2009 = scmp.lt.s32.totalorder %s28, 1
        %s2010 = scalar_select %p2009, %s28, 1
        %s2011 = smul.addr %s2010, 8
        %s2012 = scalar_lea.vmem %s11, %s2011
      $region84: #{_lambda_.3} parent=79 // pred_fallthru
        _
    $region80: #{_lambda_.3} parent=5 // pred_fallthru
      _
  $region6: #{_lambda_.3} parent=0 // loop_footer
    %s21 = sadd.s32 1, %s17
  $region7: #{_lambda_.3} parent=0 // loop_footer_branch
    %16 = sbr.rel target = $region3
  $region8: #{_lambda_.3} parent=0 // loop_exit
    _

</llo_original>
